<compile_context>
chip_gen: v5e
topology: v5e:2x2
jax: 0.10.0
libtpu: 0.0.40
codegen_flags: <defaults>
</compile_context>

<pallas_src>
import functools
import numpy as np
import jax
import jax.numpy as jnp
from jax import lax
from jax.experimental import pallas as pl
from jax.experimental.pallas import tpu as pltpu

# TODO(synk): EXTEND_BASE_SIZE is an undefined global in the source module; chosen = 5
# (A,C,G,T,N one-hot), consistent with the (batch, seq, bases) input convention.
EXTEND_BASE_SIZE = 5

CONV_OUT_CHANNELS = 10
CONV_KERNEL = 10
CONV_STRIDE = 1
MIDDLE_DIMS = 32

LANE = 128          # TPU lane width
SUB = 8             # f32 sublane tile
PATCH_LANES = 64    # compact im2col width: C*K = 50 rounded up to 64 lanes
OUT_LANES = 8       # decoder output channels (5) rounded up to 8


def conv_out_size(seq, k, stride):
    # calculate_output_size_conv1d from the reference module
    return (seq - (k - 1) - 1) // stride + 1


def _round_up(a, m):
    return (a + m - 1) // m * m


def _sigmoid(v):
    # exp + approximate reciprocal both issue on the otherwise-idle EUP slot.
    return pl.reciprocal(1.0 + jnp.exp(-v), approx=True)


# ----------------------------- Pallas kernel -----------------------------
def cnnvae_kernel(patch_ref, eps_ref,
                  wc_ref, bc_ref, w1_ref, b1_ref, w23_ref, b23_ref,
                  wd1_ref, bd1_ref, wd2_ref, bd2_ref, wdc_ref, bdc_ref,
                  stats_ref, out_ref, *, enc_len, dec_len):
    f32, bf16 = jnp.float32, jnp.bfloat16
    tb = eps_ref.shape[0]

    # Hoisted, loop-invariant weight loads.
    wc = wc_ref[...]            # (64, 128) bf16
    bc = bc_ref[...]            # (1, 128)  f32

    # ---------------- Encoder: Conv1d + ReLU + Linear1 ----------------
    # Positions live on the leading (sublane-major) axis; every matmul is lane-dense.
    def enc_step(t, acc):
        f_t = jnp.maximum(
            jnp.dot(patch_ref[t], wc, preferred_element_type=f32) + bc, 0.0)
        return acc + jnp.dot(f_t.astype(bf16), w1_ref[t],
                             preferred_element_type=f32)

    h_acc = jnp.zeros((tb, LANE), f32)
    if enc_len <= 32:
        for t in range(enc_len):
            h_acc = enc_step(t, h_acc)
    else:
        h_acc = lax.fori_loop(0, enc_len, enc_step, h_acc)
    h = jnp.maximum(h_acc + b1_ref[...], 0.0)

    # ---------------- Fused mu / logvar + reparameterize ----------------
    stats = jnp.dot(h.astype(bf16), w23_ref[...],
                    preferred_element_type=f32) + b23_ref[...]
    stats_ref[...] = stats
    mu = stats[:, :LANE]
    logvar = stats[:, LANE:]
    z = mu + eps_ref[...] * jnp.exp(0.5 * logvar)

    # ---------------- Decoder linear1 ----------------
    hd = jnp.maximum(
        jnp.dot(z.astype(bf16), wd1_ref[...], preferred_element_type=f32)
        + bd1_ref[...], 0.0)
    hd_b = hd.astype(bf16)
    wdc = wdc_ref[...]          # (128, 128) bf16  (only first 5 cols nonzero)
    bdc = bdc_ref[...]          # (1, 128)   f32

    # ---------------- Decoder linear2 + sigmoid + ConvTranspose1d ----------------
    # wd2[s] already emits the K*Cout im2col window for output position s (invalid taps
    # have weight 0 / bias -30 -> sigmoid ~ 0), so the transposed conv is ONE matmul
    # per position, fused with bias + relu + sigmoid into a compact 8-lane store.
    def dec_step(s):
        xp = _sigmoid(jnp.dot(hd_b, wd2_ref[s], preferred_element_type=f32)
                      + bd2_ref[s])                          # (tb, 128)
        y = jnp.dot(xp.astype(bf16), wdc, preferred_element_type=f32) + bdc
        out_ref[s] = _sigmoid(jnp.maximum(y[:, :OUT_LANES], 0.0))

    if dec_len <= 32:
        for s in range(dec_len):
            dec_step(s)
    else:
        @pl.loop(0, dec_len)
        def _(s):
            dec_step(s)


# --------------------------- parameter handling ---------------------------
def init_raw_params(key, seq_size, latent_dims):
    """Deterministic synthetic parameters with PyTorch-layer shapes."""
    L = conv_out_size(seq_size, CONV_KERNEL, CONV_STRIDE)
    flat = L * CONV_OUT_CHANNELS
    shapes = {
        "enc_conv_w": (CONV_OUT_CHANNELS, EXTEND_BASE_SIZE, CONV_KERNEL),  # Conv1d
        "enc_conv_b": (CONV_OUT_CHANNELS,),
        "enc_lin1_w": (MIDDLE_DIMS, flat),
        "enc_lin1_b": (MIDDLE_DIMS,),
        "enc_lin2_w": (latent_dims, MIDDLE_DIMS),
        "enc_lin2_b": (latent_dims,),
        "enc_lin3_w": (latent_dims, MIDDLE_DIMS),
        "enc_lin3_b": (latent_dims,),
        "dec_lin1_w": (MIDDLE_DIMS, latent_dims),
        "dec_lin1_b": (MIDDLE_DIMS,),
        "dec_lin2_w": (flat, MIDDLE_DIMS),
        "dec_lin2_b": (flat,),
        "dec_conv_w": (CONV_OUT_CHANNELS, EXTEND_BASE_SIZE, CONV_KERNEL),  # ConvT1d
        "dec_conv_b": (EXTEND_BASE_SIZE,),
    }
    names = sorted(shapes)
    keys = jax.random.split(key, len(names))
    return {n: 0.1 * jax.random.normal(k, shapes[n], jnp.float32)
            for n, k in zip(names, keys)}


def prep_kernel_params(raw, seq_size, latent_dims):
    """Pad / permute weights into lane-dense, position-on-sublane matmul operands."""
    S = seq_size
    Cin, Cout, K = EXTEND_BASE_SIZE, CONV_OUT_CHANNELS, CONV_KERNEL
    L = conv_out_size(S, K, CONV_STRIDE)
    assert L >= 1, "seq_size must be >= kernel_size"
    mid, lat = MIDDLE_DIMS, latent_dims
    f32 = np.float32

    # Conv1d as an im2col matmul: wc[ci*K + k, co] = w[co, ci, k]
    w_enc = np.asarray(raw["enc_conv_w"], f32)
    wc = np.zeros((PATCH_LANES, LANE), f32)
    for ci in range(Cin):
        for k in range(K):
            wc[ci * K + k, :Cout] = w_enc[:, ci, k]
    bc = np.zeros((1, LANE), f32)
    bc[0, :Cout] = np.asarray(raw["enc_conv_b"], f32)

    # linear1 as per-position (128,128) blocks: w1[t, co, m] = W1[m, co*L + t]
    w1t = np.asarray(raw["enc_lin1_w"], f32)                  # (mid, Cout*L)
    w1 = np.zeros((L, LANE, LANE), f32)
    for t in range(L):
        for co in range(Cout):
            w1[t, co, :mid] = w1t[:, co * L + t]
    b1 = np.zeros((1, LANE), f32)
    b1[0, :mid] = np.asarray(raw["enc_lin1_b"], f32)

    # Fused mu/logvar projection: cols [0:lat) = mu, [128:128+lat) = logvar.
    w23 = np.zeros((LANE, 2 * LANE), f32)
    w23[:mid, :lat] = np.asarray(raw["enc_lin2_w"], f32).T
    w23[:mid, LANE:LANE + lat] = np.asarray(raw["enc_lin3_w"], f32).T
    b23 = np.zeros((1, 2 * LANE), f32)
    b23[0, :lat] = np.asarray(raw["enc_lin2_b"], f32)
    b23[0, LANE:LANE + lat] = np.asarray(raw["enc_lin3_b"], f32)

    wd1 = np.zeros((LANE, LANE), f32)
    wd1[:lat, :mid] = np.asarray(raw["dec_lin1_w"], f32).T
    bd1 = np.zeros((1, LANE), f32)
    bd1[0, :mid] = np.asarray(raw["dec_lin1_b"], f32)

    # Decoder linear2 restructured so it directly emits the conv-transpose im2col
    # window for every output position s:
    #   wd2[s, m, k*Cout + co] = W2[co*L + (s-k), m]   (valid 0 <= s-k < L)
    #   bd2[s, 0, k*Cout + co] = b2[co*L + (s-k)]      else weight 0 / bias -30.
    wd2t = np.asarray(raw["dec_lin2_w"], f32)                 # (Cout*L, mid)
    bd2t = np.asarray(raw["dec_lin2_b"], f32)
    wd2 = np.zeros((S, LANE, LANE), f32)
    bd2 = np.full((S, 1, LANE), -30.0, f32)                   # sigmoid(-30) ~ 0
    for s in range(S):
        for k in range(K):
            t = s - k
            if 0 <= t < L:
                for co in range(Cout):
                    wd2[s, :mid, k * Cout + co] = wd2t[co * L + t, :]
                    bd2[s, 0, k * Cout + co] = bd2t[co * L + t]

    # ConvTranspose1d mixing matrix: wdc[k*Cout + co, cin] = w[co, cin, k]
    w_dec = np.asarray(raw["dec_conv_w"], f32)                # (Cout, Cin, K)
    wdc = np.zeros((LANE, LANE), f32)
    for k in range(K):
        for co in range(Cout):
            wdc[k * Cout + co, :Cin] = w_dec[co, :, k]
    bdc = np.zeros((1, LANE), f32)
    bdc[0, :Cin] = np.asarray(raw["dec_conv_b"], f32)

    bf = lambda a: jnp.asarray(a, jnp.bfloat16)
    fj = lambda a: jnp.asarray(a, jnp.float32)
    return dict(wc=bf(wc), bc=fj(bc), w1=bf(w1), b1=fj(b1), w23=bf(w23), b23=fj(b23),
                wd1=bf(wd1), bd1=fj(bd1), wd2=bf(wd2), bd2=fj(bd2),
                wdc=bf(wdc), bdc=fj(bdc))


# ------------------------------- wrapper -------------------------------
@functools.partial(jax.jit, static_argnames=("seq_size", "latent_dims"))
def cnn_autoencoder_forward(x, eps, P, *, seq_size, latent_dims):
    B, S, C = x.shape
    assert S == seq_size and C == EXTEND_BASE_SIZE
    K, lat = CONV_KERNEL, latent_dims
    L = conv_out_size(S, K, CONV_STRIDE)

    # --- generation-aware batch tiling ---
    try:
        vmem_cap = int(pltpu.get_tpu_info().vmem_capacity_bytes)
    except Exception:
        vmem_cap = 64 << 20
    small_vmem = vmem_cap <= (64 << 20)        # v7x-like: 64 MiB VMEM, 2 TensorCores
    max_tb = 128 if small_vmem else 256        # v5e/v6e: fill the MXU with bigger tiles
    B8 = _round_up(B, SUB)
    n_steps = max(1, -(-B8 // max_tb))
    if small_vmem and n_steps == 1 and B8 >= 2 * SUB:
        n_steps = 2                            # let both TensorCores work (v7x)
    tb = _round_up(-(-B8 // n_steps), SUB)
    B_pad = n_steps * tb

    # --- wrapper-side layout plumbing: torch reinterpretation + compact im2col ---
    # patch[t, b, ci*K + k] = x[b, ci, t + k]   (position-major, 64 bf16 lanes)
    xin = x.reshape(B, C, S)                                        # torch's reshape (view)
    cols = jnp.stack([xin[:, :, k:k + L] for k in range(K)], axis=-1)   # (B, C, L, K)
    patch = jnp.transpose(cols, (2, 0, 1, 3)).reshape(L, B, C * K)       # (L, B, C*K)
    patch = jnp.pad(patch, ((0, 0), (0, B_pad - B), (0, PATCH_LANES - C * K)))
    patch = patch.astype(jnp.bfloat16)
    eps_pad = jnp.pad(eps.astype(jnp.float32), ((0, B_pad - B), (0, LANE - lat)))

    weights = (P["wc"], P["bc"], P["w1"], P["b1"], P["w23"], P["b23"],
               P["wd1"], P["bd1"], P["wd2"], P["bd2"], P["wdc"], P["bdc"])

    def wspec(a):
        nd = a.ndim
        return pl.BlockSpec(tuple(a.shape), lambda b, nd=nd: (0,) * nd)

    in_specs = ([pl.BlockSpec((L, tb, PATCH_LANES), lambda b: (0, b, 0)),
                 pl.BlockSpec((tb, LANE), lambda b: (b, 0))]
                + [wspec(w) for w in weights])
    out_specs = (pl.BlockSpec((tb, 2 * LANE), lambda b: (b, 0)),
                 pl.BlockSpec((S, tb, OUT_LANES), lambda b: (0, b, 0)))
    out_shape = (jax.ShapeDtypeStruct((B_pad, 2 * LANE), jnp.float32),
                 jax.ShapeDtypeStruct((S, B_pad, OUT_LANES), jnp.float32))

    # --- VMEM budget / scoped limit (explicit: v5e default is only 16 MiB) ---
    wbytes = sum(int(np.prod(w.shape)) * w.dtype.itemsize for w in weights)
    abytes = 2 * (L * tb * PATCH_LANES * 2 + tb * LANE * 4
                  + tb * 2 * LANE * 4 + S * tb * OUT_LANES * 4)
    vmem_limit = int(min(max(2 * wbytes + abytes + (16 << 20), 32 << 20), 100 << 20))

    # Advisory cost estimate for the XLA scheduler.
    flops_step = (L * (2 * tb * PATCH_LANES * LANE + 2 * tb * LANE * LANE)
                  + 2 * tb * LANE * (2 * LANE) + 2 * tb * LANE * LANE
                  + S * (2 * tb * LANE * LANE + 2 * tb * LANE * LANE))
    trans_step = tb * LANE * (1 + 2 * S)
    bytes_acc = (int(patch.size) * 2 + int(eps_pad.size) * 4 + wbytes
                 + B_pad * 2 * LANE * 4 + S * B_pad * OUT_LANES * 4)

    kernel = functools.partial(cnnvae_kernel, enc_len=L, dec_len=S)

    stats, outc = pl.pallas_call(
        kernel,
        grid=(n_steps,),
        in_specs=in_specs,
        out_specs=out_specs,
        out_shape=out_shape,
        compiler_params=pltpu.CompilerParams(
            dimension_semantics=("parallel",),
            vmem_limit_bytes=vmem_limit),
        cost_estimate=pl.CostEstimate(flops=int(flops_step * n_steps),
                                      transcendentals=int(trans_step * n_steps),
                                      bytes_accessed=int(bytes_acc)),
    )(patch, eps_pad, *weights)

    mu = stats[:B, :lat]
    logvar = stats[:B, LANE:LANE + lat]
    # Kernel emits the ConvTranspose output position-major as out[s, b, c];
    # torch builds (b, c, s) then row-major-reinterprets to (b, s, c).
    conv_bcs = jnp.transpose(outc[:, :B, :C], (1, 2, 0))     # (B, Cin, S), tiny
    x_hat = conv_bcs.reshape(B, S, C)
    return x_hat, mu, logvar


# ------------------------- pure-JAX f32 reference -------------------------
def reference_forward(x, eps, raw):
    B, S, C = x.shape
    Cout, K = CONV_OUT_CHANNELS, CONV_KERNEL
    L = conv_out_size(S, K, CONV_STRIDE)
    xin = x.reshape(B, C, S)
    w = raw["enc_conv_w"]
    y = jnp.zeros((B, Cout, L), jnp.float32)
    for k in range(K):
        y = y + jnp.einsum("bct,oc->bot", xin[:, :, k:k + L], w[:, :, k])
    y = jnp.maximum(y + raw["enc_conv_b"][None, :, None], 0.0)
    flat = y.reshape(B, Cout * L)
    h = jnp.maximum(flat @ raw["enc_lin1_w"].T + raw["enc_lin1_b"], 0.0)
    mu = h @ raw["enc_lin2_w"].T + raw["enc_lin2_b"]
    logvar = h @ raw["enc_lin3_w"].T + raw["enc_lin3_b"]
    z = mu + eps * jnp.exp(0.5 * logvar)
    hd = jnp.maximum(z @ raw["dec_lin1_w"].T + raw["dec_lin1_b"], 0.0)
    xd = jax.nn.sigmoid(hd @ raw["dec_lin2_w"].T + raw["dec_lin2_b"]).reshape(B, Cout, L)
    wd = raw["dec_conv_w"]
    out = jnp.zeros((B, EXTEND_BASE_SIZE, L + K - 1), jnp.float32)
    for k in range(K):
        out = out.at[:, :, k:k + L].add(jnp.einsum("bot,oc->bct", xd, wd[:, :, k]))
    out = jax.nn.sigmoid(jnp.maximum(out + raw["dec_conv_b"][None, :, None], 0.0))
    return out.reshape(B, L + K - 1, EXTEND_BASE_SIZE), mu, logvar


if __name__ == "__main__":
    B, SEQ, LAT = 2, 16, 2                      # seq_size=16 >= kernel_size=10
    key = jax.random.PRNGKey(0)
    kx, ke, kp = jax.random.split(key, 3)

    x = jax.random.uniform(kx, (B, SEQ, EXTEND_BASE_SIZE), jnp.float32)
    eps = jax.random.normal(ke, (B, LAT), jnp.float32)   # reparameterization noise

    raw = init_raw_params(kp, SEQ, LAT)
    P = prep_kernel_params(raw, SEQ, LAT)

    x_hat, mu, log_var = cnn_autoencoder_forward(x, eps, P, seq_size=SEQ, latent_dims=LAT)
    jax.block_until_ready((x_hat, mu, log_var))

    # sanity vs pure-JAX f32 reference (kernel uses bf16 matmul operands -> 2e-2 tol)
    rx, rmu, rlv = reference_forward(x, eps, raw)
    np.testing.assert_allclose(np.asarray(x_hat), np.asarray(rx), rtol=2e-2, atol=2e-2)
    np.testing.assert_allclose(np.asarray(mu), np.asarray(rmu), rtol=2e-2, atol=2e-2)
    np.testing.assert_allclose(np.asarray(log_var), np.asarray(rlv), rtol=2e-2, atol=2e-2)
    assert x_hat.shape == (B, SEQ, EXTEND_BASE_SIZE)
    assert mu.shape == (B, LAT) and log_var.shape == (B, LAT)

    print("KERNEL_OK")
</pallas_src>

<mosaic_0001>
module attributes {stable_mosaic.version = 11 : i64} {
  func.func @cnnvae_kernel(%arg0: i32, %arg1: memref<7x8x64xbf16, #tpu.memory_space<vmem>>, %arg2: memref<8x128xf32, #tpu.memory_space<vmem>>, %arg3: memref<64x128xbf16, #tpu.memory_space<vmem>>, %arg4: memref<1x128xf32, #tpu.memory_space<vmem>>, %arg5: memref<7x128x128xbf16, #tpu.memory_space<vmem>>, %arg6: memref<1x128xf32, #tpu.memory_space<vmem>>, %arg7: memref<128x256xbf16, #tpu.memory_space<vmem>>, %arg8: memref<1x256xf32, #tpu.memory_space<vmem>>, %arg9: memref<128x128xbf16, #tpu.memory_space<vmem>>, %arg10: memref<1x128xf32, #tpu.memory_space<vmem>>, %arg11: memref<16x128x128xbf16, #tpu.memory_space<vmem>>, %arg12: memref<16x1x128xf32, #tpu.memory_space<vmem>>, %arg13: memref<128x128xbf16, #tpu.memory_space<vmem>>, %arg14: memref<1x128xf32, #tpu.memory_space<vmem>>, %arg15: memref<8x256xf32, #tpu.memory_space<vmem>>, %arg16: memref<16x8x8xf32, #tpu.memory_space<vmem>>) attributes {dimension_semantics = [#tpu.dimension_semantics<parallel>], iteration_bounds = array<i64: 1>, scalar_prefetch = 0 : i64, scratch_operands = 0 : i64, tpu.core_type = #tpu.core_type<tc>, window_params = [{transform_indices = @transform_0, window_bounds = array<i64: 7, 8, 64>}, {transform_indices = @transform_1, window_bounds = array<i64: 8, 128>}, {pipeline_mode = #tpu.pipeline_mode<synchronous>, transform_indices = @transform_2, window_bounds = array<i64: 64, 128>}, {pipeline_mode = #tpu.pipeline_mode<synchronous>, transform_indices = @transform_3, window_bounds = array<i64: 1, 128>}, {pipeline_mode = #tpu.pipeline_mode<synchronous>, transform_indices = @transform_4, window_bounds = array<i64: 7, 128, 128>}, {pipeline_mode = #tpu.pipeline_mode<synchronous>, transform_indices = @transform_5, window_bounds = array<i64: 1, 128>}, {pipeline_mode = #tpu.pipeline_mode<synchronous>, transform_indices = @transform_6, window_bounds = array<i64: 128, 256>}, {pipeline_mode = #tpu.pipeline_mode<synchronous>, transform_indices = @transform_7, window_bounds = array<i64: 1, 256>}, {pipeline_mode = #tpu.pipeline_mode<synchronous>, transform_indices = @transform_8, window_bounds = array<i64: 128, 128>}, {pipeline_mode = #tpu.pipeline_mode<synchronous>, transform_indices = @transform_9, window_bounds = array<i64: 1, 128>}, {pipeline_mode = #tpu.pipeline_mode<synchronous>, transform_indices = @transform_10, window_bounds = array<i64: 16, 128, 128>}, {pipeline_mode = #tpu.pipeline_mode<synchronous>, transform_indices = @transform_11, window_bounds = array<i64: 16, 1, 128>}, {pipeline_mode = #tpu.pipeline_mode<synchronous>, transform_indices = @transform_12, window_bounds = array<i64: 128, 128>}, {pipeline_mode = #tpu.pipeline_mode<synchronous>, transform_indices = @transform_13, window_bounds = array<i64: 1, 128>}, {transform_indices = @transform_14, window_bounds = array<i64: 8, 256>}, {transform_indices = @transform_15, window_bounds = array<i64: 16, 8, 8>}]} {
    %c0 = arith.constant 0 : index
    %c0_0 = arith.constant 0 : index
    %0 = vector.load %arg3[%c0, %c0_0] : memref<64x128xbf16, #tpu.memory_space<vmem>>, vector<64x128xbf16>
    %c0_1 = arith.constant 0 : index
    %c0_2 = arith.constant 0 : index
    %1 = vector.load %arg4[%c0_1, %c0_2] : memref<1x128xf32, #tpu.memory_space<vmem>>, vector<1x128xf32>
    %cst = arith.constant 0.000000e+00 : f32
    %2 = vector.broadcast %cst : f32 to vector<8x128xf32>
    %c0_3 = arith.constant 0 : index
    %c0_4 = arith.constant 0 : index
    %c0_5 = arith.constant 0 : index
    %3 = vector.load %arg1[%c0_3, %c0_4, %c0_5] : memref<7x8x64xbf16, #tpu.memory_space<vmem>>, vector<1x8x64xbf16>
    %4 = vector.shape_cast %3 : vector<1x8x64xbf16> to vector<8x64xbf16>
    %cst_6 = arith.constant dense<0.000000e+00> : vector<8x128xf32>
    %5 = tpu.matmul %4, %0, %cst_6 {dimension_numbers = #tpu.dot_dimension_numbers<[1], [0], [0], [1], [0, 0, 1, 1], [], []>} : vector<8x64xbf16>, vector<64x128xbf16>, vector<8x128xf32> -> vector<8x128xf32>
    %6 = vector.broadcast %1 : vector<1x128xf32> to vector<8x128xf32>
    %7 = arith.addf %5, %6 : vector<8x128xf32>
    %cst_7 = arith.constant 0.000000e+00 : f32
    %8 = vector.broadcast %cst_7 : f32 to vector<8x128xf32>
    %9 = arith.maximumf %7, %8 : vector<8x128xf32>
    %10 = arith.truncf %9 : vector<8x128xf32> to vector<8x128xbf16>
    %c0_8 = arith.constant 0 : index
    %c0_9 = arith.constant 0 : index
    %c0_10 = arith.constant 0 : index
    %11 = vector.load %arg5[%c0_8, %c0_9, %c0_10] : memref<7x128x128xbf16, #tpu.memory_space<vmem>>, vector<1x128x128xbf16>
    %12 = vector.shape_cast %11 : vector<1x128x128xbf16> to vector<128x128xbf16>
    %cst_11 = arith.constant dense<0.000000e+00> : vector<8x128xf32>
    %13 = tpu.matmul %10, %12, %cst_11 {dimension_numbers = #tpu.dot_dimension_numbers<[1], [0], [0], [1], [0, 0, 1, 1], [], []>} : vector<8x128xbf16>, vector<128x128xbf16>, vector<8x128xf32> -> vector<8x128xf32>
    %14 = arith.addf %2, %13 : vector<8x128xf32>
    %c1 = arith.constant 1 : index
    %c0_12 = arith.constant 0 : index
    %c0_13 = arith.constant 0 : index
    %15 = vector.load %arg1[%c1, %c0_12, %c0_13] : memref<7x8x64xbf16, #tpu.memory_space<vmem>>, vector<1x8x64xbf16>
    %16 = vector.shape_cast %15 : vector<1x8x64xbf16> to vector<8x64xbf16>
    %cst_14 = arith.constant dense<0.000000e+00> : vector<8x128xf32>
    %17 = tpu.matmul %16, %0, %cst_14 {dimension_numbers = #tpu.dot_dimension_numbers<[1], [0], [0], [1], [0, 0, 1, 1], [], []>} : vector<8x64xbf16>, vector<64x128xbf16>, vector<8x128xf32> -> vector<8x128xf32>
    %18 = vector.broadcast %1 : vector<1x128xf32> to vector<8x128xf32>
    %19 = arith.addf %17, %18 : vector<8x128xf32>
    %cst_15 = arith.constant 0.000000e+00 : f32
    %20 = vector.broadcast %cst_15 : f32 to vector<8x128xf32>
    %21 = arith.maximumf %19, %20 : vector<8x128xf32>
    %22 = arith.truncf %21 : vector<8x128xf32> to vector<8x128xbf16>
    %c1_16 = arith.constant 1 : index
    %c0_17 = arith.constant 0 : index
    %c0_18 = arith.constant 0 : index
    %23 = vector.load %arg5[%c1_16, %c0_17, %c0_18] : memref<7x128x128xbf16, #tpu.memory_space<vmem>>, vector<1x128x128xbf16>
    %24 = vector.shape_cast %23 : vector<1x128x128xbf16> to vector<128x128xbf16>
    %cst_19 = arith.constant dense<0.000000e+00> : vector<8x128xf32>
    %25 = tpu.matmul %22, %24, %cst_19 {dimension_numbers = #tpu.dot_dimension_numbers<[1], [0], [0], [1], [0, 0, 1, 1], [], []>} : vector<8x128xbf16>, vector<128x128xbf16>, vector<8x128xf32> -> vector<8x128xf32>
    %26 = arith.addf %14, %25 : vector<8x128xf32>
    %c2 = arith.constant 2 : index
    %c0_20 = arith.constant 0 : index
    %c0_21 = arith.constant 0 : index
    %27 = vector.load %arg1[%c2, %c0_20, %c0_21] : memref<7x8x64xbf16, #tpu.memory_space<vmem>>, vector<1x8x64xbf16>
    %28 = vector.shape_cast %27 : vector<1x8x64xbf16> to vector<8x64xbf16>
    %cst_22 = arith.constant dense<0.000000e+00> : vector<8x128xf32>
    %29 = tpu.matmul %28, %0, %cst_22 {dimension_numbers = #tpu.dot_dimension_numbers<[1], [0], [0], [1], [0, 0, 1, 1], [], []>} : vector<8x64xbf16>, vector<64x128xbf16>, vector<8x128xf32> -> vector<8x128xf32>
    %30 = vector.broadcast %1 : vector<1x128xf32> to vector<8x128xf32>
    %31 = arith.addf %29, %30 : vector<8x128xf32>
    %cst_23 = arith.constant 0.000000e+00 : f32
    %32 = vector.broadcast %cst_23 : f32 to vector<8x128xf32>
    %33 = arith.maximumf %31, %32 : vector<8x128xf32>
    %34 = arith.truncf %33 : vector<8x128xf32> to vector<8x128xbf16>
    %c2_24 = arith.constant 2 : index
    %c0_25 = arith.constant 0 : index
    %c0_26 = arith.constant 0 : index
    %35 = vector.load %arg5[%c2_24, %c0_25, %c0_26] : memref<7x128x128xbf16, #tpu.memory_space<vmem>>, vector<1x128x128xbf16>
    %36 = vector.shape_cast %35 : vector<1x128x128xbf16> to vector<128x128xbf16>
    %cst_27 = arith.constant dense<0.000000e+00> : vector<8x128xf32>
    %37 = tpu.matmul %34, %36, %cst_27 {dimension_numbers = #tpu.dot_dimension_numbers<[1], [0], [0], [1], [0, 0, 1, 1], [], []>} : vector<8x128xbf16>, vector<128x128xbf16>, vector<8x128xf32> -> vector<8x128xf32>
    %38 = arith.addf %26, %37 : vector<8x128xf32>
    %c3 = arith.constant 3 : index
    %c0_28 = arith.constant 0 : index
    %c0_29 = arith.constant 0 : index
    %39 = vector.load %arg1[%c3, %c0_28, %c0_29] : memref<7x8x64xbf16, #tpu.memory_space<vmem>>, vector<1x8x64xbf16>
    %40 = vector.shape_cast %39 : vector<1x8x64xbf16> to vector<8x64xbf16>
    %cst_30 = arith.constant dense<0.000000e+00> : vector<8x128xf32>
    %41 = tpu.matmul %40, %0, %cst_30 {dimension_numbers = #tpu.dot_dimension_numbers<[1], [0], [0], [1], [0, 0, 1, 1], [], []>} : vector<8x64xbf16>, vector<64x128xbf16>, vector<8x128xf32> -> vector<8x128xf32>
    %42 = vector.broadcast %1 : vector<1x128xf32> to vector<8x128xf32>
    %43 = arith.addf %41, %42 : vector<8x128xf32>
    %cst_31 = arith.constant 0.000000e+00 : f32
    %44 = vector.broadcast %cst_31 : f32 to vector<8x128xf32>
    %45 = arith.maximumf %43, %44 : vector<8x128xf32>
    %46 = arith.truncf %45 : vector<8x128xf32> to vector<8x128xbf16>
    %c3_32 = arith.constant 3 : index
    %c0_33 = arith.constant 0 : index
    %c0_34 = arith.constant 0 : index
    %47 = vector.load %arg5[%c3_32, %c0_33, %c0_34] : memref<7x128x128xbf16, #tpu.memory_space<vmem>>, vector<1x128x128xbf16>
    %48 = vector.shape_cast %47 : vector<1x128x128xbf16> to vector<128x128xbf16>
    %cst_35 = arith.constant dense<0.000000e+00> : vector<8x128xf32>
    %49 = tpu.matmul %46, %48, %cst_35 {dimension_numbers = #tpu.dot_dimension_numbers<[1], [0], [0], [1], [0, 0, 1, 1], [], []>} : vector<8x128xbf16>, vector<128x128xbf16>, vector<8x128xf32> -> vector<8x128xf32>
    %50 = arith.addf %38, %49 : vector<8x128xf32>
    %c4 = arith.constant 4 : index
    %c0_36 = arith.constant 0 : index
    %c0_37 = arith.constant 0 : index
    %51 = vector.load %arg1[%c4, %c0_36, %c0_37] : memref<7x8x64xbf16, #tpu.memory_space<vmem>>, vector<1x8x64xbf16>
    %52 = vector.shape_cast %51 : vector<1x8x64xbf16> to vector<8x64xbf16>
    %cst_38 = arith.constant dense<0.000000e+00> : vector<8x128xf32>
    %53 = tpu.matmul %52, %0, %cst_38 {dimension_numbers = #tpu.dot_dimension_numbers<[1], [0], [0], [1], [0, 0, 1, 1], [], []>} : vector<8x64xbf16>, vector<64x128xbf16>, vector<8x128xf32> -> vector<8x128xf32>
    %54 = vector.broadcast %1 : vector<1x128xf32> to vector<8x128xf32>
    %55 = arith.addf %53, %54 : vector<8x128xf32>
    %cst_39 = arith.constant 0.000000e+00 : f32
    %56 = vector.broadcast %cst_39 : f32 to vector<8x128xf32>
    %57 = arith.maximumf %55, %56 : vector<8x128xf32>
    %58 = arith.truncf %57 : vector<8x128xf32> to vector<8x128xbf16>
    %c4_40 = arith.constant 4 : index
    %c0_41 = arith.constant 0 : index
    %c0_42 = arith.constant 0 : index
    %59 = vector.load %arg5[%c4_40, %c0_41, %c0_42] : memref<7x128x128xbf16, #tpu.memory_space<vmem>>, vector<1x128x128xbf16>
    %60 = vector.shape_cast %59 : vector<1x128x128xbf16> to vector<128x128xbf16>
    %cst_43 = arith.constant dense<0.000000e+00> : vector<8x128xf32>
    %61 = tpu.matmul %58, %60, %cst_43 {dimension_numbers = #tpu.dot_dimension_numbers<[1], [0], [0], [1], [0, 0, 1, 1], [], []>} : vector<8x128xbf16>, vector<128x128xbf16>, vector<8x128xf32> -> vector<8x128xf32>
    %62 = arith.addf %50, %61 : vector<8x128xf32>
    %c5 = arith.constant 5 : index
    %c0_44 = arith.constant 0 : index
    %c0_45 = arith.constant 0 : index
    %63 = vector.load %arg1[%c5, %c0_44, %c0_45] : memref<7x8x64xbf16, #tpu.memory_space<vmem>>, vector<1x8x64xbf16>
    %64 = vector.shape_cast %63 : vector<1x8x64xbf16> to vector<8x64xbf16>
    %cst_46 = arith.constant dense<0.000000e+00> : vector<8x128xf32>
    %65 = tpu.matmul %64, %0, %cst_46 {dimension_numbers = #tpu.dot_dimension_numbers<[1], [0], [0], [1], [0, 0, 1, 1], [], []>} : vector<8x64xbf16>, vector<64x128xbf16>, vector<8x128xf32> -> vector<8x128xf32>
    %66 = vector.broadcast %1 : vector<1x128xf32> to vector<8x128xf32>
    %67 = arith.addf %65, %66 : vector<8x128xf32>
    %cst_47 = arith.constant 0.000000e+00 : f32
    %68 = vector.broadcast %cst_47 : f32 to vector<8x128xf32>
    %69 = arith.maximumf %67, %68 : vector<8x128xf32>
    %70 = arith.truncf %69 : vector<8x128xf32> to vector<8x128xbf16>
    %c5_48 = arith.constant 5 : index
    %c0_49 = arith.constant 0 : index
    %c0_50 = arith.constant 0 : index
    %71 = vector.load %arg5[%c5_48, %c0_49, %c0_50] : memref<7x128x128xbf16, #tpu.memory_space<vmem>>, vector<1x128x128xbf16>
    %72 = vector.shape_cast %71 : vector<1x128x128xbf16> to vector<128x128xbf16>
    %cst_51 = arith.constant dense<0.000000e+00> : vector<8x128xf32>
    %73 = tpu.matmul %70, %72, %cst_51 {dimension_numbers = #tpu.dot_dimension_numbers<[1], [0], [0], [1], [0, 0, 1, 1], [], []>} : vector<8x128xbf16>, vector<128x128xbf16>, vector<8x128xf32> -> vector<8x128xf32>
    %74 = arith.addf %62, %73 : vector<8x128xf32>
    %c6 = arith.constant 6 : index
    %c0_52 = arith.constant 0 : index
    %c0_53 = arith.constant 0 : index
    %75 = vector.load %arg1[%c6, %c0_52, %c0_53] : memref<7x8x64xbf16, #tpu.memory_space<vmem>>, vector<1x8x64xbf16>
    %76 = vector.shape_cast %75 : vector<1x8x64xbf16> to vector<8x64xbf16>
    %cst_54 = arith.constant dense<0.000000e+00> : vector<8x128xf32>
    %77 = tpu.matmul %76, %0, %cst_54 {dimension_numbers = #tpu.dot_dimension_numbers<[1], [0], [0], [1], [0, 0, 1, 1], [], []>} : vector<8x64xbf16>, vector<64x128xbf16>, vector<8x128xf32> -> vector<8x128xf32>
    %78 = vector.broadcast %1 : vector<1x128xf32> to vector<8x128xf32>
    %79 = arith.addf %77, %78 : vector<8x128xf32>
    %cst_55 = arith.constant 0.000000e+00 : f32
    %80 = vector.broadcast %cst_55 : f32 to vector<8x128xf32>
    %81 = arith.maximumf %79, %80 : vector<8x128xf32>
    %82 = arith.truncf %81 : vector<8x128xf32> to vector<8x128xbf16>
    %c6_56 = arith.constant 6 : index
    %c0_57 = arith.constant 0 : index
    %c0_58 = arith.constant 0 : index
    %83 = vector.load %arg5[%c6_56, %c0_57, %c0_58] : memref<7x128x128xbf16, #tpu.memory_space<vmem>>, vector<1x128x128xbf16>
    %84 = vector.shape_cast %83 : vector<1x128x128xbf16> to vector<128x128xbf16>
    %cst_59 = arith.constant dense<0.000000e+00> : vector<8x128xf32>
    %85 = tpu.matmul %82, %84, %cst_59 {dimension_numbers = #tpu.dot_dimension_numbers<[1], [0], [0], [1], [0, 0, 1, 1], [], []>} : vector<8x128xbf16>, vector<128x128xbf16>, vector<8x128xf32> -> vector<8x128xf32>
    %86 = arith.addf %74, %85 : vector<8x128xf32>
    %c0_60 = arith.constant 0 : index
    %c0_61 = arith.constant 0 : index
    %87 = vector.load %arg6[%c0_60, %c0_61] : memref<1x128xf32, #tpu.memory_space<vmem>>, vector<1x128xf32>
    %88 = vector.broadcast %87 : vector<1x128xf32> to vector<8x128xf32>
    %89 = arith.addf %86, %88 : vector<8x128xf32>
    %cst_62 = arith.constant 0.000000e+00 : f32
    %90 = vector.broadcast %cst_62 : f32 to vector<8x128xf32>
    %91 = arith.maximumf %89, %90 : vector<8x128xf32>
    %92 = arith.truncf %91 : vector<8x128xf32> to vector<8x128xbf16>
    %c0_63 = arith.constant 0 : index
    %c0_64 = arith.constant 0 : index
    %93 = vector.load %arg7[%c0_63, %c0_64] : memref<128x256xbf16, #tpu.memory_space<vmem>>, vector<128x256xbf16>
    %cst_65 = arith.constant dense<0.000000e+00> : vector<8x256xf32>
    %94 = tpu.matmul %92, %93, %cst_65 {dimension_numbers = #tpu.dot_dimension_numbers<[1], [0], [0], [1], [0, 0, 1, 1], [], []>} : vector<8x128xbf16>, vector<128x256xbf16>, vector<8x256xf32> -> vector<8x256xf32>
    %c0_66 = arith.constant 0 : index
    %c0_67 = arith.constant 0 : index
    %95 = vector.load %arg8[%c0_66, %c0_67] : memref<1x256xf32, #tpu.memory_space<vmem>>, vector<1x256xf32>
    %96 = vector.broadcast %95 : vector<1x256xf32> to vector<8x256xf32>
    %97 = arith.addf %94, %96 : vector<8x256xf32>
    %c0_68 = arith.constant 0 : index
    %c0_69 = arith.constant 0 : index
    %98 = vector.load %arg15[%c0_68, %c0_69] : memref<8x256xf32, #tpu.memory_space<vmem>>, vector<8x256xf32>
    tpu.vector_store %arg15[%c0_68, %c0_69], %97 {strides = array<i32>} : memref<8x256xf32, #tpu.memory_space<vmem>>, vector<8x256xf32>,
    %99 = vector.extract_strided_slice %97 {offsets = [0, 0], sizes = [8, 128], strides = [1, 1]} : vector<8x256xf32> to vector<8x128xf32>
    %100 = vector.extract_strided_slice %97 {offsets = [0, 128], sizes = [8, 128], strides = [1, 1]} : vector<8x256xf32> to vector<8x128xf32>
    %c0_70 = arith.constant 0 : index
    %c0_71 = arith.constant 0 : index
    %101 = vector.load %arg2[%c0_70, %c0_71] : memref<8x128xf32, #tpu.memory_space<vmem>>, vector<8x128xf32>
    %cst_72 = arith.constant 5.000000e-01 : f32
    %102 = vector.broadcast %cst_72 : f32 to vector<8x128xf32>
    %103 = arith.mulf %102, %100 : vector<8x128xf32>
    %104 = math.exp %103 : vector<8x128xf32>
    %105 = arith.mulf %101, %104 : vector<8x128xf32>
    %106 = arith.addf %99, %105 : vector<8x128xf32>
    %107 = arith.truncf %106 : vector<8x128xf32> to vector<8x128xbf16>
    %c0_73 = arith.constant 0 : index
    %c0_74 = arith.constant 0 : index
    %108 = vector.load %arg9[%c0_73, %c0_74] : memref<128x128xbf16, #tpu.memory_space<vmem>>, vector<128x128xbf16>
    %cst_75 = arith.constant dense<0.000000e+00> : vector<8x128xf32>
    %109 = tpu.matmul %107, %108, %cst_75 {dimension_numbers = #tpu.dot_dimension_numbers<[1], [0], [0], [1], [0, 0, 1, 1], [], []>} : vector<8x128xbf16>, vector<128x128xbf16>, vector<8x128xf32> -> vector<8x128xf32>
    %c0_76 = arith.constant 0 : index
    %c0_77 = arith.constant 0 : index
    %110 = vector.load %arg10[%c0_76, %c0_77] : memref<1x128xf32, #tpu.memory_space<vmem>>, vector<1x128xf32>
    %111 = vector.broadcast %110 : vector<1x128xf32> to vector<8x128xf32>
    %112 = arith.addf %109, %111 : vector<8x128xf32>
    %cst_78 = arith.constant 0.000000e+00 : f32
    %113 = vector.broadcast %cst_78 : f32 to vector<8x128xf32>
    %114 = arith.maximumf %112, %113 : vector<8x128xf32>
    %115 = arith.truncf %114 : vector<8x128xf32> to vector<8x128xbf16>
    %c0_79 = arith.constant 0 : index
    %c0_80 = arith.constant 0 : index
    %116 = vector.load %arg13[%c0_79, %c0_80] : memref<128x128xbf16, #tpu.memory_space<vmem>>, vector<128x128xbf16>
    %c0_81 = arith.constant 0 : index
    %c0_82 = arith.constant 0 : index
    %117 = vector.load %arg14[%c0_81, %c0_82] : memref<1x128xf32, #tpu.memory_space<vmem>>, vector<1x128xf32>
    %c0_83 = arith.constant 0 : index
    %c0_84 = arith.constant 0 : index
    %c0_85 = arith.constant 0 : index
    %118 = vector.load %arg11[%c0_83, %c0_84, %c0_85] : memref<16x128x128xbf16, #tpu.memory_space<vmem>>, vector<1x128x128xbf16>
    %119 = vector.shape_cast %118 : vector<1x128x128xbf16> to vector<128x128xbf16>
    %cst_86 = arith.constant dense<0.000000e+00> : vector<8x128xf32>
    %120 = tpu.matmul %115, %119, %cst_86 {dimension_numbers = #tpu.dot_dimension_numbers<[1], [0], [0], [1], [0, 0, 1, 1], [], []>} : vector<8x128xbf16>, vector<128x128xbf16>, vector<8x128xf32> -> vector<8x128xf32>
    %c0_87 = arith.constant 0 : index
    %c0_88 = arith.constant 0 : index
    %c0_89 = arith.constant 0 : index
    %121 = vector.load %arg12[%c0_87, %c0_88, %c0_89] : memref<16x1x128xf32, #tpu.memory_space<vmem>>, vector<1x1x128xf32>
    %122 = vector.shape_cast %121 : vector<1x1x128xf32> to vector<1x128xf32>
    %123 = vector.broadcast %122 : vector<1x128xf32> to vector<8x128xf32>
    %124 = arith.addf %120, %123 : vector<8x128xf32>
    %cst_90 = arith.constant 0.000000e+00 : f32
    %125 = vector.broadcast %cst_90 : f32 to vector<8x128xf32>
    %126 = arith.subf %125, %124 : vector<8x128xf32>
    %127 = math.exp %126 : vector<8x128xf32>
    %cst_91 = arith.constant 1.000000e+00 : f32
    %128 = vector.broadcast %cst_91 : f32 to vector<8x128xf32>
    %129 = arith.addf %128, %127 : vector<8x128xf32>
    %130 = tpu.reciprocal %129 {approx = true} : vector<8x128xf32> -> vector<8x128xf32>
    %131 = arith.truncf %130 : vector<8x128xf32> to vector<8x128xbf16>
    %cst_92 = arith.constant dense<0.000000e+00> : vector<8x128xf32>
    %132 = tpu.matmul %131, %116, %cst_92 {dimension_numbers = #tpu.dot_dimension_numbers<[1], [0], [0], [1], [0, 0, 1, 1], [], []>} : vector<8x128xbf16>, vector<128x128xbf16>, vector<8x128xf32> -> vector<8x128xf32>
    %133 = vector.broadcast %117 : vector<1x128xf32> to vector<8x128xf32>
    %134 = arith.addf %132, %133 : vector<8x128xf32>
    %135 = vector.extract_strided_slice %134 {offsets = [0, 0], sizes = [8, 8], strides = [1, 1]} : vector<8x128xf32> to vector<8x8xf32>
    %cst_93 = arith.constant 0.000000e+00 : f32
    %136 = vector.broadcast %cst_93 : f32 to vector<8x8xf32>
    %137 = arith.maximumf %135, %136 : vector<8x8xf32>
    %cst_94 = arith.constant 0.000000e+00 : f32
    %138 = vector.broadcast %cst_94 : f32 to vector<8x8xf32>
    %139 = arith.subf %138, %137 : vector<8x8xf32>
    %140 = math.exp %139 : vector<8x8xf32>
    %cst_95 = arith.constant 1.000000e+00 : f32
    %141 = vector.broadcast %cst_95 : f32 to vector<8x8xf32>
    %142 = arith.addf %141, %140 : vector<8x8xf32>
    %143 = tpu.reciprocal %142 {approx = true} : vector<8x8xf32> -> vector<8x8xf32>
    %c0_96 = arith.constant 0 : index
    %c0_97 = arith.constant 0 : index
    %c0_98 = arith.constant 0 : index
    %144 = vector.load %arg16[%c0_96, %c0_97, %c0_98] : memref<16x8x8xf32, #tpu.memory_space<vmem>>, vector<1x8x8xf32>
    %145 = vector.shape_cast %144 : vector<1x8x8xf32> to vector<8x8xf32>
    %146 = vector.shape_cast %143 : vector<8x8xf32> to vector<1x8x8xf32>
    tpu.vector_store %arg16[%c0_96, %c0_97, %c0_98], %146 {strides = array<i32>} : memref<16x8x8xf32, #tpu.memory_space<vmem>>, vector<1x8x8xf32>,
    %c1_99 = arith.constant 1 : index
    %c0_100 = arith.constant 0 : index
    %c0_101 = arith.constant 0 : index
    %147 = vector.load %arg11[%c1_99, %c0_100, %c0_101] : memref<16x128x128xbf16, #tpu.memory_space<vmem>>, vector<1x128x128xbf16>
    %148 = vector.shape_cast %147 : vector<1x128x128xbf16> to vector<128x128xbf16>
    %cst_102 = arith.constant dense<0.000000e+00> : vector<8x128xf32>
    %149 = tpu.matmul %115, %148, %cst_102 {dimension_numbers = #tpu.dot_dimension_numbers<[1], [0], [0], [1], [0, 0, 1, 1], [], []>} : vector<8x128xbf16>, vector<128x128xbf16>, vector<8x128xf32> -> vector<8x128xf32>
    %c1_103 = arith.constant 1 : index
    %c0_104 = arith.constant 0 : index
    %c0_105 = arith.constant 0 : index
    %150 = vector.load %arg12[%c1_103, %c0_104, %c0_105] : memref<16x1x128xf32, #tpu.memory_space<vmem>>, vector<1x1x128xf32>
    %151 = vector.shape_cast %150 : vector<1x1x128xf32> to vector<1x128xf32>
    %152 = vector.broadcast %151 : vector<1x128xf32> to vector<8x128xf32>
    %153 = arith.addf %149, %152 : vector<8x128xf32>
    %cst_106 = arith.constant 0.000000e+00 : f32
    %154 = vector.broadcast %cst_106 : f32 to vector<8x128xf32>
    %155 = arith.subf %154, %153 : vector<8x128xf32>
    %156 = math.exp %155 : vector<8x128xf32>
    %cst_107 = arith.constant 1.000000e+00 : f32
    %157 = vector.broadcast %cst_107 : f32 to vector<8x128xf32>
    %158 = arith.addf %157, %156 : vector<8x128xf32>
    %159 = tpu.reciprocal %158 {approx = true} : vector<8x128xf32> -> vector<8x128xf32>
    %160 = arith.truncf %159 : vector<8x128xf32> to vector<8x128xbf16>
    %cst_108 = arith.constant dense<0.000000e+00> : vector<8x128xf32>
    %161 = tpu.matmul %160, %116, %cst_108 {dimension_numbers = #tpu.dot_dimension_numbers<[1], [0], [0], [1], [0, 0, 1, 1], [], []>} : vector<8x128xbf16>, vector<128x128xbf16>, vector<8x128xf32> -> vector<8x128xf32>
    %162 = vector.broadcast %117 : vector<1x128xf32> to vector<8x128xf32>
    %163 = arith.addf %161, %162 : vector<8x128xf32>
    %164 = vector.extract_strided_slice %163 {offsets = [0, 0], sizes = [8, 8], strides = [1, 1]} : vector<8x128xf32> to vector<8x8xf32>
    %cst_109 = arith.constant 0.000000e+00 : f32
    %165 = vector.broadcast %cst_109 : f32 to vector<8x8xf32>
    %166 = arith.maximumf %164, %165 : vector<8x8xf32>
    %cst_110 = arith.constant 0.000000e+00 : f32
    %167 = vector.broadcast %cst_110 : f32 to vector<8x8xf32>
    %168 = arith.subf %167, %166 : vector<8x8xf32>
    %169 = math.exp %168 : vector<8x8xf32>
    %cst_111 = arith.constant 1.000000e+00 : f32
    %170 = vector.broadcast %cst_111 : f32 to vector<8x8xf32>
    %171 = arith.addf %170, %169 : vector<8x8xf32>
    %172 = tpu.reciprocal %171 {approx = true} : vector<8x8xf32> -> vector<8x8xf32>
    %c1_112 = arith.constant 1 : index
    %c0_113 = arith.constant 0 : index
    %c0_114 = arith.constant 0 : index
    %173 = vector.load %arg16[%c1_112, %c0_113, %c0_114] : memref<16x8x8xf32, #tpu.memory_space<vmem>>, vector<1x8x8xf32>
    %174 = vector.shape_cast %173 : vector<1x8x8xf32> to vector<8x8xf32>
    %175 = vector.shape_cast %172 : vector<8x8xf32> to vector<1x8x8xf32>
    tpu.vector_store %arg16[%c1_112, %c0_113, %c0_114], %175 {strides = array<i32>} : memref<16x8x8xf32, #tpu.memory_space<vmem>>, vector<1x8x8xf32>,
    %c2_115 = arith.constant 2 : index
    %c0_116 = arith.constant 0 : index
    %c0_117 = arith.constant 0 : index
    %176 = vector.load %arg11[%c2_115, %c0_116, %c0_117] : memref<16x128x128xbf16, #tpu.memory_space<vmem>>, vector<1x128x128xbf16>
    %177 = vector.shape_cast %176 : vector<1x128x128xbf16> to vector<128x128xbf16>
    %cst_118 = arith.constant dense<0.000000e+00> : vector<8x128xf32>
    %178 = tpu.matmul %115, %177, %cst_118 {dimension_numbers = #tpu.dot_dimension_numbers<[1], [0], [0], [1], [0, 0, 1, 1], [], []>} : vector<8x128xbf16>, vector<128x128xbf16>, vector<8x128xf32> -> vector<8x128xf32>
    %c2_119 = arith.constant 2 : index
    %c0_120 = arith.constant 0 : index
    %c0_121 = arith.constant 0 : index
    %179 = vector.load %arg12[%c2_119, %c0_120, %c0_121] : memref<16x1x128xf32, #tpu.memory_space<vmem>>, vector<1x1x128xf32>
    %180 = vector.shape_cast %179 : vector<1x1x128xf32> to vector<1x128xf32>
    %181 = vector.broadcast %180 : vector<1x128xf32> to vector<8x128xf32>
    %182 = arith.addf %178, %181 : vector<8x128xf32>
    %cst_122 = arith.constant 0.000000e+00 : f32
    %183 = vector.broadcast %cst_122 : f32 to vector<8x128xf32>
    %184 = arith.subf %183, %182 : vector<8x128xf32>
    %185 = math.exp %184 : vector<8x128xf32>
    %cst_123 = arith.constant 1.000000e+00 : f32
    %186 = vector.broadcast %cst_123 : f32 to vector<8x128xf32>
    %187 = arith.addf %186, %185 : vector<8x128xf32>
    %188 = tpu.reciprocal %187 {approx = true} : vector<8x128xf32> -> vector<8x128xf32>
    %189 = arith.truncf %188 : vector<8x128xf32> to vector<8x128xbf16>
    %cst_124 = arith.constant dense<0.000000e+00> : vector<8x128xf32>
    %190 = tpu.matmul %189, %116, %cst_124 {dimension_numbers = #tpu.dot_dimension_numbers<[1], [0], [0], [1], [0, 0, 1, 1], [], []>} : vector<8x128xbf16>, vector<128x128xbf16>, vector<8x128xf32> -> vector<8x128xf32>
    %191 = vector.broadcast %117 : vector<1x128xf32> to vector<8x128xf32>
    %192 = arith.addf %190, %191 : vector<8x128xf32>
    %193 = vector.extract_strided_slice %192 {offsets = [0, 0], sizes = [8, 8], strides = [1, 1]} : vector<8x128xf32> to vector<8x8xf32>
    %cst_125 = arith.constant 0.000000e+00 : f32
    %194 = vector.broadcast %cst_125 : f32 to vector<8x8xf32>
    %195 = arith.maximumf %193, %194 : vector<8x8xf32>
    %cst_126 = arith.constant 0.000000e+00 : f32
    %196 = vector.broadcast %cst_126 : f32 to vector<8x8xf32>
    %197 = arith.subf %196, %195 : vector<8x8xf32>
    %198 = math.exp %197 : vector<8x8xf32>
    %cst_127 = arith.constant 1.000000e+00 : f32
    %199 = vector.broadcast %cst_127 : f32 to vector<8x8xf32>
    %200 = arith.addf %199, %198 : vector<8x8xf32>
    %201 = tpu.reciprocal %200 {approx = true} : vector<8x8xf32> -> vector<8x8xf32>
    %c2_128 = arith.constant 2 : index
    %c0_129 = arith.constant 0 : index
    %c0_130 = arith.constant 0 : index
    %202 = vector.load %arg16[%c2_128, %c0_129, %c0_130] : memref<16x8x8xf32, #tpu.memory_space<vmem>>, vector<1x8x8xf32>
    %203 = vector.shape_cast %202 : vector<1x8x8xf32> to vector<8x8xf32>
    %204 = vector.shape_cast %201 : vector<8x8xf32> to vector<1x8x8xf32>
    tpu.vector_store %arg16[%c2_128, %c0_129, %c0_130], %204 {strides = array<i32>} : memref<16x8x8xf32, #tpu.memory_space<vmem>>, vector<1x8x8xf32>,
    %c3_131 = arith.constant 3 : index
    %c0_132 = arith.constant 0 : index
    %c0_133 = arith.constant 0 : index
    %205 = vector.load %arg11[%c3_131, %c0_132, %c0_133] : memref<16x128x128xbf16, #tpu.memory_space<vmem>>, vector<1x128x128xbf16>
    %206 = vector.shape_cast %205 : vector<1x128x128xbf16> to vector<128x128xbf16>
    %cst_134 = arith.constant dense<0.000000e+00> : vector<8x128xf32>
    %207 = tpu.matmul %115, %206, %cst_134 {dimension_numbers = #tpu.dot_dimension_numbers<[1], [0], [0], [1], [0, 0, 1, 1], [], []>} : vector<8x128xbf16>, vector<128x128xbf16>, vector<8x128xf32> -> vector<8x128xf32>
    %c3_135 = arith.constant 3 : index
    %c0_136 = arith.constant 0 : index
    %c0_137 = arith.constant 0 : index
    %208 = vector.load %arg12[%c3_135, %c0_136, %c0_137] : memref<16x1x128xf32, #tpu.memory_space<vmem>>, vector<1x1x128xf32>
    %209 = vector.shape_cast %208 : vector<1x1x128xf32> to vector<1x128xf32>
    %210 = vector.broadcast %209 : vector<1x128xf32> to vector<8x128xf32>
    %211 = arith.addf %207, %210 : vector<8x128xf32>
    %cst_138 = arith.constant 0.000000e+00 : f32
    %212 = vector.broadcast %cst_138 : f32 to vector<8x128xf32>
    %213 = arith.subf %212, %211 : vector<8x128xf32>
    %214 = math.exp %213 : vector<8x128xf32>
    %cst_139 = arith.constant 1.000000e+00 : f32
    %215 = vector.broadcast %cst_139 : f32 to vector<8x128xf32>
    %216 = arith.addf %215, %214 : vector<8x128xf32>
    %217 = tpu.reciprocal %216 {approx = true} : vector<8x128xf32> -> vector<8x128xf32>
    %218 = arith.truncf %217 : vector<8x128xf32> to vector<8x128xbf16>
    %cst_140 = arith.constant dense<0.000000e+00> : vector<8x128xf32>
    %219 = tpu.matmul %218, %116, %cst_140 {dimension_numbers = #tpu.dot_dimension_numbers<[1], [0], [0], [1], [0, 0, 1, 1], [], []>} : vector<8x128xbf16>, vector<128x128xbf16>, vector<8x128xf32> -> vector<8x128xf32>
    %220 = vector.broadcast %117 : vector<1x128xf32> to vector<8x128xf32>
    %221 = arith.addf %219, %220 : vector<8x128xf32>
    %222 = vector.extract_strided_slice %221 {offsets = [0, 0], sizes = [8, 8], strides = [1, 1]} : vector<8x128xf32> to vector<8x8xf32>
    %cst_141 = arith.constant 0.000000e+00 : f32
    %223 = vector.broadcast %cst_141 : f32 to vector<8x8xf32>
    %224 = arith.maximumf %222, %223 : vector<8x8xf32>
    %cst_142 = arith.constant 0.000000e+00 : f32
    %225 = vector.broadcast %cst_142 : f32 to vector<8x8xf32>
    %226 = arith.subf %225, %224 : vector<8x8xf32>
    %227 = math.exp %226 : vector<8x8xf32>
    %cst_143 = arith.constant 1.000000e+00 : f32
    %228 = vector.broadcast %cst_143 : f32 to vector<8x8xf32>
    %229 = arith.addf %228, %227 : vector<8x8xf32>
    %230 = tpu.reciprocal %229 {approx = true} : vector<8x8xf32> -> vector<8x8xf32>
    %c3_144 = arith.constant 3 : index
    %c0_145 = arith.constant 0 : index
    %c0_146 = arith.constant 0 : index
    %231 = vector.load %arg16[%c3_144, %c0_145, %c0_146] : memref<16x8x8xf32, #tpu.memory_space<vmem>>, vector<1x8x8xf32>
    %232 = vector.shape_cast %231 : vector<1x8x8xf32> to vector<8x8xf32>
    %233 = vector.shape_cast %230 : vector<8x8xf32> to vector<1x8x8xf32>
    tpu.vector_store %arg16[%c3_144, %c0_145, %c0_146], %233 {strides = array<i32>} : memref<16x8x8xf32, #tpu.memory_space<vmem>>, vector<1x8x8xf32>,
    %c4_147 = arith.constant 4 : index
    %c0_148 = arith.constant 0 : index
    %c0_149 = arith.constant 0 : index
    %234 = vector.load %arg11[%c4_147, %c0_148, %c0_149] : memref<16x128x128xbf16, #tpu.memory_space<vmem>>, vector<1x128x128xbf16>
    %235 = vector.shape_cast %234 : vector<1x128x128xbf16> to vector<128x128xbf16>
    %cst_150 = arith.constant dense<0.000000e+00> : vector<8x128xf32>
    %236 = tpu.matmul %115, %235, %cst_150 {dimension_numbers = #tpu.dot_dimension_numbers<[1], [0], [0], [1], [0, 0, 1, 1], [], []>} : vector<8x128xbf16>, vector<128x128xbf16>, vector<8x128xf32> -> vector<8x128xf32>
    %c4_151 = arith.constant 4 : index
    %c0_152 = arith.constant 0 : index
    %c0_153 = arith.constant 0 : index
    %237 = vector.load %arg12[%c4_151, %c0_152, %c0_153] : memref<16x1x128xf32, #tpu.memory_space<vmem>>, vector<1x1x128xf32>
    %238 = vector.shape_cast %237 : vector<1x1x128xf32> to vector<1x128xf32>
    %239 = vector.broadcast %238 : vector<1x128xf32> to vector<8x128xf32>
    %240 = arith.addf %236, %239 : vector<8x128xf32>
    %cst_154 = arith.constant 0.000000e+00 : f32
    %241 = vector.broadcast %cst_154 : f32 to vector<8x128xf32>
    %242 = arith.subf %241, %240 : vector<8x128xf32>
    %243 = math.exp %242 : vector<8x128xf32>
    %cst_155 = arith.constant 1.000000e+00 : f32
    %244 = vector.broadcast %cst_155 : f32 to vector<8x128xf32>
    %245 = arith.addf %244, %243 : vector<8x128xf32>
    %246 = tpu.reciprocal %245 {approx = true} : vector<8x128xf32> -> vector<8x128xf32>
    %247 = arith.truncf %246 : vector<8x128xf32> to vector<8x128xbf16>
    %cst_156 = arith.constant dense<0.000000e+00> : vector<8x128xf32>
    %248 = tpu.matmul %247, %116, %cst_156 {dimension_numbers = #tpu.dot_dimension_numbers<[1], [0], [0], [1], [0, 0, 1, 1], [], []>} : vector<8x128xbf16>, vector<128x128xbf16>, vector<8x128xf32> -> vector<8x128xf32>
    %249 = vector.broadcast %117 : vector<1x128xf32> to vector<8x128xf32>
    %250 = arith.addf %248, %249 : vector<8x128xf32>
    %251 = vector.extract_strided_slice %250 {offsets = [0, 0], sizes = [8, 8], strides = [1, 1]} : vector<8x128xf32> to vector<8x8xf32>
    %cst_157 = arith.constant 0.000000e+00 : f32
    %252 = vector.broadcast %cst_157 : f32 to vector<8x8xf32>
    %253 = arith.maximumf %251, %252 : vector<8x8xf32>
    %cst_158 = arith.constant 0.000000e+00 : f32
    %254 = vector.broadcast %cst_158 : f32 to vector<8x8xf32>
    %255 = arith.subf %254, %253 : vector<8x8xf32>
    %256 = math.exp %255 : vector<8x8xf32>
    %cst_159 = arith.constant 1.000000e+00 : f32
    %257 = vector.broadcast %cst_159 : f32 to vector<8x8xf32>
    %258 = arith.addf %257, %256 : vector<8x8xf32>
    %259 = tpu.reciprocal %258 {approx = true} : vector<8x8xf32> -> vector<8x8xf32>
    %c4_160 = arith.constant 4 : index
    %c0_161 = arith.constant 0 : index
    %c0_162 = arith.constant 0 : index
    %260 = vector.load %arg16[%c4_160, %c0_161, %c0_162] : memref<16x8x8xf32, #tpu.memory_space<vmem>>, vector<1x8x8xf32>
    %261 = vector.shape_cast %260 : vector<1x8x8xf32> to vector<8x8xf32>
    %262 = vector.shape_cast %259 : vector<8x8xf32> to vector<1x8x8xf32>
    tpu.vector_store %arg16[%c4_160, %c0_161, %c0_162], %262 {strides = array<i32>} : memref<16x8x8xf32, #tpu.memory_space<vmem>>, vector<1x8x8xf32>,
    %c5_163 = arith.constant 5 : index
    %c0_164 = arith.constant 0 : index
    %c0_165 = arith.constant 0 : index
    %263 = vector.load %arg11[%c5_163, %c0_164, %c0_165] : memref<16x128x128xbf16, #tpu.memory_space<vmem>>, vector<1x128x128xbf16>
    %264 = vector.shape_cast %263 : vector<1x128x128xbf16> to vector<128x128xbf16>
    %cst_166 = arith.constant dense<0.000000e+00> : vector<8x128xf32>
    %265 = tpu.matmul %115, %264, %cst_166 {dimension_numbers = #tpu.dot_dimension_numbers<[1], [0], [0], [1], [0, 0, 1, 1], [], []>} : vector<8x128xbf16>, vector<128x128xbf16>, vector<8x128xf32> -> vector<8x128xf32>
    %c5_167 = arith.constant 5 : index
    %c0_168 = arith.constant 0 : index
    %c0_169 = arith.constant 0 : index
    %266 = vector.load %arg12[%c5_167, %c0_168, %c0_169] : memref<16x1x128xf32, #tpu.memory_space<vmem>>, vector<1x1x128xf32>
    %267 = vector.shape_cast %266 : vector<1x1x128xf32> to vector<1x128xf32>
    %268 = vector.broadcast %267 : vector<1x128xf32> to vector<8x128xf32>
    %269 = arith.addf %265, %268 : vector<8x128xf32>
    %cst_170 = arith.constant 0.000000e+00 : f32
    %270 = vector.broadcast %cst_170 : f32 to vector<8x128xf32>
    %271 = arith.subf %270, %269 : vector<8x128xf32>
    %272 = math.exp %271 : vector<8x128xf32>
    %cst_171 = arith.constant 1.000000e+00 : f32
    %273 = vector.broadcast %cst_171 : f32 to vector<8x128xf32>
    %274 = arith.addf %273, %272 : vector<8x128xf32>
    %275 = tpu.reciprocal %274 {approx = true} : vector<8x128xf32> -> vector<8x128xf32>
    %276 = arith.truncf %275 : vector<8x128xf32> to vector<8x128xbf16>
    %cst_172 = arith.constant dense<0.000000e+00> : vector<8x128xf32>
    %277 = tpu.matmul %276, %116, %cst_172 {dimension_numbers = #tpu.dot_dimension_numbers<[1], [0], [0], [1], [0, 0, 1, 1], [], []>} : vector<8x128xbf16>, vector<128x128xbf16>, vector<8x128xf32> -> vector<8x128xf32>
    %278 = vector.broadcast %117 : vector<1x128xf32> to vector<8x128xf32>
    %279 = arith.addf %277, %278 : vector<8x128xf32>
    %280 = vector.extract_strided_slice %279 {offsets = [0, 0], sizes = [8, 8], strides = [1, 1]} : vector<8x128xf32> to vector<8x8xf32>
    %cst_173 = arith.constant 0.000000e+00 : f32
    %281 = vector.broadcast %cst_173 : f32 to vector<8x8xf32>
    %282 = arith.maximumf %280, %281 : vector<8x8xf32>
    %cst_174 = arith.constant 0.000000e+00 : f32
    %283 = vector.broadcast %cst_174 : f32 to vector<8x8xf32>
    %284 = arith.subf %283, %282 : vector<8x8xf32>
    %285 = math.exp %284 : vector<8x8xf32>
    %cst_175 = arith.constant 1.000000e+00 : f32
    %286 = vector.broadcast %cst_175 : f32 to vector<8x8xf32>
    %287 = arith.addf %286, %285 : vector<8x8xf32>
    %288 = tpu.reciprocal %287 {approx = true} : vector<8x8xf32> -> vector<8x8xf32>
    %c5_176 = arith.constant 5 : index
    %c0_177 = arith.constant 0 : index
    %c0_178 = arith.constant 0 : index
    %289 = vector.load %arg16[%c5_176, %c0_177, %c0_178] : memref<16x8x8xf32, #tpu.memory_space<vmem>>, vector<1x8x8xf32>
    %290 = vector.shape_cast %289 : vector<1x8x8xf32> to vector<8x8xf32>
    %291 = vector.shape_cast %288 : vector<8x8xf32> to vector<1x8x8xf32>
    tpu.vector_store %arg16[%c5_176, %c0_177, %c0_178], %291 {strides = array<i32>} : memref<16x8x8xf32, #tpu.memory_space<vmem>>, vector<1x8x8xf32>,
    %c6_179 = arith.constant 6 : index
    %c0_180 = arith.constant 0 : index
    %c0_181 = arith.constant 0 : index
    %292 = vector.load %arg11[%c6_179, %c0_180, %c0_181] : memref<16x128x128xbf16, #tpu.memory_space<vmem>>, vector<1x128x128xbf16>
    %293 = vector.shape_cast %292 : vector<1x128x128xbf16> to vector<128x128xbf16>
    %cst_182 = arith.constant dense<0.000000e+00> : vector<8x128xf32>
    %294 = tpu.matmul %115, %293, %cst_182 {dimension_numbers = #tpu.dot_dimension_numbers<[1], [0], [0], [1], [0, 0, 1, 1], [], []>} : vector<8x128xbf16>, vector<128x128xbf16>, vector<8x128xf32> -> vector<8x128xf32>
    %c6_183 = arith.constant 6 : index
    %c0_184 = arith.constant 0 : index
    %c0_185 = arith.constant 0 : index
    %295 = vector.load %arg12[%c6_183, %c0_184, %c0_185] : memref<16x1x128xf32, #tpu.memory_space<vmem>>, vector<1x1x128xf32>
    %296 = vector.shape_cast %295 : vector<1x1x128xf32> to vector<1x128xf32>
    %297 = vector.broadcast %296 : vector<1x128xf32> to vector<8x128xf32>
    %298 = arith.addf %294, %297 : vector<8x128xf32>
    %cst_186 = arith.constant 0.000000e+00 : f32
    %299 = vector.broadcast %cst_186 : f32 to vector<8x128xf32>
    %300 = arith.subf %299, %298 : vector<8x128xf32>
    %301 = math.exp %300 : vector<8x128xf32>
    %cst_187 = arith.constant 1.000000e+00 : f32
    %302 = vector.broadcast %cst_187 : f32 to vector<8x128xf32>
    %303 = arith.addf %302, %301 : vector<8x128xf32>
    %304 = tpu.reciprocal %303 {approx = true} : vector<8x128xf32> -> vector<8x128xf32>
    %305 = arith.truncf %304 : vector<8x128xf32> to vector<8x128xbf16>
    %cst_188 = arith.constant dense<0.000000e+00> : vector<8x128xf32>
    %306 = tpu.matmul %305, %116, %cst_188 {dimension_numbers = #tpu.dot_dimension_numbers<[1], [0], [0], [1], [0, 0, 1, 1], [], []>} : vector<8x128xbf16>, vector<128x128xbf16>, vector<8x128xf32> -> vector<8x128xf32>
    %307 = vector.broadcast %117 : vector<1x128xf32> to vector<8x128xf32>
    %308 = arith.addf %306, %307 : vector<8x128xf32>
    %309 = vector.extract_strided_slice %308 {offsets = [0, 0], sizes = [8, 8], strides = [1, 1]} : vector<8x128xf32> to vector<8x8xf32>
    %cst_189 = arith.constant 0.000000e+00 : f32
    %310 = vector.broadcast %cst_189 : f32 to vector<8x8xf32>
    %311 = arith.maximumf %309, %310 : vector<8x8xf32>
    %cst_190 = arith.constant 0.000000e+00 : f32
    %312 = vector.broadcast %cst_190 : f32 to vector<8x8xf32>
    %313 = arith.subf %312, %311 : vector<8x8xf32>
    %314 = math.exp %313 : vector<8x8xf32>
    %cst_191 = arith.constant 1.000000e+00 : f32
    %315 = vector.broadcast %cst_191 : f32 to vector<8x8xf32>
    %316 = arith.addf %315, %314 : vector<8x8xf32>
    %317 = tpu.reciprocal %316 {approx = true} : vector<8x8xf32> -> vector<8x8xf32>
    %c6_192 = arith.constant 6 : index
    %c0_193 = arith.constant 0 : index
    %c0_194 = arith.constant 0 : index
    %318 = vector.load %arg16[%c6_192, %c0_193, %c0_194] : memref<16x8x8xf32, #tpu.memory_space<vmem>>, vector<1x8x8xf32>
    %319 = vector.shape_cast %318 : vector<1x8x8xf32> to vector<8x8xf32>
    %320 = vector.shape_cast %317 : vector<8x8xf32> to vector<1x8x8xf32>
    tpu.vector_store %arg16[%c6_192, %c0_193, %c0_194], %320 {strides = array<i32>} : memref<16x8x8xf32, #tpu.memory_space<vmem>>, vector<1x8x8xf32>,
    %c7 = arith.constant 7 : index
    %c0_195 = arith.constant 0 : index
    %c0_196 = arith.constant 0 : index
    %321 = vector.load %arg11[%c7, %c0_195, %c0_196] : memref<16x128x128xbf16, #tpu.memory_space<vmem>>, vector<1x128x128xbf16>
    %322 = vector.shape_cast %321 : vector<1x128x128xbf16> to vector<128x128xbf16>
    %cst_197 = arith.constant dense<0.000000e+00> : vector<8x128xf32>
    %323 = tpu.matmul %115, %322, %cst_197 {dimension_numbers = #tpu.dot_dimension_numbers<[1], [0], [0], [1], [0, 0, 1, 1], [], []>} : vector<8x128xbf16>, vector<128x128xbf16>, vector<8x128xf32> -> vector<8x128xf32>
    %c7_198 = arith.constant 7 : index
    %c0_199 = arith.constant 0 : index
    %c0_200 = arith.constant 0 : index
    %324 = vector.load %arg12[%c7_198, %c0_199, %c0_200] : memref<16x1x128xf32, #tpu.memory_space<vmem>>, vector<1x1x128xf32>
    %325 = vector.shape_cast %324 : vector<1x1x128xf32> to vector<1x128xf32>
    %326 = vector.broadcast %325 : vector<1x128xf32> to vector<8x128xf32>
    %327 = arith.addf %323, %326 : vector<8x128xf32>
    %cst_201 = arith.constant 0.000000e+00 : f32
    %328 = vector.broadcast %cst_201 : f32 to vector<8x128xf32>
    %329 = arith.subf %328, %327 : vector<8x128xf32>
    %330 = math.exp %329 : vector<8x128xf32>
    %cst_202 = arith.constant 1.000000e+00 : f32
    %331 = vector.broadcast %cst_202 : f32 to vector<8x128xf32>
    %332 = arith.addf %331, %330 : vector<8x128xf32>
    %333 = tpu.reciprocal %332 {approx = true} : vector<8x128xf32> -> vector<8x128xf32>
    %334 = arith.truncf %333 : vector<8x128xf32> to vector<8x128xbf16>
    %cst_203 = arith.constant dense<0.000000e+00> : vector<8x128xf32>
    %335 = tpu.matmul %334, %116, %cst_203 {dimension_numbers = #tpu.dot_dimension_numbers<[1], [0], [0], [1], [0, 0, 1, 1], [], []>} : vector<8x128xbf16>, vector<128x128xbf16>, vector<8x128xf32> -> vector<8x128xf32>
    %336 = vector.broadcast %117 : vector<1x128xf32> to vector<8x128xf32>
    %337 = arith.addf %335, %336 : vector<8x128xf32>
    %338 = vector.extract_strided_slice %337 {offsets = [0, 0], sizes = [8, 8], strides = [1, 1]} : vector<8x128xf32> to vector<8x8xf32>
    %cst_204 = arith.constant 0.000000e+00 : f32
    %339 = vector.broadcast %cst_204 : f32 to vector<8x8xf32>
    %340 = arith.maximumf %338, %339 : vector<8x8xf32>
    %cst_205 = arith.constant 0.000000e+00 : f32
    %341 = vector.broadcast %cst_205 : f32 to vector<8x8xf32>
    %342 = arith.subf %341, %340 : vector<8x8xf32>
    %343 = math.exp %342 : vector<8x8xf32>
    %cst_206 = arith.constant 1.000000e+00 : f32
    %344 = vector.broadcast %cst_206 : f32 to vector<8x8xf32>
    %345 = arith.addf %344, %343 : vector<8x8xf32>
    %346 = tpu.reciprocal %345 {approx = true} : vector<8x8xf32> -> vector<8x8xf32>
    %c7_207 = arith.constant 7 : index
    %c0_208 = arith.constant 0 : index
    %c0_209 = arith.constant 0 : index
    %347 = vector.load %arg16[%c7_207, %c0_208, %c0_209] : memref<16x8x8xf32, #tpu.memory_space<vmem>>, vector<1x8x8xf32>
    %348 = vector.shape_cast %347 : vector<1x8x8xf32> to vector<8x8xf32>
    %349 = vector.shape_cast %346 : vector<8x8xf32> to vector<1x8x8xf32>
    tpu.vector_store %arg16[%c7_207, %c0_208, %c0_209], %349 {strides = array<i32>} : memref<16x8x8xf32, #tpu.memory_space<vmem>>, vector<1x8x8xf32>,
    %c8 = arith.constant 8 : index
    %c0_210 = arith.constant 0 : index
    %c0_211 = arith.constant 0 : index
    %350 = vector.load %arg11[%c8, %c0_210, %c0_211] : memref<16x128x128xbf16, #tpu.memory_space<vmem>>, vector<1x128x128xbf16>
    %351 = vector.shape_cast %350 : vector<1x128x128xbf16> to vector<128x128xbf16>
    %cst_212 = arith.constant dense<0.000000e+00> : vector<8x128xf32>
    %352 = tpu.matmul %115, %351, %cst_212 {dimension_numbers = #tpu.dot_dimension_numbers<[1], [0], [0], [1], [0, 0, 1, 1], [], []>} : vector<8x128xbf16>, vector<128x128xbf16>, vector<8x128xf32> -> vector<8x128xf32>
    %c8_213 = arith.constant 8 : index
    %c0_214 = arith.constant 0 : index
    %c0_215 = arith.constant 0 : index
    %353 = vector.load %arg12[%c8_213, %c0_214, %c0_215] : memref<16x1x128xf32, #tpu.memory_space<vmem>>, vector<1x1x128xf32>
    %354 = vector.shape_cast %353 : vector<1x1x128xf32> to vector<1x128xf32>
    %355 = vector.broadcast %354 : vector<1x128xf32> to vector<8x128xf32>
    %356 = arith.addf %352, %355 : vector<8x128xf32>
    %cst_216 = arith.constant 0.000000e+00 : f32
    %357 = vector.broadcast %cst_216 : f32 to vector<8x128xf32>
    %358 = arith.subf %357, %356 : vector<8x128xf32>
    %359 = math.exp %358 : vector<8x128xf32>
    %cst_217 = arith.constant 1.000000e+00 : f32
    %360 = vector.broadcast %cst_217 : f32 to vector<8x128xf32>
    %361 = arith.addf %360, %359 : vector<8x128xf32>
    %362 = tpu.reciprocal %361 {approx = true} : vector<8x128xf32> -> vector<8x128xf32>
    %363 = arith.truncf %362 : vector<8x128xf32> to vector<8x128xbf16>
    %cst_218 = arith.constant dense<0.000000e+00> : vector<8x128xf32>
    %364 = tpu.matmul %363, %116, %cst_218 {dimension_numbers = #tpu.dot_dimension_numbers<[1], [0], [0], [1], [0, 0, 1, 1], [], []>} : vector<8x128xbf16>, vector<128x128xbf16>, vector<8x128xf32> -> vector<8x128xf32>
    %365 = vector.broadcast %117 : vector<1x128xf32> to vector<8x128xf32>
    %366 = arith.addf %364, %365 : vector<8x128xf32>
    %367 = vector.extract_strided_slice %366 {offsets = [0, 0], sizes = [8, 8], strides = [1, 1]} : vector<8x128xf32> to vector<8x8xf32>
    %cst_219 = arith.constant 0.000000e+00 : f32
    %368 = vector.broadcast %cst_219 : f32 to vector<8x8xf32>
    %369 = arith.maximumf %367, %368 : vector<8x8xf32>
    %cst_220 = arith.constant 0.000000e+00 : f32
    %370 = vector.broadcast %cst_220 : f32 to vector<8x8xf32>
    %371 = arith.subf %370, %369 : vector<8x8xf32>
    %372 = math.exp %371 : vector<8x8xf32>
    %cst_221 = arith.constant 1.000000e+00 : f32
    %373 = vector.broadcast %cst_221 : f32 to vector<8x8xf32>
    %374 = arith.addf %373, %372 : vector<8x8xf32>
    %375 = tpu.reciprocal %374 {approx = true} : vector<8x8xf32> -> vector<8x8xf32>
    %c8_222 = arith.constant 8 : index
    %c0_223 = arith.constant 0 : index
    %c0_224 = arith.constant 0 : index
    %376 = vector.load %arg16[%c8_222, %c0_223, %c0_224] : memref<16x8x8xf32, #tpu.memory_space<vmem>>, vector<1x8x8xf32>
    %377 = vector.shape_cast %376 : vector<1x8x8xf32> to vector<8x8xf32>
    %378 = vector.shape_cast %375 : vector<8x8xf32> to vector<1x8x8xf32>
    tpu.vector_store %arg16[%c8_222, %c0_223, %c0_224], %378 {strides = array<i32>} : memref<16x8x8xf32, #tpu.memory_space<vmem>>, vector<1x8x8xf32>,
    %c9 = arith.constant 9 : index
    %c0_225 = arith.constant 0 : index
    %c0_226 = arith.constant 0 : index
    %379 = vector.load %arg11[%c9, %c0_225, %c0_226] : memref<16x128x128xbf16, #tpu.memory_space<vmem>>, vector<1x128x128xbf16>
    %380 = vector.shape_cast %379 : vector<1x128x128xbf16> to vector<128x128xbf16>
    %cst_227 = arith.constant dense<0.000000e+00> : vector<8x128xf32>
    %381 = tpu.matmul %115, %380, %cst_227 {dimension_numbers = #tpu.dot_dimension_numbers<[1], [0], [0], [1], [0, 0, 1, 1], [], []>} : vector<8x128xbf16>, vector<128x128xbf16>, vector<8x128xf32> -> vector<8x128xf32>
    %c9_228 = arith.constant 9 : index
    %c0_229 = arith.constant 0 : index
    %c0_230 = arith.constant 0 : index
    %382 = vector.load %arg12[%c9_228, %c0_229, %c0_230] : memref<16x1x128xf32, #tpu.memory_space<vmem>>, vector<1x1x128xf32>
    %383 = vector.shape_cast %382 : vector<1x1x128xf32> to vector<1x128xf32>
    %384 = vector.broadcast %383 : vector<1x128xf32> to vector<8x128xf32>
    %385 = arith.addf %381, %384 : vector<8x128xf32>
    %cst_231 = arith.constant 0.000000e+00 : f32
    %386 = vector.broadcast %cst_231 : f32 to vector<8x128xf32>
    %387 = arith.subf %386, %385 : vector<8x128xf32>
    %388 = math.exp %387 : vector<8x128xf32>
    %cst_232 = arith.constant 1.000000e+00 : f32
    %389 = vector.broadcast %cst_232 : f32 to vector<8x128xf32>
    %390 = arith.addf %389, %388 : vector<8x128xf32>
    %391 = tpu.reciprocal %390 {approx = true} : vector<8x128xf32> -> vector<8x128xf32>
    %392 = arith.truncf %391 : vector<8x128xf32> to vector<8x128xbf16>
    %cst_233 = arith.constant dense<0.000000e+00> : vector<8x128xf32>
    %393 = tpu.matmul %392, %116, %cst_233 {dimension_numbers = #tpu.dot_dimension_numbers<[1], [0], [0], [1], [0, 0, 1, 1], [], []>} : vector<8x128xbf16>, vector<128x128xbf16>, vector<8x128xf32> -> vector<8x128xf32>
    %394 = vector.broadcast %117 : vector<1x128xf32> to vector<8x128xf32>
    %395 = arith.addf %393, %394 : vector<8x128xf32>
    %396 = vector.extract_strided_slice %395 {offsets = [0, 0], sizes = [8, 8], strides = [1, 1]} : vector<8x128xf32> to vector<8x8xf32>
    %cst_234 = arith.constant 0.000000e+00 : f32
    %397 = vector.broadcast %cst_234 : f32 to vector<8x8xf32>
    %398 = arith.maximumf %396, %397 : vector<8x8xf32>
    %cst_235 = arith.constant 0.000000e+00 : f32
    %399 = vector.broadcast %cst_235 : f32 to vector<8x8xf32>
    %400 = arith.subf %399, %398 : vector<8x8xf32>
    %401 = math.exp %400 : vector<8x8xf32>
    %cst_236 = arith.constant 1.000000e+00 : f32
    %402 = vector.broadcast %cst_236 : f32 to vector<8x8xf32>
    %403 = arith.addf %402, %401 : vector<8x8xf32>
    %404 = tpu.reciprocal %403 {approx = true} : vector<8x8xf32> -> vector<8x8xf32>
    %c9_237 = arith.constant 9 : index
    %c0_238 = arith.constant 0 : index
    %c0_239 = arith.constant 0 : index
    %405 = vector.load %arg16[%c9_237, %c0_238, %c0_239] : memref<16x8x8xf32, #tpu.memory_space<vmem>>, vector<1x8x8xf32>
    %406 = vector.shape_cast %405 : vector<1x8x8xf32> to vector<8x8xf32>
    %407 = vector.shape_cast %404 : vector<8x8xf32> to vector<1x8x8xf32>
    tpu.vector_store %arg16[%c9_237, %c0_238, %c0_239], %407 {strides = array<i32>} : memref<16x8x8xf32, #tpu.memory_space<vmem>>, vector<1x8x8xf32>,
    %c10 = arith.constant 10 : index
    %c0_240 = arith.constant 0 : index
    %c0_241 = arith.constant 0 : index
    %408 = vector.load %arg11[%c10, %c0_240, %c0_241] : memref<16x128x128xbf16, #tpu.memory_space<vmem>>, vector<1x128x128xbf16>
    %409 = vector.shape_cast %408 : vector<1x128x128xbf16> to vector<128x128xbf16>
    %cst_242 = arith.constant dense<0.000000e+00> : vector<8x128xf32>
    %410 = tpu.matmul %115, %409, %cst_242 {dimension_numbers = #tpu.dot_dimension_numbers<[1], [0], [0], [1], [0, 0, 1, 1], [], []>} : vector<8x128xbf16>, vector<128x128xbf16>, vector<8x128xf32> -> vector<8x128xf32>
    %c10_243 = arith.constant 10 : index
    %c0_244 = arith.constant 0 : index
    %c0_245 = arith.constant 0 : index
    %411 = vector.load %arg12[%c10_243, %c0_244, %c0_245] : memref<16x1x128xf32, #tpu.memory_space<vmem>>, vector<1x1x128xf32>
    %412 = vector.shape_cast %411 : vector<1x1x128xf32> to vector<1x128xf32>
    %413 = vector.broadcast %412 : vector<1x128xf32> to vector<8x128xf32>
    %414 = arith.addf %410, %413 : vector<8x128xf32>
    %cst_246 = arith.constant 0.000000e+00 : f32
    %415 = vector.broadcast %cst_246 : f32 to vector<8x128xf32>
    %416 = arith.subf %415, %414 : vector<8x128xf32>
    %417 = math.exp %416 : vector<8x128xf32>
    %cst_247 = arith.constant 1.000000e+00 : f32
    %418 = vector.broadcast %cst_247 : f32 to vector<8x128xf32>
    %419 = arith.addf %418, %417 : vector<8x128xf32>
    %420 = tpu.reciprocal %419 {approx = true} : vector<8x128xf32> -> vector<8x128xf32>
    %421 = arith.truncf %420 : vector<8x128xf32> to vector<8x128xbf16>
    %cst_248 = arith.constant dense<0.000000e+00> : vector<8x128xf32>
    %422 = tpu.matmul %421, %116, %cst_248 {dimension_numbers = #tpu.dot_dimension_numbers<[1], [0], [0], [1], [0, 0, 1, 1], [], []>} : vector<8x128xbf16>, vector<128x128xbf16>, vector<8x128xf32> -> vector<8x128xf32>
    %423 = vector.broadcast %117 : vector<1x128xf32> to vector<8x128xf32>
    %424 = arith.addf %422, %423 : vector<8x128xf32>
    %425 = vector.extract_strided_slice %424 {offsets = [0, 0], sizes = [8, 8], strides = [1, 1]} : vector<8x128xf32> to vector<8x8xf32>
    %cst_249 = arith.constant 0.000000e+00 : f32
    %426 = vector.broadcast %cst_249 : f32 to vector<8x8xf32>
    %427 = arith.maximumf %425, %426 : vector<8x8xf32>
    %cst_250 = arith.constant 0.000000e+00 : f32
    %428 = vector.broadcast %cst_250 : f32 to vector<8x8xf32>
    %429 = arith.subf %428, %427 : vector<8x8xf32>
    %430 = math.exp %429 : vector<8x8xf32>
    %cst_251 = arith.constant 1.000000e+00 : f32
    %431 = vector.broadcast %cst_251 : f32 to vector<8x8xf32>
    %432 = arith.addf %431, %430 : vector<8x8xf32>
    %433 = tpu.reciprocal %432 {approx = true} : vector<8x8xf32> -> vector<8x8xf32>
    %c10_252 = arith.constant 10 : index
    %c0_253 = arith.constant 0 : index
    %c0_254 = arith.constant 0 : index
    %434 = vector.load %arg16[%c10_252, %c0_253, %c0_254] : memref<16x8x8xf32, #tpu.memory_space<vmem>>, vector<1x8x8xf32>
    %435 = vector.shape_cast %434 : vector<1x8x8xf32> to vector<8x8xf32>
    %436 = vector.shape_cast %433 : vector<8x8xf32> to vector<1x8x8xf32>
    tpu.vector_store %arg16[%c10_252, %c0_253, %c0_254], %436 {strides = array<i32>} : memref<16x8x8xf32, #tpu.memory_space<vmem>>, vector<1x8x8xf32>,
    %c11 = arith.constant 11 : index
    %c0_255 = arith.constant 0 : index
    %c0_256 = arith.constant 0 : index
    %437 = vector.load %arg11[%c11, %c0_255, %c0_256] : memref<16x128x128xbf16, #tpu.memory_space<vmem>>, vector<1x128x128xbf16>
    %438 = vector.shape_cast %437 : vector<1x128x128xbf16> to vector<128x128xbf16>
    %cst_257 = arith.constant dense<0.000000e+00> : vector<8x128xf32>
    %439 = tpu.matmul %115, %438, %cst_257 {dimension_numbers = #tpu.dot_dimension_numbers<[1], [0], [0], [1], [0, 0, 1, 1], [], []>} : vector<8x128xbf16>, vector<128x128xbf16>, vector<8x128xf32> -> vector<8x128xf32>
    %c11_258 = arith.constant 11 : index
    %c0_259 = arith.constant 0 : index
    %c0_260 = arith.constant 0 : index
    %440 = vector.load %arg12[%c11_258, %c0_259, %c0_260] : memref<16x1x128xf32, #tpu.memory_space<vmem>>, vector<1x1x128xf32>
    %441 = vector.shape_cast %440 : vector<1x1x128xf32> to vector<1x128xf32>
    %442 = vector.broadcast %441 : vector<1x128xf32> to vector<8x128xf32>
    %443 = arith.addf %439, %442 : vector<8x128xf32>
    %cst_261 = arith.constant 0.000000e+00 : f32
    %444 = vector.broadcast %cst_261 : f32 to vector<8x128xf32>
    %445 = arith.subf %444, %443 : vector<8x128xf32>
    %446 = math.exp %445 : vector<8x128xf32>
    %cst_262 = arith.constant 1.000000e+00 : f32
    %447 = vector.broadcast %cst_262 : f32 to vector<8x128xf32>
    %448 = arith.addf %447, %446 : vector<8x128xf32>
    %449 = tpu.reciprocal %448 {approx = true} : vector<8x128xf32> -> vector<8x128xf32>
    %450 = arith.truncf %449 : vector<8x128xf32> to vector<8x128xbf16>
    %cst_263 = arith.constant dense<0.000000e+00> : vector<8x128xf32>
    %451 = tpu.matmul %450, %116, %cst_263 {dimension_numbers = #tpu.dot_dimension_numbers<[1], [0], [0], [1], [0, 0, 1, 1], [], []>} : vector<8x128xbf16>, vector<128x128xbf16>, vector<8x128xf32> -> vector<8x128xf32>
    %452 = vector.broadcast %117 : vector<1x128xf32> to vector<8x128xf32>
    %453 = arith.addf %451, %452 : vector<8x128xf32>
    %454 = vector.extract_strided_slice %453 {offsets = [0, 0], sizes = [8, 8], strides = [1, 1]} : vector<8x128xf32> to vector<8x8xf32>
    %cst_264 = arith.constant 0.000000e+00 : f32
    %455 = vector.broadcast %cst_264 : f32 to vector<8x8xf32>
    %456 = arith.maximumf %454, %455 : vector<8x8xf32>
    %cst_265 = arith.constant 0.000000e+00 : f32
    %457 = vector.broadcast %cst_265 : f32 to vector<8x8xf32>
    %458 = arith.subf %457, %456 : vector<8x8xf32>
    %459 = math.exp %458 : vector<8x8xf32>
    %cst_266 = arith.constant 1.000000e+00 : f32
    %460 = vector.broadcast %cst_266 : f32 to vector<8x8xf32>
    %461 = arith.addf %460, %459 : vector<8x8xf32>
    %462 = tpu.reciprocal %461 {approx = true} : vector<8x8xf32> -> vector<8x8xf32>
    %c11_267 = arith.constant 11 : index
    %c0_268 = arith.constant 0 : index
    %c0_269 = arith.constant 0 : index
    %463 = vector.load %arg16[%c11_267, %c0_268, %c0_269] : memref<16x8x8xf32, #tpu.memory_space<vmem>>, vector<1x8x8xf32>
    %464 = vector.shape_cast %463 : vector<1x8x8xf32> to vector<8x8xf32>
    %465 = vector.shape_cast %462 : vector<8x8xf32> to vector<1x8x8xf32>
    tpu.vector_store %arg16[%c11_267, %c0_268, %c0_269], %465 {strides = array<i32>} : memref<16x8x8xf32, #tpu.memory_space<vmem>>, vector<1x8x8xf32>,
    %c12 = arith.constant 12 : index
    %c0_270 = arith.constant 0 : index
    %c0_271 = arith.constant 0 : index
    %466 = vector.load %arg11[%c12, %c0_270, %c0_271] : memref<16x128x128xbf16, #tpu.memory_space<vmem>>, vector<1x128x128xbf16>
    %467 = vector.shape_cast %466 : vector<1x128x128xbf16> to vector<128x128xbf16>
    %cst_272 = arith.constant dense<0.000000e+00> : vector<8x128xf32>
    %468 = tpu.matmul %115, %467, %cst_272 {dimension_numbers = #tpu.dot_dimension_numbers<[1], [0], [0], [1], [0, 0, 1, 1], [], []>} : vector<8x128xbf16>, vector<128x128xbf16>, vector<8x128xf32> -> vector<8x128xf32>
    %c12_273 = arith.constant 12 : index
    %c0_274 = arith.constant 0 : index
    %c0_275 = arith.constant 0 : index
    %469 = vector.load %arg12[%c12_273, %c0_274, %c0_275] : memref<16x1x128xf32, #tpu.memory_space<vmem>>, vector<1x1x128xf32>
    %470 = vector.shape_cast %469 : vector<1x1x128xf32> to vector<1x128xf32>
    %471 = vector.broadcast %470 : vector<1x128xf32> to vector<8x128xf32>
    %472 = arith.addf %468, %471 : vector<8x128xf32>
    %cst_276 = arith.constant 0.000000e+00 : f32
    %473 = vector.broadcast %cst_276 : f32 to vector<8x128xf32>
    %474 = arith.subf %473, %472 : vector<8x128xf32>
    %475 = math.exp %474 : vector<8x128xf32>
    %cst_277 = arith.constant 1.000000e+00 : f32
    %476 = vector.broadcast %cst_277 : f32 to vector<8x128xf32>
    %477 = arith.addf %476, %475 : vector<8x128xf32>
    %478 = tpu.reciprocal %477 {approx = true} : vector<8x128xf32> -> vector<8x128xf32>
    %479 = arith.truncf %478 : vector<8x128xf32> to vector<8x128xbf16>
    %cst_278 = arith.constant dense<0.000000e+00> : vector<8x128xf32>
    %480 = tpu.matmul %479, %116, %cst_278 {dimension_numbers = #tpu.dot_dimension_numbers<[1], [0], [0], [1], [0, 0, 1, 1], [], []>} : vector<8x128xbf16>, vector<128x128xbf16>, vector<8x128xf32> -> vector<8x128xf32>
    %481 = vector.broadcast %117 : vector<1x128xf32> to vector<8x128xf32>
    %482 = arith.addf %480, %481 : vector<8x128xf32>
    %483 = vector.extract_strided_slice %482 {offsets = [0, 0], sizes = [8, 8], strides = [1, 1]} : vector<8x128xf32> to vector<8x8xf32>
    %cst_279 = arith.constant 0.000000e+00 : f32
    %484 = vector.broadcast %cst_279 : f32 to vector<8x8xf32>
    %485 = arith.maximumf %483, %484 : vector<8x8xf32>
    %cst_280 = arith.constant 0.000000e+00 : f32
    %486 = vector.broadcast %cst_280 : f32 to vector<8x8xf32>
    %487 = arith.subf %486, %485 : vector<8x8xf32>
    %488 = math.exp %487 : vector<8x8xf32>
    %cst_281 = arith.constant 1.000000e+00 : f32
    %489 = vector.broadcast %cst_281 : f32 to vector<8x8xf32>
    %490 = arith.addf %489, %488 : vector<8x8xf32>
    %491 = tpu.reciprocal %490 {approx = true} : vector<8x8xf32> -> vector<8x8xf32>
    %c12_282 = arith.constant 12 : index
    %c0_283 = arith.constant 0 : index
    %c0_284 = arith.constant 0 : index
    %492 = vector.load %arg16[%c12_282, %c0_283, %c0_284] : memref<16x8x8xf32, #tpu.memory_space<vmem>>, vector<1x8x8xf32>
    %493 = vector.shape_cast %492 : vector<1x8x8xf32> to vector<8x8xf32>
    %494 = vector.shape_cast %491 : vector<8x8xf32> to vector<1x8x8xf32>
    tpu.vector_store %arg16[%c12_282, %c0_283, %c0_284], %494 {strides = array<i32>} : memref<16x8x8xf32, #tpu.memory_space<vmem>>, vector<1x8x8xf32>,
    %c13 = arith.constant 13 : index
    %c0_285 = arith.constant 0 : index
    %c0_286 = arith.constant 0 : index
    %495 = vector.load %arg11[%c13, %c0_285, %c0_286] : memref<16x128x128xbf16, #tpu.memory_space<vmem>>, vector<1x128x128xbf16>
    %496 = vector.shape_cast %495 : vector<1x128x128xbf16> to vector<128x128xbf16>
    %cst_287 = arith.constant dense<0.000000e+00> : vector<8x128xf32>
    %497 = tpu.matmul %115, %496, %cst_287 {dimension_numbers = #tpu.dot_dimension_numbers<[1], [0], [0], [1], [0, 0, 1, 1], [], []>} : vector<8x128xbf16>, vector<128x128xbf16>, vector<8x128xf32> -> vector<8x128xf32>
    %c13_288 = arith.constant 13 : index
    %c0_289 = arith.constant 0 : index
    %c0_290 = arith.constant 0 : index
    %498 = vector.load %arg12[%c13_288, %c0_289, %c0_290] : memref<16x1x128xf32, #tpu.memory_space<vmem>>, vector<1x1x128xf32>
    %499 = vector.shape_cast %498 : vector<1x1x128xf32> to vector<1x128xf32>
    %500 = vector.broadcast %499 : vector<1x128xf32> to vector<8x128xf32>
    %501 = arith.addf %497, %500 : vector<8x128xf32>
    %cst_291 = arith.constant 0.000000e+00 : f32
    %502 = vector.broadcast %cst_291 : f32 to vector<8x128xf32>
    %503 = arith.subf %502, %501 : vector<8x128xf32>
    %504 = math.exp %503 : vector<8x128xf32>
    %cst_292 = arith.constant 1.000000e+00 : f32
    %505 = vector.broadcast %cst_292 : f32 to vector<8x128xf32>
    %506 = arith.addf %505, %504 : vector<8x128xf32>
    %507 = tpu.reciprocal %506 {approx = true} : vector<8x128xf32> -> vector<8x128xf32>
    %508 = arith.truncf %507 : vector<8x128xf32> to vector<8x128xbf16>
    %cst_293 = arith.constant dense<0.000000e+00> : vector<8x128xf32>
    %509 = tpu.matmul %508, %116, %cst_293 {dimension_numbers = #tpu.dot_dimension_numbers<[1], [0], [0], [1], [0, 0, 1, 1], [], []>} : vector<8x128xbf16>, vector<128x128xbf16>, vector<8x128xf32> -> vector<8x128xf32>
    %510 = vector.broadcast %117 : vector<1x128xf32> to vector<8x128xf32>
    %511 = arith.addf %509, %510 : vector<8x128xf32>
    %512 = vector.extract_strided_slice %511 {offsets = [0, 0], sizes = [8, 8], strides = [1, 1]} : vector<8x128xf32> to vector<8x8xf32>
    %cst_294 = arith.constant 0.000000e+00 : f32
    %513 = vector.broadcast %cst_294 : f32 to vector<8x8xf32>
    %514 = arith.maximumf %512, %513 : vector<8x8xf32>
    %cst_295 = arith.constant 0.000000e+00 : f32
    %515 = vector.broadcast %cst_295 : f32 to vector<8x8xf32>
    %516 = arith.subf %515, %514 : vector<8x8xf32>
    %517 = math.exp %516 : vector<8x8xf32>
    %cst_296 = arith.constant 1.000000e+00 : f32
    %518 = vector.broadcast %cst_296 : f32 to vector<8x8xf32>
    %519 = arith.addf %518, %517 : vector<8x8xf32>
    %520 = tpu.reciprocal %519 {approx = true} : vector<8x8xf32> -> vector<8x8xf32>
    %c13_297 = arith.constant 13 : index
    %c0_298 = arith.constant 0 : index
    %c0_299 = arith.constant 0 : index
    %521 = vector.load %arg16[%c13_297, %c0_298, %c0_299] : memref<16x8x8xf32, #tpu.memory_space<vmem>>, vector<1x8x8xf32>
    %522 = vector.shape_cast %521 : vector<1x8x8xf32> to vector<8x8xf32>
    %523 = vector.shape_cast %520 : vector<8x8xf32> to vector<1x8x8xf32>
    tpu.vector_store %arg16[%c13_297, %c0_298, %c0_299], %523 {strides = array<i32>} : memref<16x8x8xf32, #tpu.memory_space<vmem>>, vector<1x8x8xf32>,
    %c14 = arith.constant 14 : index
    %c0_300 = arith.constant 0 : index
    %c0_301 = arith.constant 0 : index
    %524 = vector.load %arg11[%c14, %c0_300, %c0_301] : memref<16x128x128xbf16, #tpu.memory_space<vmem>>, vector<1x128x128xbf16>
    %525 = vector.shape_cast %524 : vector<1x128x128xbf16> to vector<128x128xbf16>
    %cst_302 = arith.constant dense<0.000000e+00> : vector<8x128xf32>
    %526 = tpu.matmul %115, %525, %cst_302 {dimension_numbers = #tpu.dot_dimension_numbers<[1], [0], [0], [1], [0, 0, 1, 1], [], []>} : vector<8x128xbf16>, vector<128x128xbf16>, vector<8x128xf32> -> vector<8x128xf32>
    %c14_303 = arith.constant 14 : index
    %c0_304 = arith.constant 0 : index
    %c0_305 = arith.constant 0 : index
    %527 = vector.load %arg12[%c14_303, %c0_304, %c0_305] : memref<16x1x128xf32, #tpu.memory_space<vmem>>, vector<1x1x128xf32>
    %528 = vector.shape_cast %527 : vector<1x1x128xf32> to vector<1x128xf32>
    %529 = vector.broadcast %528 : vector<1x128xf32> to vector<8x128xf32>
    %530 = arith.addf %526, %529 : vector<8x128xf32>
    %cst_306 = arith.constant 0.000000e+00 : f32
    %531 = vector.broadcast %cst_306 : f32 to vector<8x128xf32>
    %532 = arith.subf %531, %530 : vector<8x128xf32>
    %533 = math.exp %532 : vector<8x128xf32>
    %cst_307 = arith.constant 1.000000e+00 : f32
    %534 = vector.broadcast %cst_307 : f32 to vector<8x128xf32>
    %535 = arith.addf %534, %533 : vector<8x128xf32>
    %536 = tpu.reciprocal %535 {approx = true} : vector<8x128xf32> -> vector<8x128xf32>
    %537 = arith.truncf %536 : vector<8x128xf32> to vector<8x128xbf16>
    %cst_308 = arith.constant dense<0.000000e+00> : vector<8x128xf32>
    %538 = tpu.matmul %537, %116, %cst_308 {dimension_numbers = #tpu.dot_dimension_numbers<[1], [0], [0], [1], [0, 0, 1, 1], [], []>} : vector<8x128xbf16>, vector<128x128xbf16>, vector<8x128xf32> -> vector<8x128xf32>
    %539 = vector.broadcast %117 : vector<1x128xf32> to vector<8x128xf32>
    %540 = arith.addf %538, %539 : vector<8x128xf32>
    %541 = vector.extract_strided_slice %540 {offsets = [0, 0], sizes = [8, 8], strides = [1, 1]} : vector<8x128xf32> to vector<8x8xf32>
    %cst_309 = arith.constant 0.000000e+00 : f32
    %542 = vector.broadcast %cst_309 : f32 to vector<8x8xf32>
    %543 = arith.maximumf %541, %542 : vector<8x8xf32>
    %cst_310 = arith.constant 0.000000e+00 : f32
    %544 = vector.broadcast %cst_310 : f32 to vector<8x8xf32>
    %545 = arith.subf %544, %543 : vector<8x8xf32>
    %546 = math.exp %545 : vector<8x8xf32>
    %cst_311 = arith.constant 1.000000e+00 : f32
    %547 = vector.broadcast %cst_311 : f32 to vector<8x8xf32>
    %548 = arith.addf %547, %546 : vector<8x8xf32>
    %549 = tpu.reciprocal %548 {approx = true} : vector<8x8xf32> -> vector<8x8xf32>
    %c14_312 = arith.constant 14 : index
    %c0_313 = arith.constant 0 : index
    %c0_314 = arith.constant 0 : index
    %550 = vector.load %arg16[%c14_312, %c0_313, %c0_314] : memref<16x8x8xf32, #tpu.memory_space<vmem>>, vector<1x8x8xf32>
    %551 = vector.shape_cast %550 : vector<1x8x8xf32> to vector<8x8xf32>
    %552 = vector.shape_cast %549 : vector<8x8xf32> to vector<1x8x8xf32>
    tpu.vector_store %arg16[%c14_312, %c0_313, %c0_314], %552 {strides = array<i32>} : memref<16x8x8xf32, #tpu.memory_space<vmem>>, vector<1x8x8xf32>,
    %c15 = arith.constant 15 : index
    %c0_315 = arith.constant 0 : index
    %c0_316 = arith.constant 0 : index
    %553 = vector.load %arg11[%c15, %c0_315, %c0_316] : memref<16x128x128xbf16, #tpu.memory_space<vmem>>, vector<1x128x128xbf16>
    %554 = vector.shape_cast %553 : vector<1x128x128xbf16> to vector<128x128xbf16>
    %cst_317 = arith.constant dense<0.000000e+00> : vector<8x128xf32>
    %555 = tpu.matmul %115, %554, %cst_317 {dimension_numbers = #tpu.dot_dimension_numbers<[1], [0], [0], [1], [0, 0, 1, 1], [], []>} : vector<8x128xbf16>, vector<128x128xbf16>, vector<8x128xf32> -> vector<8x128xf32>
    %c15_318 = arith.constant 15 : index
    %c0_319 = arith.constant 0 : index
    %c0_320 = arith.constant 0 : index
    %556 = vector.load %arg12[%c15_318, %c0_319, %c0_320] : memref<16x1x128xf32, #tpu.memory_space<vmem>>, vector<1x1x128xf32>
    %557 = vector.shape_cast %556 : vector<1x1x128xf32> to vector<1x128xf32>
    %558 = vector.broadcast %557 : vector<1x128xf32> to vector<8x128xf32>
    %559 = arith.addf %555, %558 : vector<8x128xf32>
    %cst_321 = arith.constant 0.000000e+00 : f32
    %560 = vector.broadcast %cst_321 : f32 to vector<8x128xf32>
    %561 = arith.subf %560, %559 : vector<8x128xf32>
    %562 = math.exp %561 : vector<8x128xf32>
    %cst_322 = arith.constant 1.000000e+00 : f32
    %563 = vector.broadcast %cst_322 : f32 to vector<8x128xf32>
    %564 = arith.addf %563, %562 : vector<8x128xf32>
    %565 = tpu.reciprocal %564 {approx = true} : vector<8x128xf32> -> vector<8x128xf32>
    %566 = arith.truncf %565 : vector<8x128xf32> to vector<8x128xbf16>
    %cst_323 = arith.constant dense<0.000000e+00> : vector<8x128xf32>
    %567 = tpu.matmul %566, %116, %cst_323 {dimension_numbers = #tpu.dot_dimension_numbers<[1], [0], [0], [1], [0, 0, 1, 1], [], []>} : vector<8x128xbf16>, vector<128x128xbf16>, vector<8x128xf32> -> vector<8x128xf32>
    %568 = vector.broadcast %117 : vector<1x128xf32> to vector<8x128xf32>
    %569 = arith.addf %567, %568 : vector<8x128xf32>
    %570 = vector.extract_strided_slice %569 {offsets = [0, 0], sizes = [8, 8], strides = [1, 1]} : vector<8x128xf32> to vector<8x8xf32>
    %cst_324 = arith.constant 0.000000e+00 : f32
    %571 = vector.broadcast %cst_324 : f32 to vector<8x8xf32>
    %572 = arith.maximumf %570, %571 : vector<8x8xf32>
    %cst_325 = arith.constant 0.000000e+00 : f32
    %573 = vector.broadcast %cst_325 : f32 to vector<8x8xf32>
    %574 = arith.subf %573, %572 : vector<8x8xf32>
    %575 = math.exp %574 : vector<8x8xf32>
    %cst_326 = arith.constant 1.000000e+00 : f32
    %576 = vector.broadcast %cst_326 : f32 to vector<8x8xf32>
    %577 = arith.addf %576, %575 : vector<8x8xf32>
    %578 = tpu.reciprocal %577 {approx = true} : vector<8x8xf32> -> vector<8x8xf32>
    %c15_327 = arith.constant 15 : index
    %c0_328 = arith.constant 0 : index
    %c0_329 = arith.constant 0 : index
    %579 = vector.load %arg16[%c15_327, %c0_328, %c0_329] : memref<16x8x8xf32, #tpu.memory_space<vmem>>, vector<1x8x8xf32>
    %580 = vector.shape_cast %579 : vector<1x8x8xf32> to vector<8x8xf32>
    %581 = vector.shape_cast %578 : vector<8x8xf32> to vector<1x8x8xf32>
    tpu.vector_store %arg16[%c15_327, %c0_328, %c0_329], %581 {strides = array<i32>} : memref<16x8x8xf32, #tpu.memory_space<vmem>>, vector<1x8x8xf32>,
    return
  }
  func.func @transform_0(%arg0: i32) -> (i32, i32, i32) {
    %c0_i32 = arith.constant 0 : i32
    %c0_i32_0 = arith.constant 0 : i32
    %c0_i32_1 = arith.constant 0 : i32
    return %c0_i32, %arg0, %c0_i32_0 : i32, i32, i32
  }
  func.func @transform_1(%arg0: i32) -> (i32, i32) {
    %c0_i32 = arith.constant 0 : i32
    %c0_i32_0 = arith.constant 0 : i32
    return %arg0, %c0_i32 : i32, i32
  }
  func.func @transform_2(%arg0: i32) -> (i32, i32) {
    %c0_i32 = arith.constant 0 : i32
    %c0_i32_0 = arith.constant 0 : i32
    %c0_i32_1 = arith.constant 0 : i32
    return %c0_i32, %c0_i32_0 : i32, i32
  }
  func.func @transform_3(%arg0: i32) -> (i32, i32) {
    %c0_i32 = arith.constant 0 : i32
    %c0_i32_0 = arith.constant 0 : i32
    %c0_i32_1 = arith.constant 0 : i32
    return %c0_i32, %c0_i32_0 : i32, i32
  }
  func.func @transform_4(%arg0: i32) -> (i32, i32, i32) {
    %c0_i32 = arith.constant 0 : i32
    %c0_i32_0 = arith.constant 0 : i32
    %c0_i32_1 = arith.constant 0 : i32
    %c0_i32_2 = arith.constant 0 : i32
    return %c0_i32, %c0_i32_0, %c0_i32_1 : i32, i32, i32
  }
  func.func @transform_5(%arg0: i32) -> (i32, i32) {
    %c0_i32 = arith.constant 0 : i32
    %c0_i32_0 = arith.constant 0 : i32
    %c0_i32_1 = arith.constant 0 : i32
    return %c0_i32, %c0_i32_0 : i32, i32
  }
  func.func @transform_6(%arg0: i32) -> (i32, i32) {
    %c0_i32 = arith.constant 0 : i32
    %c0_i32_0 = arith.constant 0 : i32
    %c0_i32_1 = arith.constant 0 : i32
    return %c0_i32, %c0_i32_0 : i32, i32
  }
  func.func @transform_7(%arg0: i32) -> (i32, i32) {
    %c0_i32 = arith.constant 0 : i32
    %c0_i32_0 = arith.constant 0 : i32
    %c0_i32_1 = arith.constant 0 : i32
    return %c0_i32, %c0_i32_0 : i32, i32
  }
  func.func @transform_8(%arg0: i32) -> (i32, i32) {
    %c0_i32 = arith.constant 0 : i32
    %c0_i32_0 = arith.constant 0 : i32
    %c0_i32_1 = arith.constant 0 : i32
    return %c0_i32, %c0_i32_0 : i32, i32
  }
  func.func @transform_9(%arg0: i32) -> (i32, i32) {
    %c0_i32 = arith.constant 0 : i32
    %c0_i32_0 = arith.constant 0 : i32
    %c0_i32_1 = arith.constant 0 : i32
    return %c0_i32, %c0_i32_0 : i32, i32
  }
  func.func @transform_10(%arg0: i32) -> (i32, i32, i32) {
    %c0_i32 = arith.constant 0 : i32
    %c0_i32_0 = arith.constant 0 : i32
    %c0_i32_1 = arith.constant 0 : i32
    %c0_i32_2 = arith.constant 0 : i32
    return %c0_i32, %c0_i32_0, %c0_i32_1 : i32, i32, i32
  }
  func.func @transform_11(%arg0: i32) -> (i32, i32, i32) {
    %c0_i32 = arith.constant 0 : i32
    %c0_i32_0 = arith.constant 0 : i32
    %c0_i32_1 = arith.constant 0 : i32
    %c0_i32_2 = arith.constant 0 : i32
    return %c0_i32, %c0_i32_0, %c0_i32_1 : i32, i32, i32
  }
  func.func @transform_12(%arg0: i32) -> (i32, i32) {
    %c0_i32 = arith.constant 0 : i32
    %c0_i32_0 = arith.constant 0 : i32
    %c0_i32_1 = arith.constant 0 : i32
    return %c0_i32, %c0_i32_0 : i32, i32
  }
  func.func @transform_13(%arg0: i32) -> (i32, i32) {
    %c0_i32 = arith.constant 0 : i32
    %c0_i32_0 = arith.constant 0 : i32
    %c0_i32_1 = arith.constant 0 : i32
    return %c0_i32, %c0_i32_0 : i32, i32
  }
  func.func @transform_14(%arg0: i32) -> (i32, i32) {
    %c0_i32 = arith.constant 0 : i32
    %c0_i32_0 = arith.constant 0 : i32
    return %arg0, %c0_i32 : i32, i32
  }
  func.func @transform_15(%arg0: i32) -> (i32, i32, i32) {
    %c0_i32 = arith.constant 0 : i32
    %c0_i32_0 = arith.constant 0 : i32
    %c0_i32_1 = arith.constant 0 : i32
    return %c0_i32, %arg0, %c0_i32_0 : i32, i32, i32
  }
}

</mosaic_0001>

<llo_original>
// kernel: cnn_autoencoder_forward.1
$region0: #{cnn_autoencoder_forward.1}
  #allocation0 [shape = 'u32[]', space=smem, size = 0x4, offset = 0x4, fixed_abs, tag = 'smem constant byte address 0x4 - core index']
  #allocation1 [shape = 'u32[72,128]{1,0:T(1,128)}', space=vmem, size = 0x9000, scoped, tag = 'internal scratch']
  %s0 = inlined_call_operand.vmem [shape: bf16[7,8,64], index: 0, kind: input, shape index: {}]
  %s1 = inlined_call_operand.vmem [shape: f32[8,128], index: 1, kind: input, shape index: {}]
  %s2 = inlined_call_operand.hbm [shape: bf16[64,128], index: 2, kind: input, shape index: {}]
  %s3 = inlined_call_operand.vmem [shape: f32[1,128], index: 3, kind: input, shape index: {}]
  %s4 = inlined_call_operand.vmem [shape: bf16[7,128,128], index: 4, kind: input, shape index: {}]
  %s5 = inlined_call_operand.vmem [shape: f32[1,128], index: 5, kind: input, shape index: {}]
  %s6 = inlined_call_operand.vmem [shape: bf16[128,256], index: 6, kind: input, shape index: {}]
  %s7 = inlined_call_operand.vmem [shape: f32[1,256], index: 7, kind: input, shape index: {}]
  %s8 = inlined_call_operand.hbm [shape: bf16[128,128], index: 8, kind: input, shape index: {}]
  %s9 = inlined_call_operand.vmem [shape: f32[1,128], index: 9, kind: input, shape index: {}]
  %s10 = inlined_call_operand.hbm [shape: bf16[16,128,128], index: 10, kind: input, shape index: {}]
  %s11 = inlined_call_operand.hbm [shape: f32[16,1,128], index: 11, kind: input, shape index: {}]
  %s12 = inlined_call_operand.hbm [shape: bf16[128,128], index: 12, kind: input, shape index: {}]
  %s13 = inlined_call_operand.vmem [shape: f32[1,128], index: 13, kind: input, shape index: {}]
  %s14 = inlined_call_operand.vmem [shape: f32[8,256], index: 14, kind: output, shape index: {0}]
  %s15 = inlined_call_operand.vmem [shape: f32[16,8,8], index: 15, kind: output, shape index: {1}]
  %16 = xla_tuple %s14, %s15
  %s17 = sld [smem:[#allocation0]]
  $region94: #{cnn_autoencoder_forward.1} parent=0
    _
  %s19 = ssub.s32 1, %s17
  %s20 = scalar_select 0, %s19, %s17
  $region1: #{cnn_autoencoder_forward.1} parent=0
    #allocation2 [shape = 'u8[16384]{0}', space=vmem, size = 0x4000, scoped, tag = 'input window, operand 2, single buffered']
    #allocation3 [shape = 's32[1]{0}', space=sflag, size = 0x4, scoped, tag = 'scoped memory for cnn_autoencoder_forward.1']
    #allocation4 [shape = 'u8[32768]{0}', space=vmem, size = 0x8000, scoped, tag = 'input window, operand 8, single buffered']
    #allocation5 [shape = 's32[1]{0}', space=sflag, size = 0x4, scoped, tag = 'scoped memory for cnn_autoencoder_forward.1']
    #allocation6 [shape = 'u8[524288]{0}', space=vmem, size = 0x80000, scoped, tag = 'input window, operand 10, single buffered']
    #allocation7 [shape = 'u8[8192]{0}', space=vmem, size = 0x2000, scoped, tag = 'input window, operand 11, single buffered']
    #allocation8 [shape = 's32[1]{0}', space=sflag, size = 0x4, scoped, tag = 'scoped memory for cnn_autoencoder_forward.1']
    #allocation9 [shape = 'u8[32768]{0}', space=vmem, size = 0x8000, scoped, tag = 'input window, operand 12, single buffered']
    %21 = vsyncpa [#allocation3], 0
    %22 = vsyncpa [#allocation5], 0
    %23 = vsyncpa [#allocation8], 0
    // Predicated region
    $region2: #{cnn_autoencoder_forward.1} parent=1 // pred_check
      _
    $region3: #{cnn_autoencoder_forward.1} parent=1 // pred_check_branch
      %25 = sbr.rel (0) target = $region5
    $region4: #{cnn_autoencoder_forward.1} parent=1 // pred_region
      _
    $region5: #{cnn_autoencoder_forward.1} parent=1 // pred_fallthru
      _
    // Predicated region
    $region6: #{cnn_autoencoder_forward.1} parent=1 // pred_check
      _
    $region7: #{cnn_autoencoder_forward.1} parent=1 // pred_check_branch
      %27 = sbr.rel (0) target = $region9
    $region8: #{cnn_autoencoder_forward.1} parent=1 // pred_region
      _
    $region9: #{cnn_autoencoder_forward.1} parent=1 // pred_fallthru
      _
    // Predicated region
    $region10: #{cnn_autoencoder_forward.1} parent=1 // pred_check
      _
    $region11: #{cnn_autoencoder_forward.1} parent=1 // pred_check_branch
      %29 = sbr.rel (0) target = $region13
    $region12: #{cnn_autoencoder_forward.1} parent=1 // pred_region
      %31 = vsyncadd [#allocation3], 0
      %s32 = sshll.u32 %s2, 4
      %s33 = int_to_ptr.hbm [resolvable:$true] %s32
      %s34 = sshll.u32 [#allocation2], 4
      %s35 = int_to_ptr.vmem [resolvable:$true] %s34
      %40 = dma.hbm_to_vmem [thread:$0]  %s33, 512, %s35, [#allocation3], 64, 64, 4
    $region13: #{cnn_autoencoder_forward.1} parent=1 // pred_fallthru
      _
    // Predicated region
    $region14: #{cnn_autoencoder_forward.1} parent=1 // pred_check
      _
    $region15: #{cnn_autoencoder_forward.1} parent=1 // pred_check_branch
      %42 = sbr.rel (0) target = $region17
    $region16: #{cnn_autoencoder_forward.1} parent=1 // pred_region
      _
    $region17: #{cnn_autoencoder_forward.1} parent=1 // pred_fallthru
      _
    // Predicated region
    $region18: #{cnn_autoencoder_forward.1} parent=1 // pred_check
      _
    $region19: #{cnn_autoencoder_forward.1} parent=1 // pred_check_branch
      %44 = sbr.rel (0) target = $region21
    $region20: #{cnn_autoencoder_forward.1} parent=1 // pred_region
      _
    $region21: #{cnn_autoencoder_forward.1} parent=1 // pred_fallthru
      _
    // Predicated region
    $region22: #{cnn_autoencoder_forward.1} parent=1 // pred_check
      _
    $region23: #{cnn_autoencoder_forward.1} parent=1 // pred_check_branch
      %46 = sbr.rel (0) target = $region25
    $region24: #{cnn_autoencoder_forward.1} parent=1 // pred_region
      _
    $region25: #{cnn_autoencoder_forward.1} parent=1 // pred_fallthru
      _
    // Predicated region
    $region26: #{cnn_autoencoder_forward.1} parent=1 // pred_check
      _
    $region27: #{cnn_autoencoder_forward.1} parent=1 // pred_check_branch
      %48 = sbr.rel (0) target = $region29
    $region28: #{cnn_autoencoder_forward.1} parent=1 // pred_region
      _
    $region29: #{cnn_autoencoder_forward.1} parent=1 // pred_fallthru
      _
    // Predicated region
    $region30: #{cnn_autoencoder_forward.1} parent=1 // pred_check
      _
    $region31: #{cnn_autoencoder_forward.1} parent=1 // pred_check_branch
      %50 = sbr.rel (0) target = $region33
    $region32: #{cnn_autoencoder_forward.1} parent=1 // pred_region
      _
    $region33: #{cnn_autoencoder_forward.1} parent=1 // pred_fallthru
      _
    // Predicated region
    $region34: #{cnn_autoencoder_forward.1} parent=1 // pred_check
      _
    $region35: #{cnn_autoencoder_forward.1} parent=1 // pred_check_branch
      %52 = sbr.rel (0) target = $region37
    $region36: #{cnn_autoencoder_forward.1} parent=1 // pred_region
      %54 = vsyncadd [#allocation5], 0
      %s55 = sshll.u32 %s8, 4
      %s56 = int_to_ptr.hbm [resolvable:$true] %s55
      %s57 = sshll.u32 [#allocation4], 4
      %s58 = int_to_ptr.vmem [resolvable:$true] %s57
      %63 = dma.hbm_to_vmem [thread:$0]  %s56, 1024, %s58, [#allocation5], 64, 64, 4
    $region37: #{cnn_autoencoder_forward.1} parent=1 // pred_fallthru
      _
    // Predicated region
    $region38: #{cnn_autoencoder_forward.1} parent=1 // pred_check
      _
    $region39: #{cnn_autoencoder_forward.1} parent=1 // pred_check_branch
      %65 = sbr.rel (0) target = $region41
    $region40: #{cnn_autoencoder_forward.1} parent=1 // pred_region
      _
    $region41: #{cnn_autoencoder_forward.1} parent=1 // pred_fallthru
      _
    // Predicated region
    $region42: #{cnn_autoencoder_forward.1} parent=1 // pred_check
      _
    $region43: #{cnn_autoencoder_forward.1} parent=1 // pred_check_branch
      %67 = sbr.rel (0) target = $region45
    $region44: #{cnn_autoencoder_forward.1} parent=1 // pred_region
      %69 = vsyncadd [#allocation5], 0
      %s70 = sshll.u32 %s10, 4
      %s71 = int_to_ptr.hbm [resolvable:$true] %s70
      %s72 = sshll.u32 [#allocation6], 4
      %s73 = int_to_ptr.vmem [resolvable:$true] %s72
      %78 = dma.hbm_to_vmem [thread:$0]  %s71, 16384, %s73, [#allocation5], 64, 64, 4
    $region45: #{cnn_autoencoder_forward.1} parent=1 // pred_fallthru
      _
    // Predicated region
    $region46: #{cnn_autoencoder_forward.1} parent=1 // pred_check
      _
    $region47: #{cnn_autoencoder_forward.1} parent=1 // pred_check_branch
      %80 = sbr.rel (0) target = $region49
    $region48: #{cnn_autoencoder_forward.1} parent=1 // pred_region
      %82 = vsyncadd [#allocation8], 0
      %s83 = sshll.u32 %s11, 4
      %s84 = int_to_ptr.hbm [resolvable:$true] %s83
      %s85 = sshll.u32 [#allocation7], 4
      %s86 = int_to_ptr.vmem [resolvable:$true] %s85
      %91 = dma.hbm_to_vmem [thread:$0]  %s84, 256, %s86, [#allocation8], 16, 16, 1
    $region49: #{cnn_autoencoder_forward.1} parent=1 // pred_fallthru
      _
    // Predicated region
    $region50: #{cnn_autoencoder_forward.1} parent=1 // pred_check
      _
    $region51: #{cnn_autoencoder_forward.1} parent=1 // pred_check_branch
      %93 = sbr.rel (0) target = $region53
    $region52: #{cnn_autoencoder_forward.1} parent=1 // pred_region
      %95 = vsyncadd [#allocation8], 0
      %s96 = sshll.u32 %s12, 4
      %s97 = int_to_ptr.hbm [resolvable:$true] %s96
      %s98 = sshll.u32 [#allocation9], 4
      %s99 = int_to_ptr.vmem [resolvable:$true] %s98
      %104 = dma.hbm_to_vmem [thread:$0]  %s97, 1024, %s99, [#allocation8], 64, 64, 4
    $region53: #{cnn_autoencoder_forward.1} parent=1 // pred_fallthru
      _
    // Predicated region
    $region54: #{cnn_autoencoder_forward.1} parent=1 // pred_check
      _
    $region55: #{cnn_autoencoder_forward.1} parent=1 // pred_check_branch
      %106 = sbr.rel (0) target = $region57
    $region56: #{cnn_autoencoder_forward.1} parent=1 // pred_region
      _
    $region57: #{cnn_autoencoder_forward.1} parent=1 // pred_fallthru
      _
    // Predicated region
    $region58: #{cnn_autoencoder_forward.1} parent=1 // pred_check
      _
    $region59: #{cnn_autoencoder_forward.1} parent=1 // pred_check_branch
      %108 = sbr.rel (0) target = $region61
    $region60: #{cnn_autoencoder_forward.1} parent=1 // pred_region
      %110 = dma.done [#allocation3], 512
    $region61: #{cnn_autoencoder_forward.1} parent=1 // pred_fallthru
      _
    // Predicated region
    $region62: #{cnn_autoencoder_forward.1} parent=1 // pred_check
      _
    $region63: #{cnn_autoencoder_forward.1} parent=1 // pred_check_branch
      %112 = sbr.rel (0) target = $region65
    $region64: #{cnn_autoencoder_forward.1} parent=1 // pred_region
      %114 = dma.done [#allocation5], 1024
    $region65: #{cnn_autoencoder_forward.1} parent=1 // pred_fallthru
      _
    // Predicated region
    $region66: #{cnn_autoencoder_forward.1} parent=1 // pred_check
      _
    $region67: #{cnn_autoencoder_forward.1} parent=1 // pred_check_branch
      %116 = sbr.rel (0) target = $region69
    $region68: #{cnn_autoencoder_forward.1} parent=1 // pred_region
      %118 = dma.done [#allocation5], 16384
    $region69: #{cnn_autoencoder_forward.1} parent=1 // pred_fallthru
      _
    // Predicated region
    $region70: #{cnn_autoencoder_forward.1} parent=1 // pred_check
      _
    $region71: #{cnn_autoencoder_forward.1} parent=1 // pred_check_branch
      %120 = sbr.rel (0) target = $region73
    $region72: #{cnn_autoencoder_forward.1} parent=1 // pred_region
      %122 = dma.done [#allocation8], 256
    $region73: #{cnn_autoencoder_forward.1} parent=1 // pred_fallthru
      _
    // Predicated region
    $region74: #{cnn_autoencoder_forward.1} parent=1 // pred_check
      _
    $region75: #{cnn_autoencoder_forward.1} parent=1 // pred_check_branch
      %124 = sbr.rel (0) target = $region77
    $region76: #{cnn_autoencoder_forward.1} parent=1 // pred_region
      %126 = dma.done [#allocation8], 1024
    $region77: #{cnn_autoencoder_forward.1} parent=1 // pred_fallthru
      _
    %v128 = vld [vmem:[#allocation2] sm:$0xf]
    %v129 = vld [vmem:[#allocation2 + $0x4] sm:$0xf]
    %v130 = vld [vmem:[#allocation2 + $0x8] sm:$0xf]
    %v131 = vld [vmem:[#allocation2 + $0xc] sm:$0xf]
    %v132 = vld [vmem:[#allocation2 + $0x10] sm:$0xf]
    %v133 = vld [vmem:[#allocation2 + $0x14] sm:$0xf]
    %v134 = vld [vmem:[#allocation2 + $0x18] sm:$0xf]
    %v135 = vld [vmem:[#allocation2 + $0x1c] sm:$0xf]
    %v136 = vld [vmem:[%s3] sm:$0x1]
    %v137 = vld [vmem:[%s0] sm:$0xf]
    %v139 = vperm.slane %v136, 0
    %v149 = vunpack.c.l.b16 %v128
    %v150 = vunpack.c.l.b16 %v129
    %v151 = vunpack.c.l.b16 %v130
    %v152 = vunpack.c.l.b16 %v131
    %v153 = vunpack.c.l.b16 %v132
    %v154 = vunpack.c.l.b16 %v133
    %v155 = vunpack.c.l.b16 %v134
    %v156 = vunpack.c.l.b16 %v135
    %v157 = vpack.c.b16 %v150, %v149
    %v158 = vpack.c.b16 %v152, %v151
    %v159 = vpack.c.b16 %v154, %v153
    %v160 = vpack.c.b16 %v156, %v155
    %vm165 = vcmask 523264
    %v167 = vsel %vm165, %v137, 0
    %169 = vmatpush.bf16.msra.mxu0 0
    %170 = vmatpush.bf16.msra.mxu0 0
    %171 = vmatpush.bf16.msra.mxu0 0
    %172 = vmatpush.bf16.msra.mxu0 0
    %173 = vmatpush.bf16.msra.mxu0 %v160
    %174 = vmatpush.bf16.msra.mxu0 %v159
    %175 = vmatpush.bf16.msra.mxu0 %v158
    %176 = vmatpush.bf16.msra.mxu0 %v157
    %177 = vmatmul.bf16.gmra.mxu0 %v167
    %v178 = vpop.f32.mrf.mxu0
    %v179 = vadd.f32 %v139, %v178
    %v180 = vpop.f32.mrf.mxu0
    %181 = vdwg.mxu0
    %v182 = vmax.f32 %v179, 0.0
    %v183 = vpack.c.bf16 %v182, %v182
    %v184 = vld [vmem:[%s4] sm:$0xf]
    %v185 = vld [vmem:[%s4 + $0x4] sm:$0xf]
    %v186 = vld [vmem:[%s4 + $0x8] sm:$0xf]
    %v187 = vld [vmem:[%s4 + $0xc] sm:$0xf]
    %v188 = vld [vmem:[%s4 + $0x10] sm:$0xf]
    %v189 = vld [vmem:[%s4 + $0x14] sm:$0xf]
    %v190 = vld [vmem:[%s4 + $0x18] sm:$0xf]
    %v191 = vld [vmem:[%s4 + $0x1c] sm:$0xf]
    %v192 = vld [vmem:[%s4 + $0x20] sm:$0xf]
    %v193 = vld [vmem:[%s4 + $0x24] sm:$0xf]
    %v194 = vld [vmem:[%s4 + $0x28] sm:$0xf]
    %v195 = vld [vmem:[%s4 + $0x2c] sm:$0xf]
    %v196 = vld [vmem:[%s4 + $0x30] sm:$0xf]
    %v197 = vld [vmem:[%s4 + $0x34] sm:$0xf]
    %v198 = vld [vmem:[%s4 + $0x38] sm:$0xf]
    %v199 = vld [vmem:[%s4 + $0x3c] sm:$0xf]
    %s200 = scalar_lea.vmem %s0, 4
    %v201 = vld [vmem:[%s200] sm:$0xf]
    %v203 = vsel %vm165, %v201, 0
    %205 = vmatpush.bf16.msra.mxu0 0
    %206 = vmatpush.bf16.msra.mxu0 0
    %207 = vmatpush.bf16.msra.mxu0 0
    %208 = vmatpush.bf16.msra.mxu0 0
    %209 = vmatpush.bf16.msra.mxu0 %v160
    %210 = vmatpush.bf16.msra.mxu0 %v159
    %211 = vmatpush.bf16.msra.mxu0 %v158
    %212 = vmatpush.bf16.msra.mxu0 %v157
    %213 = vmatmul.bf16.gmra.mxu0 %v203
    %v214 = vpop.f32.mrf.mxu0
    %v215 = vadd.f32 %v139, %v214
    %v216 = vpop.f32.mrf.mxu0
    %217 = vdwg.mxu0
    %v218 = vmax.f32 %v215, 0.0
    %v219 = vpack.c.bf16 %v218, %v218
    %s220 = scalar_lea.vmem %s4, 64
    %v221 = vld [vmem:[%s220] sm:$0xf]
    %v222 = vld [vmem:[%s220 + $0x4] sm:$0xf]
    %v223 = vld [vmem:[%s220 + $0x8] sm:$0xf]
    %v224 = vld [vmem:[%s220 + $0xc] sm:$0xf]
    %v225 = vld [vmem:[%s220 + $0x10] sm:$0xf]
    %v226 = vld [vmem:[%s220 + $0x14] sm:$0xf]
    %v227 = vld [vmem:[%s220 + $0x18] sm:$0xf]
    %v228 = vld [vmem:[%s220 + $0x1c] sm:$0xf]
    %v229 = vld [vmem:[%s220 + $0x20] sm:$0xf]
    %v230 = vld [vmem:[%s220 + $0x24] sm:$0xf]
    %v231 = vld [vmem:[%s220 + $0x28] sm:$0xf]
    %v232 = vld [vmem:[%s220 + $0x2c] sm:$0xf]
    %v233 = vld [vmem:[%s220 + $0x30] sm:$0xf]
    %v234 = vld [vmem:[%s220 + $0x34] sm:$0xf]
    %v235 = vld [vmem:[%s220 + $0x38] sm:$0xf]
    %v236 = vld [vmem:[%s220 + $0x3c] sm:$0xf]
    %v253 = vunpack.c.l.b16 %v221
    %v254 = vunpack.c.l.b16 %v222
    %v255 = vunpack.c.l.b16 %v223
    %v256 = vunpack.c.l.b16 %v224
    %v257 = vunpack.c.l.b16 %v225
    %v258 = vunpack.c.l.b16 %v226
    %v259 = vunpack.c.l.b16 %v227
    %v260 = vunpack.c.l.b16 %v228
    %v261 = vunpack.c.l.b16 %v229
    %v262 = vunpack.c.l.b16 %v230
    %v263 = vunpack.c.l.b16 %v231
    %v264 = vunpack.c.l.b16 %v232
    %v265 = vunpack.c.l.b16 %v233
    %v266 = vunpack.c.l.b16 %v234
    %v267 = vunpack.c.l.b16 %v235
    %v268 = vunpack.c.l.b16 %v236
    %v269 = vpack.c.b16 %v254, %v253
    %v270 = vpack.c.b16 %v256, %v255
    %v271 = vpack.c.b16 %v258, %v257
    %v272 = vpack.c.b16 %v260, %v259
    %v273 = vpack.c.b16 %v262, %v261
    %v274 = vpack.c.b16 %v264, %v263
    %v275 = vpack.c.b16 %v266, %v265
    %v276 = vpack.c.b16 %v268, %v267
    %285 = vmatpush.bf16.msra.mxu0 %v276
    %286 = vmatpush.bf16.msra.mxu0 %v275
    %287 = vmatpush.bf16.msra.mxu0 %v274
    %288 = vmatpush.bf16.msra.mxu0 %v273
    %289 = vmatpush.bf16.msra.mxu0 %v272
    %290 = vmatpush.bf16.msra.mxu0 %v271
    %291 = vmatpush.bf16.msra.mxu0 %v270
    %292 = vmatpush.bf16.msra.mxu0 %v269
    %293 = vmatmul.bf16.gmra.mxu0 %v219
    %v294 = vpop.f32.mrf.mxu0
    %v295 = vadd.f32 0.0, %v294
    %v296 = vpop.f32.mrf.mxu0
    %297 = vdwg.mxu0
    %v314 = vunpack.c.l.b16 %v184
    %v315 = vunpack.c.l.b16 %v185
    %v316 = vunpack.c.l.b16 %v186
    %v317 = vunpack.c.l.b16 %v187
    %v318 = vunpack.c.l.b16 %v188
    %v319 = vunpack.c.l.b16 %v189
    %v320 = vunpack.c.l.b16 %v190
    %v321 = vunpack.c.l.b16 %v191
    %v322 = vunpack.c.l.b16 %v192
    %v323 = vunpack.c.l.b16 %v193
    %v324 = vunpack.c.l.b16 %v194
    %v325 = vunpack.c.l.b16 %v195
    %v326 = vunpack.c.l.b16 %v196
    %v327 = vunpack.c.l.b16 %v197
    %v328 = vunpack.c.l.b16 %v198
    %v329 = vunpack.c.l.b16 %v199
    %v330 = vpack.c.b16 %v315, %v314
    %v331 = vpack.c.b16 %v317, %v316
    %v332 = vpack.c.b16 %v319, %v318
    %v333 = vpack.c.b16 %v321, %v320
    %v334 = vpack.c.b16 %v323, %v322
    %v335 = vpack.c.b16 %v325, %v324
    %v336 = vpack.c.b16 %v327, %v326
    %v337 = vpack.c.b16 %v329, %v328
    %346 = vmatpush.bf16.msra.mxu0 %v337
    %347 = vmatpush.bf16.msra.mxu0 %v336
    %348 = vmatpush.bf16.msra.mxu0 %v335
    %349 = vmatpush.bf16.msra.mxu0 %v334
    %350 = vmatpush.bf16.msra.mxu0 %v333
    %351 = vmatpush.bf16.msra.mxu0 %v332
    %352 = vmatpush.bf16.msra.mxu0 %v331
    %353 = vmatpush.bf16.msra.mxu0 %v330
    %354 = vmatmul.bf16.gmra.mxu0 %v183
    %v355 = vpop.f32.mrf.mxu0
    %v356 = vadd.f32 %v295, %v355
    %v357 = vpop.f32.mrf.mxu0
    %358 = vdwg.mxu0
    %s359 = scalar_lea.vmem %s0, 8
    %v360 = vld [vmem:[%s359] sm:$0xf]
    %v362 = vsel %vm165, %v360, 0
    %364 = vmatpush.bf16.msra.mxu0 0
    %365 = vmatpush.bf16.msra.mxu0 0
    %366 = vmatpush.bf16.msra.mxu0 0
    %367 = vmatpush.bf16.msra.mxu0 0
    %368 = vmatpush.bf16.msra.mxu0 %v160
    %369 = vmatpush.bf16.msra.mxu0 %v159
    %370 = vmatpush.bf16.msra.mxu0 %v158
    %371 = vmatpush.bf16.msra.mxu0 %v157
    %372 = vmatmul.bf16.gmra.mxu0 %v362
    %v373 = vpop.f32.mrf.mxu0
    %v374 = vadd.f32 %v139, %v373
    %v375 = vpop.f32.mrf.mxu0
    %376 = vdwg.mxu0
    %v377 = vmax.f32 %v374, 0.0
    %v378 = vpack.c.bf16 %v377, %v377
    %s379 = scalar_lea.vmem %s4, 128
    %v380 = vld [vmem:[%s379] sm:$0xf]
    %v381 = vld [vmem:[%s379 + $0x4] sm:$0xf]
    %v382 = vld [vmem:[%s379 + $0x8] sm:$0xf]
    %v383 = vld [vmem:[%s379 + $0xc] sm:$0xf]
    %v384 = vld [vmem:[%s379 + $0x10] sm:$0xf]
    %v385 = vld [vmem:[%s379 + $0x14] sm:$0xf]
    %v386 = vld [vmem:[%s379 + $0x18] sm:$0xf]
    %v387 = vld [vmem:[%s379 + $0x1c] sm:$0xf]
    %v388 = vld [vmem:[%s379 + $0x20] sm:$0xf]
    %v389 = vld [vmem:[%s379 + $0x24] sm:$0xf]
    %v390 = vld [vmem:[%s379 + $0x28] sm:$0xf]
    %v391 = vld [vmem:[%s379 + $0x2c] sm:$0xf]
    %v392 = vld [vmem:[%s379 + $0x30] sm:$0xf]
    %v393 = vld [vmem:[%s379 + $0x34] sm:$0xf]
    %v394 = vld [vmem:[%s379 + $0x38] sm:$0xf]
    %v395 = vld [vmem:[%s379 + $0x3c] sm:$0xf]
    %v412 = vunpack.c.l.b16 %v380
    %v413 = vunpack.c.l.b16 %v381
    %v414 = vunpack.c.l.b16 %v382
    %v415 = vunpack.c.l.b16 %v383
    %v416 = vunpack.c.l.b16 %v384
    %v417 = vunpack.c.l.b16 %v385
    %v418 = vunpack.c.l.b16 %v386
    %v419 = vunpack.c.l.b16 %v387
    %v420 = vunpack.c.l.b16 %v388
    %v421 = vunpack.c.l.b16 %v389
    %v422 = vunpack.c.l.b16 %v390
    %v423 = vunpack.c.l.b16 %v391
    %v424 = vunpack.c.l.b16 %v392
    %v425 = vunpack.c.l.b16 %v393
    %v426 = vunpack.c.l.b16 %v394
    %v427 = vunpack.c.l.b16 %v395
    %v428 = vpack.c.b16 %v413, %v412
    %v429 = vpack.c.b16 %v415, %v414
    %v430 = vpack.c.b16 %v417, %v416
    %v431 = vpack.c.b16 %v419, %v418
    %v432 = vpack.c.b16 %v421, %v420
    %v433 = vpack.c.b16 %v423, %v422
    %v434 = vpack.c.b16 %v425, %v424
    %v435 = vpack.c.b16 %v427, %v426
    %444 = vmatpush.bf16.msra.mxu0 %v435
    %445 = vmatpush.bf16.msra.mxu0 %v434
    %446 = vmatpush.bf16.msra.mxu0 %v433
    %447 = vmatpush.bf16.msra.mxu0 %v432
    %448 = vmatpush.bf16.msra.mxu0 %v431
    %449 = vmatpush.bf16.msra.mxu0 %v430
    %450 = vmatpush.bf16.msra.mxu0 %v429
    %451 = vmatpush.bf16.msra.mxu0 %v428
    %452 = vmatmul.bf16.gmra.mxu0 %v378
    %v453 = vpop.f32.mrf.mxu0
    %v454 = vadd.f32 0.0, %v453
    %v455 = vpop.f32.mrf.mxu0
    %456 = vdwg.mxu0
    %v457 = vadd.f32 %v356, %v454
    %s458 = scalar_lea.vmem %s0, 12
    %v459 = vld [vmem:[%s458] sm:$0xf]
    %v461 = vsel %vm165, %v459, 0
    %463 = vmatpush.bf16.msra.mxu0 0
    %464 = vmatpush.bf16.msra.mxu0 0
    %465 = vmatpush.bf16.msra.mxu0 0
    %466 = vmatpush.bf16.msra.mxu0 0
    %467 = vmatpush.bf16.msra.mxu0 %v160
    %468 = vmatpush.bf16.msra.mxu0 %v159
    %469 = vmatpush.bf16.msra.mxu0 %v158
    %470 = vmatpush.bf16.msra.mxu0 %v157
    %471 = vmatmul.bf16.gmra.mxu0 %v461
    %v472 = vpop.f32.mrf.mxu0
    %v473 = vadd.f32 %v139, %v472
    %v474 = vpop.f32.mrf.mxu0
    %475 = vdwg.mxu0
    %v476 = vmax.f32 %v473, 0.0
    %v477 = vpack.c.bf16 %v476, %v476
    %s478 = scalar_lea.vmem %s4, 192
    %v479 = vld [vmem:[%s478] sm:$0xf]
    %v480 = vld [vmem:[%s478 + $0x4] sm:$0xf]
    %v481 = vld [vmem:[%s478 + $0x8] sm:$0xf]
    %v482 = vld [vmem:[%s478 + $0xc] sm:$0xf]
    %v483 = vld [vmem:[%s478 + $0x10] sm:$0xf]
    %v484 = vld [vmem:[%s478 + $0x14] sm:$0xf]
    %v485 = vld [vmem:[%s478 + $0x18] sm:$0xf]
    %v486 = vld [vmem:[%s478 + $0x1c] sm:$0xf]
    %v487 = vld [vmem:[%s478 + $0x20] sm:$0xf]
    %v488 = vld [vmem:[%s478 + $0x24] sm:$0xf]
    %v489 = vld [vmem:[%s478 + $0x28] sm:$0xf]
    %v490 = vld [vmem:[%s478 + $0x2c] sm:$0xf]
    %v491 = vld [vmem:[%s478 + $0x30] sm:$0xf]
    %v492 = vld [vmem:[%s478 + $0x34] sm:$0xf]
    %v493 = vld [vmem:[%s478 + $0x38] sm:$0xf]
    %v494 = vld [vmem:[%s478 + $0x3c] sm:$0xf]
    %v511 = vunpack.c.l.b16 %v479
    %v512 = vunpack.c.l.b16 %v480
    %v513 = vunpack.c.l.b16 %v481
    %v514 = vunpack.c.l.b16 %v482
    %v515 = vunpack.c.l.b16 %v483
    %v516 = vunpack.c.l.b16 %v484
    %v517 = vunpack.c.l.b16 %v485
    %v518 = vunpack.c.l.b16 %v486
    %v519 = vunpack.c.l.b16 %v487
    %v520 = vunpack.c.l.b16 %v488
    %v521 = vunpack.c.l.b16 %v489
    %v522 = vunpack.c.l.b16 %v490
    %v523 = vunpack.c.l.b16 %v491
    %v524 = vunpack.c.l.b16 %v492
    %v525 = vunpack.c.l.b16 %v493
    %v526 = vunpack.c.l.b16 %v494
    %v527 = vpack.c.b16 %v512, %v511
    %v528 = vpack.c.b16 %v514, %v513
    %v529 = vpack.c.b16 %v516, %v515
    %v530 = vpack.c.b16 %v518, %v517
    %v531 = vpack.c.b16 %v520, %v519
    %v532 = vpack.c.b16 %v522, %v521
    %v533 = vpack.c.b16 %v524, %v523
    %v534 = vpack.c.b16 %v526, %v525
    %543 = vmatpush.bf16.msra.mxu0 %v534
    %544 = vmatpush.bf16.msra.mxu0 %v533
    %545 = vmatpush.bf16.msra.mxu0 %v532
    %546 = vmatpush.bf16.msra.mxu0 %v531
    %547 = vmatpush.bf16.msra.mxu0 %v530
    %548 = vmatpush.bf16.msra.mxu0 %v529
    %549 = vmatpush.bf16.msra.mxu0 %v528
    %550 = vmatpush.bf16.msra.mxu0 %v527
    %551 = vmatmul.bf16.gmra.mxu0 %v477
    %v552 = vpop.f32.mrf.mxu0
    %v553 = vadd.f32 0.0, %v552
    %v554 = vpop.f32.mrf.mxu0
    %555 = vdwg.mxu0
    %v556 = vadd.f32 %v457, %v553
    %s557 = scalar_lea.vmem %s0, 16
    %v558 = vld [vmem:[%s557] sm:$0xf]
    %v560 = vsel %vm165, %v558, 0
    %562 = vmatpush.bf16.msra.mxu0 0
    %563 = vmatpush.bf16.msra.mxu0 0
    %564 = vmatpush.bf16.msra.mxu0 0
    %565 = vmatpush.bf16.msra.mxu0 0
    %566 = vmatpush.bf16.msra.mxu0 %v160
    %567 = vmatpush.bf16.msra.mxu0 %v159
    %568 = vmatpush.bf16.msra.mxu0 %v158
    %569 = vmatpush.bf16.msra.mxu0 %v157
    %570 = vmatmul.bf16.gmra.mxu0 %v560
    %v571 = vpop.f32.mrf.mxu0
    %v572 = vadd.f32 %v139, %v571
    %v573 = vpop.f32.mrf.mxu0
    %574 = vdwg.mxu0
    %v575 = vmax.f32 %v572, 0.0
    %v576 = vpack.c.bf16 %v575, %v575
    %s577 = scalar_lea.vmem %s4, 256
    %v578 = vld [vmem:[%s577] sm:$0xf]
    %v579 = vld [vmem:[%s577 + $0x4] sm:$0xf]
    %v580 = vld [vmem:[%s577 + $0x8] sm:$0xf]
    %v581 = vld [vmem:[%s577 + $0xc] sm:$0xf]
    %v582 = vld [vmem:[%s577 + $0x10] sm:$0xf]
    %v583 = vld [vmem:[%s577 + $0x14] sm:$0xf]
    %v584 = vld [vmem:[%s577 + $0x18] sm:$0xf]
    %v585 = vld [vmem:[%s577 + $0x1c] sm:$0xf]
    %v586 = vld [vmem:[%s577 + $0x20] sm:$0xf]
    %v587 = vld [vmem:[%s577 + $0x24] sm:$0xf]
    %v588 = vld [vmem:[%s577 + $0x28] sm:$0xf]
    %v589 = vld [vmem:[%s577 + $0x2c] sm:$0xf]
    %v590 = vld [vmem:[%s577 + $0x30] sm:$0xf]
    %v591 = vld [vmem:[%s577 + $0x34] sm:$0xf]
    %v592 = vld [vmem:[%s577 + $0x38] sm:$0xf]
    %v593 = vld [vmem:[%s577 + $0x3c] sm:$0xf]
    %v610 = vunpack.c.l.b16 %v578
    %v611 = vunpack.c.l.b16 %v579
    %v612 = vunpack.c.l.b16 %v580
    %v613 = vunpack.c.l.b16 %v581
    %v614 = vunpack.c.l.b16 %v582
    %v615 = vunpack.c.l.b16 %v583
    %v616 = vunpack.c.l.b16 %v584
    %v617 = vunpack.c.l.b16 %v585
    %v618 = vunpack.c.l.b16 %v586
    %v619 = vunpack.c.l.b16 %v587
    %v620 = vunpack.c.l.b16 %v588
    %v621 = vunpack.c.l.b16 %v589
    %v622 = vunpack.c.l.b16 %v590
    %v623 = vunpack.c.l.b16 %v591
    %v624 = vunpack.c.l.b16 %v592
    %v625 = vunpack.c.l.b16 %v593
    %v626 = vpack.c.b16 %v611, %v610
    %v627 = vpack.c.b16 %v613, %v612
    %v628 = vpack.c.b16 %v615, %v614
    %v629 = vpack.c.b16 %v617, %v616
    %v630 = vpack.c.b16 %v619, %v618
    %v631 = vpack.c.b16 %v621, %v620
    %v632 = vpack.c.b16 %v623, %v622
    %v633 = vpack.c.b16 %v625, %v624
    %642 = vmatpush.bf16.msra.mxu0 %v633
    %643 = vmatpush.bf16.msra.mxu0 %v632
    %644 = vmatpush.bf16.msra.mxu0 %v631
    %645 = vmatpush.bf16.msra.mxu0 %v630
    %646 = vmatpush.bf16.msra.mxu0 %v629
    %647 = vmatpush.bf16.msra.mxu0 %v628
    %648 = vmatpush.bf16.msra.mxu0 %v627
    %649 = vmatpush.bf16.msra.mxu0 %v626
    %650 = vmatmul.bf16.gmra.mxu0 %v576
    %v651 = vpop.f32.mrf.mxu0
    %v652 = vadd.f32 0.0, %v651
    %v653 = vpop.f32.mrf.mxu0
    %654 = vdwg.mxu0
    %v655 = vadd.f32 %v556, %v652
    %s656 = scalar_lea.vmem %s0, 20
    %v657 = vld [vmem:[%s656] sm:$0xf]
    %v659 = vsel %vm165, %v657, 0
    %661 = vmatpush.bf16.msra.mxu0 0
    %662 = vmatpush.bf16.msra.mxu0 0
    %663 = vmatpush.bf16.msra.mxu0 0
    %664 = vmatpush.bf16.msra.mxu0 0
    %665 = vmatpush.bf16.msra.mxu0 %v160
    %666 = vmatpush.bf16.msra.mxu0 %v159
    %667 = vmatpush.bf16.msra.mxu0 %v158
    %668 = vmatpush.bf16.msra.mxu0 %v157
    %669 = vmatmul.bf16.gmra.mxu0 %v659
    %v670 = vpop.f32.mrf.mxu0
    %v671 = vadd.f32 %v139, %v670
    %v672 = vpop.f32.mrf.mxu0
    %673 = vdwg.mxu0
    %v674 = vmax.f32 %v671, 0.0
    %v675 = vpack.c.bf16 %v674, %v674
    %s676 = scalar_lea.vmem %s4, 320
    %v677 = vld [vmem:[%s676] sm:$0xf]
    %v678 = vld [vmem:[%s676 + $0x4] sm:$0xf]
    %v679 = vld [vmem:[%s676 + $0x8] sm:$0xf]
    %v680 = vld [vmem:[%s676 + $0xc] sm:$0xf]
    %v681 = vld [vmem:[%s676 + $0x10] sm:$0xf]
    %v682 = vld [vmem:[%s676 + $0x14] sm:$0xf]
    %v683 = vld [vmem:[%s676 + $0x18] sm:$0xf]
    %v684 = vld [vmem:[%s676 + $0x1c] sm:$0xf]
    %v685 = vld [vmem:[%s676 + $0x20] sm:$0xf]
    %v686 = vld [vmem:[%s676 + $0x24] sm:$0xf]
    %v687 = vld [vmem:[%s676 + $0x28] sm:$0xf]
    %v688 = vld [vmem:[%s676 + $0x2c] sm:$0xf]
    %v689 = vld [vmem:[%s676 + $0x30] sm:$0xf]
    %v690 = vld [vmem:[%s676 + $0x34] sm:$0xf]
    %v691 = vld [vmem:[%s676 + $0x38] sm:$0xf]
    %v692 = vld [vmem:[%s676 + $0x3c] sm:$0xf]
    %v709 = vunpack.c.l.b16 %v677
    %v710 = vunpack.c.l.b16 %v678
    %v711 = vunpack.c.l.b16 %v679
    %v712 = vunpack.c.l.b16 %v680
    %v713 = vunpack.c.l.b16 %v681
    %v714 = vunpack.c.l.b16 %v682
    %v715 = vunpack.c.l.b16 %v683
    %v716 = vunpack.c.l.b16 %v684
    %v717 = vunpack.c.l.b16 %v685
    %v718 = vunpack.c.l.b16 %v686
    %v719 = vunpack.c.l.b16 %v687
    %v720 = vunpack.c.l.b16 %v688
    %v721 = vunpack.c.l.b16 %v689
    %v722 = vunpack.c.l.b16 %v690
    %v723 = vunpack.c.l.b16 %v691
    %v724 = vunpack.c.l.b16 %v692
    %v725 = vpack.c.b16 %v710, %v709
    %v726 = vpack.c.b16 %v712, %v711
    %v727 = vpack.c.b16 %v714, %v713
    %v728 = vpack.c.b16 %v716, %v715
    %v729 = vpack.c.b16 %v718, %v717
    %v730 = vpack.c.b16 %v720, %v719
    %v731 = vpack.c.b16 %v722, %v721
    %v732 = vpack.c.b16 %v724, %v723
    %741 = vmatpush.bf16.msra.mxu0 %v732
    %742 = vmatpush.bf16.msra.mxu0 %v731
    %743 = vmatpush.bf16.msra.mxu0 %v730
    %744 = vmatpush.bf16.msra.mxu0 %v729
    %745 = vmatpush.bf16.msra.mxu0 %v728
    %746 = vmatpush.bf16.msra.mxu0 %v727
    %747 = vmatpush.bf16.msra.mxu0 %v726
    %748 = vmatpush.bf16.msra.mxu0 %v725
    %749 = vmatmul.bf16.gmra.mxu0 %v675
    %v750 = vpop.f32.mrf.mxu0
    %v751 = vadd.f32 0.0, %v750
    %v752 = vpop.f32.mrf.mxu0
    %753 = vdwg.mxu0
    %v754 = vadd.f32 %v655, %v751
    %s755 = scalar_lea.vmem %s0, 24
    %v756 = vld [vmem:[%s755] sm:$0xf]
    %v758 = vsel %vm165, %v756, 0
    %760 = vmatpush.bf16.msra.mxu0 0
    %761 = vmatpush.bf16.msra.mxu0 0
    %762 = vmatpush.bf16.msra.mxu0 0
    %763 = vmatpush.bf16.msra.mxu0 0
    %764 = vmatpush.bf16.msra.mxu0 %v160
    %765 = vmatpush.bf16.msra.mxu0 %v159
    %766 = vmatpush.bf16.msra.mxu0 %v158
    %767 = vmatpush.bf16.msra.mxu0 %v157
    %768 = vmatmul.bf16.gmra.mxu0 %v758
    %v769 = vpop.f32.mrf.mxu0
    %v770 = vadd.f32 %v139, %v769
    %v771 = vpop.f32.mrf.mxu0
    %772 = vdwg.mxu0
    %v773 = vmax.f32 %v770, 0.0
    %v774 = vpack.c.bf16 %v773, %v773
    %s775 = scalar_lea.vmem %s4, 384
    %v776 = vld [vmem:[%s775] sm:$0xf]
    %v777 = vld [vmem:[%s775 + $0x4] sm:$0xf]
    %v778 = vld [vmem:[%s775 + $0x8] sm:$0xf]
    %v779 = vld [vmem:[%s775 + $0xc] sm:$0xf]
    %v780 = vld [vmem:[%s775 + $0x10] sm:$0xf]
    %v781 = vld [vmem:[%s775 + $0x14] sm:$0xf]
    %v782 = vld [vmem:[%s775 + $0x18] sm:$0xf]
    %v783 = vld [vmem:[%s775 + $0x1c] sm:$0xf]
    %v784 = vld [vmem:[%s775 + $0x20] sm:$0xf]
    %v785 = vld [vmem:[%s775 + $0x24] sm:$0xf]
    %v786 = vld [vmem:[%s775 + $0x28] sm:$0xf]
    %v787 = vld [vmem:[%s775 + $0x2c] sm:$0xf]
    %v788 = vld [vmem:[%s775 + $0x30] sm:$0xf]
    %v789 = vld [vmem:[%s775 + $0x34] sm:$0xf]
    %v790 = vld [vmem:[%s775 + $0x38] sm:$0xf]
    %v791 = vld [vmem:[%s775 + $0x3c] sm:$0xf]
    %v808 = vunpack.c.l.b16 %v776
    %v809 = vunpack.c.l.b16 %v777
    %v810 = vunpack.c.l.b16 %v778
    %v811 = vunpack.c.l.b16 %v779
    %v812 = vunpack.c.l.b16 %v780
    %v813 = vunpack.c.l.b16 %v781
    %v814 = vunpack.c.l.b16 %v782
    %v815 = vunpack.c.l.b16 %v783
    %v816 = vunpack.c.l.b16 %v784
    %v817 = vunpack.c.l.b16 %v785
    %v818 = vunpack.c.l.b16 %v786
    %v819 = vunpack.c.l.b16 %v787
    %v820 = vunpack.c.l.b16 %v788
    %v821 = vunpack.c.l.b16 %v789
    %v822 = vunpack.c.l.b16 %v790
    %v823 = vunpack.c.l.b16 %v791
    %v824 = vpack.c.b16 %v809, %v808
    %v825 = vpack.c.b16 %v811, %v810
    %v826 = vpack.c.b16 %v813, %v812
    %v827 = vpack.c.b16 %v815, %v814
    %v828 = vpack.c.b16 %v817, %v816
    %v829 = vpack.c.b16 %v819, %v818
    %v830 = vpack.c.b16 %v821, %v820
    %v831 = vpack.c.b16 %v823, %v822
    %840 = vmatpush.bf16.msra.mxu0 %v831
    %841 = vmatpush.bf16.msra.mxu0 %v830
    %842 = vmatpush.bf16.msra.mxu0 %v829
    %843 = vmatpush.bf16.msra.mxu0 %v828
    %844 = vmatpush.bf16.msra.mxu0 %v827
    %845 = vmatpush.bf16.msra.mxu0 %v826
    %846 = vmatpush.bf16.msra.mxu0 %v825
    %847 = vmatpush.bf16.msra.mxu0 %v824
    %848 = vmatmul.bf16.gmra.mxu0 %v774
    %v849 = vpop.f32.mrf.mxu0
    %v850 = vadd.f32 0.0, %v849
    %v851 = vpop.f32.mrf.mxu0
    %852 = vdwg.mxu0
    %v853 = vadd.f32 %v754, %v850
    %v854 = vld [vmem:[%s5] sm:$0x1]
    %v856 = vperm.slane %v854, 0
    %v858 = vadd.f32 %v853, %v856
    %v859 = vmax.f32 %v858, 0.0
    %v860 = vpack.c.bf16 %v859, %v859
    %v861 = vld [vmem:[%s6] sm:$0xff]
    %v862 = vld [vmem:[%s6 + $0x8] sm:$0xff]
    %v863 = vld [vmem:[%s6 + $0x10] sm:$0xff]
    %v864 = vld [vmem:[%s6 + $0x18] sm:$0xff]
    %v865 = vld [vmem:[%s6 + $0x20] sm:$0xff]
    %v866 = vld [vmem:[%s6 + $0x28] sm:$0xff]
    %v867 = vld [vmem:[%s6 + $0x30] sm:$0xff]
    %v868 = vld [vmem:[%s6 + $0x38] sm:$0xff]
    %v869 = vld [vmem:[%s6 + $0x40] sm:$0xff]
    %v870 = vld [vmem:[%s6 + $0x48] sm:$0xff]
    %v871 = vld [vmem:[%s6 + $0x50] sm:$0xff]
    %v872 = vld [vmem:[%s6 + $0x58] sm:$0xff]
    %v873 = vld [vmem:[%s6 + $0x60] sm:$0xff]
    %v874 = vld [vmem:[%s6 + $0x68] sm:$0xff]
    %v875 = vld [vmem:[%s6 + $0x70] sm:$0xff]
    %v876 = vld [vmem:[%s6 + $0x78] sm:$0xff]
    %v877 = vld [vmem:[%s7] sm:$0x3]
    %v879 = vperm.slane %v877, 0
    %v880 = vperm.slane %v877, 1
    %v899 = vunpack.c.l.b16 %v861
    %v900 = vunpack.c.h.b16 %v861
    %v901 = vunpack.c.l.b16 %v862
    %v902 = vunpack.c.h.b16 %v862
    %v903 = vunpack.c.l.b16 %v863
    %v904 = vunpack.c.h.b16 %v863
    %v905 = vunpack.c.l.b16 %v864
    %v906 = vunpack.c.h.b16 %v864
    %v907 = vunpack.c.l.b16 %v865
    %v908 = vunpack.c.h.b16 %v865
    %v909 = vunpack.c.l.b16 %v866
    %v910 = vunpack.c.h.b16 %v866
    %v911 = vunpack.c.l.b16 %v867
    %v912 = vunpack.c.h.b16 %v867
    %v913 = vunpack.c.l.b16 %v868
    %v914 = vunpack.c.h.b16 %v868
    %v915 = vunpack.c.l.b16 %v869
    %v916 = vunpack.c.h.b16 %v869
    %v917 = vunpack.c.l.b16 %v870
    %v918 = vunpack.c.h.b16 %v870
    %v919 = vunpack.c.l.b16 %v871
    %v920 = vunpack.c.h.b16 %v871
    %v921 = vunpack.c.l.b16 %v872
    %v922 = vunpack.c.h.b16 %v872
    %v923 = vunpack.c.l.b16 %v873
    %v924 = vunpack.c.h.b16 %v873
    %v925 = vunpack.c.l.b16 %v874
    %v926 = vunpack.c.h.b16 %v874
    %v927 = vunpack.c.l.b16 %v875
    %v928 = vunpack.c.h.b16 %v875
    %v929 = vunpack.c.l.b16 %v876
    %v930 = vunpack.c.h.b16 %v876
    %v931 = vpack.c.b16 %v901, %v899
    %v932 = vpack.c.b16 %v902, %v900
    %v933 = vpack.c.b16 %v905, %v903
    %v934 = vpack.c.b16 %v906, %v904
    %v935 = vpack.c.b16 %v909, %v907
    %v936 = vpack.c.b16 %v910, %v908
    %v937 = vpack.c.b16 %v913, %v911
    %v938 = vpack.c.b16 %v914, %v912
    %v939 = vpack.c.b16 %v917, %v915
    %v940 = vpack.c.b16 %v918, %v916
    %v941 = vpack.c.b16 %v921, %v919
    %v942 = vpack.c.b16 %v922, %v920
    %v943 = vpack.c.b16 %v925, %v923
    %v944 = vpack.c.b16 %v926, %v924
    %v945 = vpack.c.b16 %v929, %v927
    %v946 = vpack.c.b16 %v930, %v928
    %963 = vmatpush.bf16.msra.mxu0 %v945
    %964 = vmatpush.bf16.msra.mxu0 %v943
    %965 = vmatpush.bf16.msra.mxu0 %v941
    %966 = vmatpush.bf16.msra.mxu0 %v939
    %967 = vmatpush.bf16.msra.mxu0 %v937
    %968 = vmatpush.bf16.msra.mxu0 %v935
    %969 = vmatpush.bf16.msra.mxu0 %v933
    %970 = vmatpush.bf16.msra.mxu0 %v931
    %971 = vmatmul.bf16.gmra.mxu0 %v860
    %v972 = vpop.f32.mrf.mxu0
    %v973 = vadd.f32 %v879, %v972
    %v974 = vpop.f32.mrf.mxu0
    %975 = vdwg.mxu0
    %976 = vmatpush.bf16.msra.mxu0 %v946
    %977 = vmatpush.bf16.msra.mxu0 %v944
    %978 = vmatpush.bf16.msra.mxu0 %v942
    %979 = vmatpush.bf16.msra.mxu0 %v940
    %980 = vmatpush.bf16.msra.mxu0 %v938
    %981 = vmatpush.bf16.msra.mxu0 %v936
    %982 = vmatpush.bf16.msra.mxu0 %v934
    %983 = vmatpush.bf16.msra.mxu0 %v932
    %984 = vmatmul.bf16.gmra.mxu0 %v860
    %v985 = vpop.f32.mrf.mxu0
    %v986 = vadd.f32 %v880, %v985
    %v987 = vpop.f32.mrf.mxu0
    %988 = vdwg.mxu0
    %989 = vst [vmem:[%s14] sm:$0xff] %v973
    %990 = vst [vmem:[%s14 + $0x8] sm:$0xff] %v986
    %v991 = vld [vmem:[%s1] sm:$0xff]
    %v992 = vmul.f32 %v986, 0.5
    %v993 = vmul.f32 %v992, 1.442695
    %v994 = vpow.pop %v993
    %v995 = vmul.f32 %v991, %v994
    %v996 = vadd.f32 %v973, %v995
    %v997 = vpack.c.bf16 %v996, %v996
    %v998 = vld [vmem:[#allocation4] sm:$0xf]
    %v999 = vld [vmem:[#allocation4 + $0x4] sm:$0xf]
    %v1000 = vld [vmem:[#allocation4 + $0x8] sm:$0xf]
    %v1001 = vld [vmem:[#allocation4 + $0xc] sm:$0xf]
    %v1002 = vld [vmem:[#allocation4 + $0x10] sm:$0xf]
    %v1003 = vld [vmem:[#allocation4 + $0x14] sm:$0xf]
    %v1004 = vld [vmem:[#allocation4 + $0x18] sm:$0xf]
    %v1005 = vld [vmem:[#allocation4 + $0x1c] sm:$0xf]
    %v1006 = vld [vmem:[#allocation4 + $0x20] sm:$0xf]
    %v1007 = vld [vmem:[#allocation4 + $0x24] sm:$0xf]
    %v1008 = vld [vmem:[#allocation4 + $0x28] sm:$0xf]
    %v1009 = vld [vmem:[#allocation4 + $0x2c] sm:$0xf]
    %v1010 = vld [vmem:[#allocation4 + $0x30] sm:$0xf]
    %v1011 = vld [vmem:[#allocation4 + $0x34] sm:$0xf]
    %v1012 = vld [vmem:[#allocation4 + $0x38] sm:$0xf]
    %v1013 = vld [vmem:[#allocation4 + $0x3c] sm:$0xf]
    %v1014 = vld [vmem:[%s9] sm:$0x1]
    %v1016 = vperm.slane %v1014, 0
    %v1034 = vunpack.c.l.b16 %v998
    %v1035 = vunpack.c.l.b16 %v999
    %v1036 = vunpack.c.l.b16 %v1000
    %v1037 = vunpack.c.l.b16 %v1001
    %v1038 = vunpack.c.l.b16 %v1002
    %v1039 = vunpack.c.l.b16 %v1003
    %v1040 = vunpack.c.l.b16 %v1004
    %v1041 = vunpack.c.l.b16 %v1005
    %v1042 = vunpack.c.l.b16 %v1006
    %v1043 = vunpack.c.l.b16 %v1007
    %v1044 = vunpack.c.l.b16 %v1008
    %v1045 = vunpack.c.l.b16 %v1009
    %v1046 = vunpack.c.l.b16 %v1010
    %v1047 = vunpack.c.l.b16 %v1011
    %v1048 = vunpack.c.l.b16 %v1012
    %v1049 = vunpack.c.l.b16 %v1013
    %v1050 = vpack.c.b16 %v1035, %v1034
    %v1051 = vpack.c.b16 %v1037, %v1036
    %v1052 = vpack.c.b16 %v1039, %v1038
    %v1053 = vpack.c.b16 %v1041, %v1040
    %v1054 = vpack.c.b16 %v1043, %v1042
    %v1055 = vpack.c.b16 %v1045, %v1044
    %v1056 = vpack.c.b16 %v1047, %v1046
    %v1057 = vpack.c.b16 %v1049, %v1048
    %1066 = vmatpush.bf16.msra.mxu0 %v1057
    %1067 = vmatpush.bf16.msra.mxu0 %v1056
    %1068 = vmatpush.bf16.msra.mxu0 %v1055
    %1069 = vmatpush.bf16.msra.mxu0 %v1054
    %1070 = vmatpush.bf16.msra.mxu0 %v1053
    %1071 = vmatpush.bf16.msra.mxu0 %v1052
    %1072 = vmatpush.bf16.msra.mxu0 %v1051
    %1073 = vmatpush.bf16.msra.mxu0 %v1050
    %1074 = vmatmul.bf16.gmra.mxu0 %v997
    %v1075 = vpop.f32.mrf.mxu0
    %v1076 = vadd.f32 %v1016, %v1075
    %v1077 = vpop.f32.mrf.mxu0
    %1078 = vdwg.mxu0
    %v1079 = vmax.f32 %v1076, 0.0
    %v1080 = vpack.c.bf16 %v1079, %v1079
    %v1081 = vld [vmem:[#allocation9] sm:$0xf]
    %v1082 = vld [vmem:[#allocation9 + $0x4] sm:$0xf]
    %v1083 = vld [vmem:[#allocation9 + $0x8] sm:$0xf]
    %v1084 = vld [vmem:[#allocation9 + $0xc] sm:$0xf]
    %v1085 = vld [vmem:[#allocation9 + $0x10] sm:$0xf]
    %v1086 = vld [vmem:[#allocation9 + $0x14] sm:$0xf]
    %v1087 = vld [vmem:[#allocation9 + $0x18] sm:$0xf]
    %v1088 = vld [vmem:[#allocation9 + $0x1c] sm:$0xf]
    %v1089 = vld [vmem:[#allocation9 + $0x20] sm:$0xf]
    %v1090 = vld [vmem:[#allocation9 + $0x24] sm:$0xf]
    %v1091 = vld [vmem:[#allocation9 + $0x28] sm:$0xf]
    %v1092 = vld [vmem:[#allocation9 + $0x2c] sm:$0xf]
    %v1093 = vld [vmem:[#allocation9 + $0x30] sm:$0xf]
    %v1094 = vld [vmem:[#allocation9 + $0x34] sm:$0xf]
    %v1095 = vld [vmem:[#allocation9 + $0x38] sm:$0xf]
    %v1096 = vld [vmem:[#allocation9 + $0x3c] sm:$0xf]
    %v1097 = vld [vmem:[%s13] sm:$0x1]
    %v1098 = vld [vmem:[#allocation6] sm:$0xf]
    %v1099 = vld [vmem:[#allocation6 + $0x4] sm:$0xf]
    %v1100 = vld [vmem:[#allocation6 + $0x8] sm:$0xf]
    %v1101 = vld [vmem:[#allocation6 + $0xc] sm:$0xf]
    %v1102 = vld [vmem:[#allocation6 + $0x10] sm:$0xf]
    %v1103 = vld [vmem:[#allocation6 + $0x14] sm:$0xf]
    %v1104 = vld [vmem:[#allocation6 + $0x18] sm:$0xf]
    %v1105 = vld [vmem:[#allocation6 + $0x1c] sm:$0xf]
    %v1106 = vld [vmem:[#allocation6 + $0x20] sm:$0xf]
    %v1107 = vld [vmem:[#allocation6 + $0x24] sm:$0xf]
    %v1108 = vld [vmem:[#allocation6 + $0x28] sm:$0xf]
    %v1109 = vld [vmem:[#allocation6 + $0x2c] sm:$0xf]
    %v1110 = vld [vmem:[#allocation6 + $0x30] sm:$0xf]
    %v1111 = vld [vmem:[#allocation6 + $0x34] sm:$0xf]
    %v1112 = vld [vmem:[#allocation6 + $0x38] sm:$0xf]
    %v1113 = vld [vmem:[#allocation6 + $0x3c] sm:$0xf]
    %v1114 = vld [vmem:[#allocation7] sm:$0x1]
    %v1116 = vperm.slane %v1114, 0
    %v1134 = vunpack.c.l.b16 %v1098
    %v1135 = vunpack.c.l.b16 %v1099
    %v1136 = vunpack.c.l.b16 %v1100
    %v1137 = vunpack.c.l.b16 %v1101
    %v1138 = vunpack.c.l.b16 %v1102
    %v1139 = vunpack.c.l.b16 %v1103
    %v1140 = vunpack.c.l.b16 %v1104
    %v1141 = vunpack.c.l.b16 %v1105
    %v1142 = vunpack.c.l.b16 %v1106
    %v1143 = vunpack.c.l.b16 %v1107
    %v1144 = vunpack.c.l.b16 %v1108
    %v1145 = vunpack.c.l.b16 %v1109
    %v1146 = vunpack.c.l.b16 %v1110
    %v1147 = vunpack.c.l.b16 %v1111
    %v1148 = vunpack.c.l.b16 %v1112
    %v1149 = vunpack.c.l.b16 %v1113
    %v1150 = vpack.c.b16 %v1135, %v1134
    %v1151 = vpack.c.b16 %v1137, %v1136
    %v1152 = vpack.c.b16 %v1139, %v1138
    %v1153 = vpack.c.b16 %v1141, %v1140
    %v1154 = vpack.c.b16 %v1143, %v1142
    %v1155 = vpack.c.b16 %v1145, %v1144
    %v1156 = vpack.c.b16 %v1147, %v1146
    %v1157 = vpack.c.b16 %v1149, %v1148
    %1166 = vmatpush.bf16.msra.mxu0 %v1157
    %1167 = vmatpush.bf16.msra.mxu0 %v1156
    %1168 = vmatpush.bf16.msra.mxu0 %v1155
    %1169 = vmatpush.bf16.msra.mxu0 %v1154
    %1170 = vmatpush.bf16.msra.mxu0 %v1153
    %1171 = vmatpush.bf16.msra.mxu0 %v1152
    %1172 = vmatpush.bf16.msra.mxu0 %v1151
    %1173 = vmatpush.bf16.msra.mxu0 %v1150
    %1174 = vmatmul.bf16.gmra.mxu0 %v1080
    %v1175 = vpop.f32.mrf.mxu0
    %v1176 = vadd.f32 %v1116, %v1175
    %v1177 = vpop.f32.mrf.mxu0
    %1178 = vdwg.mxu0
    %v1179 = vsub.f32 0.0, %v1176
    %v1180 = vmul.f32 %v1179, 1.442695
    %v1181 = vpow.pop %v1180
    %v1182 = vadd.f32 %v1181, 1.0
    %v1183 = vrcp.pop %v1182
    %v1184 = vpack.c.bf16 %v1183, %v1183
    %v1186 = vperm.slane %v1097, 0
    %v1204 = vunpack.c.l.b16 %v1081
    %v1205 = vunpack.c.l.b16 %v1082
    %v1206 = vunpack.c.l.b16 %v1083
    %v1207 = vunpack.c.l.b16 %v1084
    %v1208 = vunpack.c.l.b16 %v1085
    %v1209 = vunpack.c.l.b16 %v1086
    %v1210 = vunpack.c.l.b16 %v1087
    %v1211 = vunpack.c.l.b16 %v1088
    %v1212 = vunpack.c.l.b16 %v1089
    %v1213 = vunpack.c.l.b16 %v1090
    %v1214 = vunpack.c.l.b16 %v1091
    %v1215 = vunpack.c.l.b16 %v1092
    %v1216 = vunpack.c.l.b16 %v1093
    %v1217 = vunpack.c.l.b16 %v1094
    %v1218 = vunpack.c.l.b16 %v1095
    %v1219 = vunpack.c.l.b16 %v1096
    %v1220 = vpack.c.b16 %v1205, %v1204
    %v1221 = vpack.c.b16 %v1207, %v1206
    %v1222 = vpack.c.b16 %v1209, %v1208
    %v1223 = vpack.c.b16 %v1211, %v1210
    %v1224 = vpack.c.b16 %v1213, %v1212
    %v1225 = vpack.c.b16 %v1215, %v1214
    %v1226 = vpack.c.b16 %v1217, %v1216
    %v1227 = vpack.c.b16 %v1219, %v1218
    %1236 = vmatpush.bf16.msra.mxu0 %v1227
    %1237 = vmatpush.bf16.msra.mxu0 %v1226
    %1238 = vmatpush.bf16.msra.mxu0 %v1225
    %1239 = vmatpush.bf16.msra.mxu0 %v1224
    %1240 = vmatpush.bf16.msra.mxu0 %v1223
    %1241 = vmatpush.bf16.msra.mxu0 %v1222
    %1242 = vmatpush.bf16.msra.mxu0 %v1221
    %1243 = vmatpush.bf16.msra.mxu0 %v1220
    %1244 = vmatmul.bf16.gmra.mxu0 %v1184
    %v1245 = vpop.f32.mrf.mxu0
    %v1246 = vadd.f32 %v1186, %v1245
    %v1247 = vpop.f32.mrf.mxu0
    %1248 = vdwg.mxu0
    %v1249 = vmax.f32 %v1246, 0.0
    %v1250 = vsub.f32 0.0, %v1249
    %v1251 = vmul.f32 %v1250, 1.442695
    %v1252 = vpow.pop %v1251
    %v1253 = vadd.f32 %v1252, 1.0
    %v1254 = vrcp.pop %v1253
    %vm1255 = vcmask 64512
    %1256 = vst.msk [vmem:[%s15] sm:$0xff] %vm1255, %v1254
    %s1257 = scalar_lea.vmem [#allocation6], 64
    %v1258 = vld [vmem:[%s1257] sm:$0xf]
    %v1259 = vld [vmem:[%s1257 + $0x4] sm:$0xf]
    %v1260 = vld [vmem:[%s1257 + $0x8] sm:$0xf]
    %v1261 = vld [vmem:[%s1257 + $0xc] sm:$0xf]
    %v1262 = vld [vmem:[%s1257 + $0x10] sm:$0xf]
    %v1263 = vld [vmem:[%s1257 + $0x14] sm:$0xf]
    %v1264 = vld [vmem:[%s1257 + $0x18] sm:$0xf]
    %v1265 = vld [vmem:[%s1257 + $0x1c] sm:$0xf]
    %v1266 = vld [vmem:[%s1257 + $0x20] sm:$0xf]
    %v1267 = vld [vmem:[%s1257 + $0x24] sm:$0xf]
    %v1268 = vld [vmem:[%s1257 + $0x28] sm:$0xf]
    %v1269 = vld [vmem:[%s1257 + $0x2c] sm:$0xf]
    %v1270 = vld [vmem:[%s1257 + $0x30] sm:$0xf]
    %v1271 = vld [vmem:[%s1257 + $0x34] sm:$0xf]
    %v1272 = vld [vmem:[%s1257 + $0x38] sm:$0xf]
    %v1273 = vld [vmem:[%s1257 + $0x3c] sm:$0xf]
    %s1274 = scalar_lea.vmem [#allocation7], 1
    %v1275 = vld [vmem:[%s1274] sm:$0x1]
    %v1277 = vperm.slane %v1275, 0
    %v1295 = vunpack.c.l.b16 %v1258
    %v1296 = vunpack.c.l.b16 %v1259
    %v1297 = vunpack.c.l.b16 %v1260
    %v1298 = vunpack.c.l.b16 %v1261
    %v1299 = vunpack.c.l.b16 %v1262
    %v1300 = vunpack.c.l.b16 %v1263
    %v1301 = vunpack.c.l.b16 %v1264
    %v1302 = vunpack.c.l.b16 %v1265
    %v1303 = vunpack.c.l.b16 %v1266
    %v1304 = vunpack.c.l.b16 %v1267
    %v1305 = vunpack.c.l.b16 %v1268
    %v1306 = vunpack.c.l.b16 %v1269
    %v1307 = vunpack.c.l.b16 %v1270
    %v1308 = vunpack.c.l.b16 %v1271
    %v1309 = vunpack.c.l.b16 %v1272
    %v1310 = vunpack.c.l.b16 %v1273
    %v1311 = vpack.c.b16 %v1296, %v1295
    %v1312 = vpack.c.b16 %v1298, %v1297
    %v1313 = vpack.c.b16 %v1300, %v1299
    %v1314 = vpack.c.b16 %v1302, %v1301
    %v1315 = vpack.c.b16 %v1304, %v1303
    %v1316 = vpack.c.b16 %v1306, %v1305
    %v1317 = vpack.c.b16 %v1308, %v1307
    %v1318 = vpack.c.b16 %v1310, %v1309
    %1327 = vmatpush.bf16.msra.mxu0 %v1318
    %1328 = vmatpush.bf16.msra.mxu0 %v1317
    %1329 = vmatpush.bf16.msra.mxu0 %v1316
    %1330 = vmatpush.bf16.msra.mxu0 %v1315
    %1331 = vmatpush.bf16.msra.mxu0 %v1314
    %1332 = vmatpush.bf16.msra.mxu0 %v1313
    %1333 = vmatpush.bf16.msra.mxu0 %v1312
    %1334 = vmatpush.bf16.msra.mxu0 %v1311
    %1335 = vmatmul.bf16.gmra.mxu0 %v1080
    %v1336 = vpop.f32.mrf.mxu0
    %v1337 = vadd.f32 %v1277, %v1336
    %v1338 = vpop.f32.mrf.mxu0
    %1339 = vdwg.mxu0
    %v1340 = vsub.f32 0.0, %v1337
    %v1341 = vmul.f32 %v1340, 1.442695
    %v1342 = vpow.pop %v1341
    %v1343 = vadd.f32 %v1342, 1.0
    %v1344 = vrcp.pop %v1343
    %v1345 = vpack.c.bf16 %v1344, %v1344
    %1346 = vmatpush.bf16.msra.mxu0 %v1227
    %1347 = vmatpush.bf16.msra.mxu0 %v1226
    %1348 = vmatpush.bf16.msra.mxu0 %v1225
    %1349 = vmatpush.bf16.msra.mxu0 %v1224
    %1350 = vmatpush.bf16.msra.mxu0 %v1223
    %1351 = vmatpush.bf16.msra.mxu0 %v1222
    %1352 = vmatpush.bf16.msra.mxu0 %v1221
    %1353 = vmatpush.bf16.msra.mxu0 %v1220
    %1354 = vmatmul.bf16.gmra.mxu0 %v1345
    %v1355 = vpop.f32.mrf.mxu0
    %v1356 = vadd.f32 %v1186, %v1355
    %v1357 = vpop.f32.mrf.mxu0
    %1358 = vdwg.mxu0
    %v1359 = vmax.f32 %v1356, 0.0
    %v1360 = vsub.f32 0.0, %v1359
    %v1361 = vmul.f32 %v1360, 1.442695
    %v1362 = vpow.pop %v1361
    %v1363 = vadd.f32 %v1362, 1.0
    %v1364 = vrcp.pop %v1363
    %s1365 = scalar_lea.vmem %s15, 8
    %1366 = vst.msk [vmem:[%s1365] sm:$0xff] %vm1255, %v1364
    %s1367 = scalar_lea.vmem [#allocation6], 128
    %v1368 = vld [vmem:[%s1367] sm:$0xf]
    %v1369 = vld [vmem:[%s1367 + $0x4] sm:$0xf]
    %v1370 = vld [vmem:[%s1367 + $0x8] sm:$0xf]
    %v1371 = vld [vmem:[%s1367 + $0xc] sm:$0xf]
    %v1372 = vld [vmem:[%s1367 + $0x10] sm:$0xf]
    %v1373 = vld [vmem:[%s1367 + $0x14] sm:$0xf]
    %v1374 = vld [vmem:[%s1367 + $0x18] sm:$0xf]
    %v1375 = vld [vmem:[%s1367 + $0x1c] sm:$0xf]
    %v1376 = vld [vmem:[%s1367 + $0x20] sm:$0xf]
    %v1377 = vld [vmem:[%s1367 + $0x24] sm:$0xf]
    %v1378 = vld [vmem:[%s1367 + $0x28] sm:$0xf]
    %v1379 = vld [vmem:[%s1367 + $0x2c] sm:$0xf]
    %v1380 = vld [vmem:[%s1367 + $0x30] sm:$0xf]
    %v1381 = vld [vmem:[%s1367 + $0x34] sm:$0xf]
    %v1382 = vld [vmem:[%s1367 + $0x38] sm:$0xf]
    %v1383 = vld [vmem:[%s1367 + $0x3c] sm:$0xf]
    %s1384 = scalar_lea.vmem [#allocation7], 2
    %v1385 = vld [vmem:[%s1384] sm:$0x1]
    %v1387 = vperm.slane %v1385, 0
    %v1405 = vunpack.c.l.b16 %v1368
    %v1406 = vunpack.c.l.b16 %v1369
    %v1407 = vunpack.c.l.b16 %v1370
    %v1408 = vunpack.c.l.b16 %v1371
    %v1409 = vunpack.c.l.b16 %v1372
    %v1410 = vunpack.c.l.b16 %v1373
    %v1411 = vunpack.c.l.b16 %v1374
    %v1412 = vunpack.c.l.b16 %v1375
    %v1413 = vunpack.c.l.b16 %v1376
    %v1414 = vunpack.c.l.b16 %v1377
    %v1415 = vunpack.c.l.b16 %v1378
    %v1416 = vunpack.c.l.b16 %v1379
    %v1417 = vunpack.c.l.b16 %v1380
    %v1418 = vunpack.c.l.b16 %v1381
    %v1419 = vunpack.c.l.b16 %v1382
    %v1420 = vunpack.c.l.b16 %v1383
    %v1421 = vpack.c.b16 %v1406, %v1405
    %v1422 = vpack.c.b16 %v1408, %v1407
    %v1423 = vpack.c.b16 %v1410, %v1409
    %v1424 = vpack.c.b16 %v1412, %v1411
    %v1425 = vpack.c.b16 %v1414, %v1413
    %v1426 = vpack.c.b16 %v1416, %v1415
    %v1427 = vpack.c.b16 %v1418, %v1417
    %v1428 = vpack.c.b16 %v1420, %v1419
    %1437 = vmatpush.bf16.msra.mxu0 %v1428
    %1438 = vmatpush.bf16.msra.mxu0 %v1427
    %1439 = vmatpush.bf16.msra.mxu0 %v1426
    %1440 = vmatpush.bf16.msra.mxu0 %v1425
    %1441 = vmatpush.bf16.msra.mxu0 %v1424
    %1442 = vmatpush.bf16.msra.mxu0 %v1423
    %1443 = vmatpush.bf16.msra.mxu0 %v1422
    %1444 = vmatpush.bf16.msra.mxu0 %v1421
    %1445 = vmatmul.bf16.gmra.mxu0 %v1080
    %v1446 = vpop.f32.mrf.mxu0
    %v1447 = vadd.f32 %v1387, %v1446
    %v1448 = vpop.f32.mrf.mxu0
    %1449 = vdwg.mxu0
    %v1450 = vsub.f32 0.0, %v1447
    %v1451 = vmul.f32 %v1450, 1.442695
    %v1452 = vpow.pop %v1451
    %v1453 = vadd.f32 %v1452, 1.0
    %v1454 = vrcp.pop %v1453
    %v1455 = vpack.c.bf16 %v1454, %v1454
    %1456 = vmatpush.bf16.msra.mxu0 %v1227
    %1457 = vmatpush.bf16.msra.mxu0 %v1226
    %1458 = vmatpush.bf16.msra.mxu0 %v1225
    %1459 = vmatpush.bf16.msra.mxu0 %v1224
    %1460 = vmatpush.bf16.msra.mxu0 %v1223
    %1461 = vmatpush.bf16.msra.mxu0 %v1222
    %1462 = vmatpush.bf16.msra.mxu0 %v1221
    %1463 = vmatpush.bf16.msra.mxu0 %v1220
    %1464 = vmatmul.bf16.gmra.mxu0 %v1455
    %v1465 = vpop.f32.mrf.mxu0
    %v1466 = vadd.f32 %v1186, %v1465
    %v1467 = vpop.f32.mrf.mxu0
    %1468 = vdwg.mxu0
    %v1469 = vmax.f32 %v1466, 0.0
    %v1470 = vsub.f32 0.0, %v1469
    %v1471 = vmul.f32 %v1470, 1.442695
    %v1472 = vpow.pop %v1471
    %v1473 = vadd.f32 %v1472, 1.0
    %v1474 = vrcp.pop %v1473
    %s1475 = scalar_lea.vmem %s15, 16
    %1476 = vst.msk [vmem:[%s1475] sm:$0xff] %vm1255, %v1474
    %s1477 = scalar_lea.vmem [#allocation6], 192
    %v1478 = vld [vmem:[%s1477] sm:$0xf]
    %v1479 = vld [vmem:[%s1477 + $0x4] sm:$0xf]
    %v1480 = vld [vmem:[%s1477 + $0x8] sm:$0xf]
    %v1481 = vld [vmem:[%s1477 + $0xc] sm:$0xf]
    %v1482 = vld [vmem:[%s1477 + $0x10] sm:$0xf]
    %v1483 = vld [vmem:[%s1477 + $0x14] sm:$0xf]
    %v1484 = vld [vmem:[%s1477 + $0x18] sm:$0xf]
    %v1485 = vld [vmem:[%s1477 + $0x1c] sm:$0xf]
    %v1486 = vld [vmem:[%s1477 + $0x20] sm:$0xf]
    %v1487 = vld [vmem:[%s1477 + $0x24] sm:$0xf]
    %v1488 = vld [vmem:[%s1477 + $0x28] sm:$0xf]
    %v1489 = vld [vmem:[%s1477 + $0x2c] sm:$0xf]
    %v1490 = vld [vmem:[%s1477 + $0x30] sm:$0xf]
    %v1491 = vld [vmem:[%s1477 + $0x34] sm:$0xf]
    %v1492 = vld [vmem:[%s1477 + $0x38] sm:$0xf]
    %v1493 = vld [vmem:[%s1477 + $0x3c] sm:$0xf]
    %s1494 = scalar_lea.vmem [#allocation7], 3
    %v1495 = vld [vmem:[%s1494] sm:$0x1]
    %v1497 = vperm.slane %v1495, 0
    %v1515 = vunpack.c.l.b16 %v1478
    %v1516 = vunpack.c.l.b16 %v1479
    %v1517 = vunpack.c.l.b16 %v1480
    %v1518 = vunpack.c.l.b16 %v1481
    %v1519 = vunpack.c.l.b16 %v1482
    %v1520 = vunpack.c.l.b16 %v1483
    %v1521 = vunpack.c.l.b16 %v1484
    %v1522 = vunpack.c.l.b16 %v1485
    %v1523 = vunpack.c.l.b16 %v1486
    %v1524 = vunpack.c.l.b16 %v1487
    %v1525 = vunpack.c.l.b16 %v1488
    %v1526 = vunpack.c.l.b16 %v1489
    %v1527 = vunpack.c.l.b16 %v1490
    %v1528 = vunpack.c.l.b16 %v1491
    %v1529 = vunpack.c.l.b16 %v1492
    %v1530 = vunpack.c.l.b16 %v1493
    %v1531 = vpack.c.b16 %v1516, %v1515
    %v1532 = vpack.c.b16 %v1518, %v1517
    %v1533 = vpack.c.b16 %v1520, %v1519
    %v1534 = vpack.c.b16 %v1522, %v1521
    %v1535 = vpack.c.b16 %v1524, %v1523
    %v1536 = vpack.c.b16 %v1526, %v1525
    %v1537 = vpack.c.b16 %v1528, %v1527
    %v1538 = vpack.c.b16 %v1530, %v1529
    %1547 = vmatpush.bf16.msra.mxu0 %v1538
    %1548 = vmatpush.bf16.msra.mxu0 %v1537
    %1549 = vmatpush.bf16.msra.mxu0 %v1536
    %1550 = vmatpush.bf16.msra.mxu0 %v1535
    %1551 = vmatpush.bf16.msra.mxu0 %v1534
    %1552 = vmatpush.bf16.msra.mxu0 %v1533
    %1553 = vmatpush.bf16.msra.mxu0 %v1532
    %1554 = vmatpush.bf16.msra.mxu0 %v1531
    %1555 = vmatmul.bf16.gmra.mxu0 %v1080
    %v1556 = vpop.f32.mrf.mxu0
    %v1557 = vadd.f32 %v1497, %v1556
    %v1558 = vpop.f32.mrf.mxu0
    %1559 = vdwg.mxu0
    %v1560 = vsub.f32 0.0, %v1557
    %v1561 = vmul.f32 %v1560, 1.442695
    %v1562 = vpow.pop %v1561
    %v1563 = vadd.f32 %v1562, 1.0
    %v1564 = vrcp.pop %v1563
    %v1565 = vpack.c.bf16 %v1564, %v1564
    %1566 = vmatpush.bf16.msra.mxu0 %v1227
    %1567 = vmatpush.bf16.msra.mxu0 %v1226
    %1568 = vmatpush.bf16.msra.mxu0 %v1225
    %1569 = vmatpush.bf16.msra.mxu0 %v1224
    %1570 = vmatpush.bf16.msra.mxu0 %v1223
    %1571 = vmatpush.bf16.msra.mxu0 %v1222
    %1572 = vmatpush.bf16.msra.mxu0 %v1221
    %1573 = vmatpush.bf16.msra.mxu0 %v1220
    %1574 = vmatmul.bf16.gmra.mxu0 %v1565
    %v1575 = vpop.f32.mrf.mxu0
    %v1576 = vadd.f32 %v1186, %v1575
    %v1577 = vpop.f32.mrf.mxu0
    %1578 = vdwg.mxu0
    %v1579 = vmax.f32 %v1576, 0.0
    %v1580 = vsub.f32 0.0, %v1579
    %v1581 = vmul.f32 %v1580, 1.442695
    %v1582 = vpow.pop %v1581
    %v1583 = vadd.f32 %v1582, 1.0
    %v1584 = vrcp.pop %v1583
    %s1585 = scalar_lea.vmem %s15, 24
    %1586 = vst.msk [vmem:[%s1585] sm:$0xff] %vm1255, %v1584
    %s1587 = scalar_lea.vmem [#allocation6], 256
    %v1588 = vld [vmem:[%s1587] sm:$0xf]
    %v1589 = vld [vmem:[%s1587 + $0x4] sm:$0xf]
    %v1590 = vld [vmem:[%s1587 + $0x8] sm:$0xf]
    %v1591 = vld [vmem:[%s1587 + $0xc] sm:$0xf]
    %v1592 = vld [vmem:[%s1587 + $0x10] sm:$0xf]
    %v1593 = vld [vmem:[%s1587 + $0x14] sm:$0xf]
    %v1594 = vld [vmem:[%s1587 + $0x18] sm:$0xf]
    %v1595 = vld [vmem:[%s1587 + $0x1c] sm:$0xf]
    %v1596 = vld [vmem:[%s1587 + $0x20] sm:$0xf]
    %v1597 = vld [vmem:[%s1587 + $0x24] sm:$0xf]
    %v1598 = vld [vmem:[%s1587 + $0x28] sm:$0xf]
    %v1599 = vld [vmem:[%s1587 + $0x2c] sm:$0xf]
    %v1600 = vld [vmem:[%s1587 + $0x30] sm:$0xf]
    %v1601 = vld [vmem:[%s1587 + $0x34] sm:$0xf]
    %v1602 = vld [vmem:[%s1587 + $0x38] sm:$0xf]
    %v1603 = vld [vmem:[%s1587 + $0x3c] sm:$0xf]
    %s1604 = scalar_lea.vmem [#allocation7], 4
    %v1605 = vld [vmem:[%s1604] sm:$0x1]
    %v1607 = vperm.slane %v1605, 0
    %v1625 = vunpack.c.l.b16 %v1588
    %v1626 = vunpack.c.l.b16 %v1589
    %v1627 = vunpack.c.l.b16 %v1590
    %v1628 = vunpack.c.l.b16 %v1591
    %v1629 = vunpack.c.l.b16 %v1592
    %v1630 = vunpack.c.l.b16 %v1593
    %v1631 = vunpack.c.l.b16 %v1594
    %v1632 = vunpack.c.l.b16 %v1595
    %v1633 = vunpack.c.l.b16 %v1596
    %v1634 = vunpack.c.l.b16 %v1597
    %v1635 = vunpack.c.l.b16 %v1598
    %v1636 = vunpack.c.l.b16 %v1599
    %v1637 = vunpack.c.l.b16 %v1600
    %v1638 = vunpack.c.l.b16 %v1601
    %v1639 = vunpack.c.l.b16 %v1602
    %v1640 = vunpack.c.l.b16 %v1603
    %v1641 = vpack.c.b16 %v1626, %v1625
    %v1642 = vpack.c.b16 %v1628, %v1627
    %v1643 = vpack.c.b16 %v1630, %v1629
    %v1644 = vpack.c.b16 %v1632, %v1631
    %v1645 = vpack.c.b16 %v1634, %v1633
    %v1646 = vpack.c.b16 %v1636, %v1635
    %v1647 = vpack.c.b16 %v1638, %v1637
    %v1648 = vpack.c.b16 %v1640, %v1639
    %1657 = vmatpush.bf16.msra.mxu0 %v1648
    %1658 = vmatpush.bf16.msra.mxu0 %v1647
    %1659 = vmatpush.bf16.msra.mxu0 %v1646
    %1660 = vmatpush.bf16.msra.mxu0 %v1645
    %1661 = vmatpush.bf16.msra.mxu0 %v1644
    %1662 = vmatpush.bf16.msra.mxu0 %v1643
    %1663 = vmatpush.bf16.msra.mxu0 %v1642
    %1664 = vmatpush.bf16.msra.mxu0 %v1641
    %1665 = vmatmul.bf16.gmra.mxu0 %v1080
    %v1666 = vpop.f32.mrf.mxu0
    %v1667 = vadd.f32 %v1607, %v1666
    %v1668 = vpop.f32.mrf.mxu0
    %1669 = vdwg.mxu0
    %v1670 = vsub.f32 0.0, %v1667
    %v1671 = vmul.f32 %v1670, 1.442695
    %v1672 = vpow.pop %v1671
    %v1673 = vadd.f32 %v1672, 1.0
    %v1674 = vrcp.pop %v1673
    %v1675 = vpack.c.bf16 %v1674, %v1674
    %1676 = vmatpush.bf16.msra.mxu0 %v1227
    %1677 = vmatpush.bf16.msra.mxu0 %v1226
    %1678 = vmatpush.bf16.msra.mxu0 %v1225
    %1679 = vmatpush.bf16.msra.mxu0 %v1224
    %1680 = vmatpush.bf16.msra.mxu0 %v1223
    %1681 = vmatpush.bf16.msra.mxu0 %v1222
    %1682 = vmatpush.bf16.msra.mxu0 %v1221
    %1683 = vmatpush.bf16.msra.mxu0 %v1220
    %1684 = vmatmul.bf16.gmra.mxu0 %v1675
    %v1685 = vpop.f32.mrf.mxu0
    %v1686 = vadd.f32 %v1186, %v1685
    %v1687 = vpop.f32.mrf.mxu0
    %1688 = vdwg.mxu0
    %v1689 = vmax.f32 %v1686, 0.0
    %v1690 = vsub.f32 0.0, %v1689
    %v1691 = vmul.f32 %v1690, 1.442695
    %v1692 = vpow.pop %v1691
    %v1693 = vadd.f32 %v1692, 1.0
    %v1694 = vrcp.pop %v1693
    %s1695 = scalar_lea.vmem %s15, 32
    %1696 = vst.msk [vmem:[%s1695] sm:$0xff] %vm1255, %v1694
    %s1697 = scalar_lea.vmem [#allocation6], 320
    %v1698 = vld [vmem:[%s1697] sm:$0xf]
    %v1699 = vld [vmem:[%s1697 + $0x4] sm:$0xf]
    %v1700 = vld [vmem:[%s1697 + $0x8] sm:$0xf]
    %v1701 = vld [vmem:[%s1697 + $0xc] sm:$0xf]
    %v1702 = vld [vmem:[%s1697 + $0x10] sm:$0xf]
    %v1703 = vld [vmem:[%s1697 + $0x14] sm:$0xf]
    %v1704 = vld [vmem:[%s1697 + $0x18] sm:$0xf]
    %v1705 = vld [vmem:[%s1697 + $0x1c] sm:$0xf]
    %v1706 = vld [vmem:[%s1697 + $0x20] sm:$0xf]
    %v1707 = vld [vmem:[%s1697 + $0x24] sm:$0xf]
    %v1708 = vld [vmem:[%s1697 + $0x28] sm:$0xf]
    %v1709 = vld [vmem:[%s1697 + $0x2c] sm:$0xf]
    %v1710 = vld [vmem:[%s1697 + $0x30] sm:$0xf]
    %v1711 = vld [vmem:[%s1697 + $0x34] sm:$0xf]
    %v1712 = vld [vmem:[%s1697 + $0x38] sm:$0xf]
    %v1713 = vld [vmem:[%s1697 + $0x3c] sm:$0xf]
    %s1714 = scalar_lea.vmem [#allocation7], 5
    %v1715 = vld [vmem:[%s1714] sm:$0x1]
    %v1717 = vperm.slane %v1715, 0
    %v1735 = vunpack.c.l.b16 %v1698
    %v1736 = vunpack.c.l.b16 %v1699
    %v1737 = vunpack.c.l.b16 %v1700
    %v1738 = vunpack.c.l.b16 %v1701
    %v1739 = vunpack.c.l.b16 %v1702
    %v1740 = vunpack.c.l.b16 %v1703
    %v1741 = vunpack.c.l.b16 %v1704
    %v1742 = vunpack.c.l.b16 %v1705
    %v1743 = vunpack.c.l.b16 %v1706
    %v1744 = vunpack.c.l.b16 %v1707
    %v1745 = vunpack.c.l.b16 %v1708
    %v1746 = vunpack.c.l.b16 %v1709
    %v1747 = vunpack.c.l.b16 %v1710
    %v1748 = vunpack.c.l.b16 %v1711
    %v1749 = vunpack.c.l.b16 %v1712
    %v1750 = vunpack.c.l.b16 %v1713
    %v1751 = vpack.c.b16 %v1736, %v1735
    %v1752 = vpack.c.b16 %v1738, %v1737
    %v1753 = vpack.c.b16 %v1740, %v1739
    %v1754 = vpack.c.b16 %v1742, %v1741
    %v1755 = vpack.c.b16 %v1744, %v1743
    %v1756 = vpack.c.b16 %v1746, %v1745
    %v1757 = vpack.c.b16 %v1748, %v1747
    %v1758 = vpack.c.b16 %v1750, %v1749
    %1767 = vmatpush.bf16.msra.mxu0 %v1758
    %1768 = vmatpush.bf16.msra.mxu0 %v1757
    %1769 = vmatpush.bf16.msra.mxu0 %v1756
    %1770 = vmatpush.bf16.msra.mxu0 %v1755
    %1771 = vmatpush.bf16.msra.mxu0 %v1754
    %1772 = vmatpush.bf16.msra.mxu0 %v1753
    %1773 = vmatpush.bf16.msra.mxu0 %v1752
    %1774 = vmatpush.bf16.msra.mxu0 %v1751
    %1775 = vmatmul.bf16.gmra.mxu0 %v1080
    %v1776 = vpop.f32.mrf.mxu0
    %v1777 = vadd.f32 %v1717, %v1776
    %v1778 = vpop.f32.mrf.mxu0
    %1779 = vdwg.mxu0
    %v1780 = vsub.f32 0.0, %v1777
    %v1781 = vmul.f32 %v1780, 1.442695
    %v1782 = vpow.pop %v1781
    %v1783 = vadd.f32 %v1782, 1.0
    %v1784 = vrcp.pop %v1783
    %v1785 = vpack.c.bf16 %v1784, %v1784
    %1786 = vmatpush.bf16.msra.mxu0 %v1227
    %1787 = vmatpush.bf16.msra.mxu0 %v1226
    %1788 = vmatpush.bf16.msra.mxu0 %v1225
    %1789 = vmatpush.bf16.msra.mxu0 %v1224
    %1790 = vmatpush.bf16.msra.mxu0 %v1223
    %1791 = vmatpush.bf16.msra.mxu0 %v1222
    %1792 = vmatpush.bf16.msra.mxu0 %v1221
    %1793 = vmatpush.bf16.msra.mxu0 %v1220
    %1794 = vmatmul.bf16.gmra.mxu0 %v1785
    %v1795 = vpop.f32.mrf.mxu0
    %v1796 = vadd.f32 %v1186, %v1795
    %v1797 = vpop.f32.mrf.mxu0
    %1798 = vdwg.mxu0
    %v1799 = vmax.f32 %v1796, 0.0
    %v1800 = vsub.f32 0.0, %v1799
    %v1801 = vmul.f32 %v1800, 1.442695
    %v1802 = vpow.pop %v1801
    %v1803 = vadd.f32 %v1802, 1.0
    %v1804 = vrcp.pop %v1803
    %s1805 = scalar_lea.vmem %s15, 40
    %1806 = vst.msk [vmem:[%s1805] sm:$0xff] %vm1255, %v1804
    %s1807 = scalar_lea.vmem [#allocation6], 384
    %v1808 = vld [vmem:[%s1807] sm:$0xf]
    %v1809 = vld [vmem:[%s1807 + $0x4] sm:$0xf]
    %v1810 = vld [vmem:[%s1807 + $0x8] sm:$0xf]
    %v1811 = vld [vmem:[%s1807 + $0xc] sm:$0xf]
    %v1812 = vld [vmem:[%s1807 + $0x10] sm:$0xf]
    %v1813 = vld [vmem:[%s1807 + $0x14] sm:$0xf]
    %v1814 = vld [vmem:[%s1807 + $0x18] sm:$0xf]
    %v1815 = vld [vmem:[%s1807 + $0x1c] sm:$0xf]
    %v1816 = vld [vmem:[%s1807 + $0x20] sm:$0xf]
    %v1817 = vld [vmem:[%s1807 + $0x24] sm:$0xf]
    %v1818 = vld [vmem:[%s1807 + $0x28] sm:$0xf]
    %v1819 = vld [vmem:[%s1807 + $0x2c] sm:$0xf]
    %v1820 = vld [vmem:[%s1807 + $0x30] sm:$0xf]
    %v1821 = vld [vmem:[%s1807 + $0x34] sm:$0xf]
    %v1822 = vld [vmem:[%s1807 + $0x38] sm:$0xf]
    %v1823 = vld [vmem:[%s1807 + $0x3c] sm:$0xf]
    %s1824 = scalar_lea.vmem [#allocation7], 6
    %v1825 = vld [vmem:[%s1824] sm:$0x1]
    %v1827 = vperm.slane %v1825, 0
    %v1845 = vunpack.c.l.b16 %v1808
    %v1846 = vunpack.c.l.b16 %v1809
    %v1847 = vunpack.c.l.b16 %v1810
    %v1848 = vunpack.c.l.b16 %v1811
    %v1849 = vunpack.c.l.b16 %v1812
    %v1850 = vunpack.c.l.b16 %v1813
    %v1851 = vunpack.c.l.b16 %v1814
    %v1852 = vunpack.c.l.b16 %v1815
    %v1853 = vunpack.c.l.b16 %v1816
    %v1854 = vunpack.c.l.b16 %v1817
    %v1855 = vunpack.c.l.b16 %v1818
    %v1856 = vunpack.c.l.b16 %v1819
    %v1857 = vunpack.c.l.b16 %v1820
    %v1858 = vunpack.c.l.b16 %v1821
    %v1859 = vunpack.c.l.b16 %v1822
    %v1860 = vunpack.c.l.b16 %v1823
    %v1861 = vpack.c.b16 %v1846, %v1845
    %v1862 = vpack.c.b16 %v1848, %v1847
    %v1863 = vpack.c.b16 %v1850, %v1849
    %v1864 = vpack.c.b16 %v1852, %v1851
    %v1865 = vpack.c.b16 %v1854, %v1853
    %v1866 = vpack.c.b16 %v1856, %v1855
    %v1867 = vpack.c.b16 %v1858, %v1857
    %v1868 = vpack.c.b16 %v1860, %v1859
    %1877 = vmatpush.bf16.msra.mxu0 %v1868
    %1878 = vmatpush.bf16.msra.mxu0 %v1867
    %1879 = vmatpush.bf16.msra.mxu0 %v1866
    %1880 = vmatpush.bf16.msra.mxu0 %v1865
    %1881 = vmatpush.bf16.msra.mxu0 %v1864
    %1882 = vmatpush.bf16.msra.mxu0 %v1863
    %1883 = vmatpush.bf16.msra.mxu0 %v1862
    %1884 = vmatpush.bf16.msra.mxu0 %v1861
    %1885 = vmatmul.bf16.gmra.mxu0 %v1080
    %v1886 = vpop.f32.mrf.mxu0
    %v1887 = vadd.f32 %v1827, %v1886
    %v1888 = vpop.f32.mrf.mxu0
    %1889 = vdwg.mxu0
    %v1890 = vsub.f32 0.0, %v1887
    %v1891 = vmul.f32 %v1890, 1.442695
    %v1892 = vpow.pop %v1891
    %v1893 = vadd.f32 %v1892, 1.0
    %v1894 = vrcp.pop %v1893
    %v1895 = vpack.c.bf16 %v1894, %v1894
    %1896 = vmatpush.bf16.msra.mxu0 %v1227
    %1897 = vmatpush.bf16.msra.mxu0 %v1226
    %1898 = vmatpush.bf16.msra.mxu0 %v1225
    %1899 = vmatpush.bf16.msra.mxu0 %v1224
    %1900 = vmatpush.bf16.msra.mxu0 %v1223
    %1901 = vmatpush.bf16.msra.mxu0 %v1222
    %1902 = vmatpush.bf16.msra.mxu0 %v1221
    %1903 = vmatpush.bf16.msra.mxu0 %v1220
    %1904 = vmatmul.bf16.gmra.mxu0 %v1895
    %v1905 = vpop.f32.mrf.mxu0
    %v1906 = vadd.f32 %v1186, %v1905
    %v1907 = vpop.f32.mrf.mxu0
    %1908 = vdwg.mxu0
    %v1909 = vmax.f32 %v1906, 0.0
    %v1910 = vsub.f32 0.0, %v1909
    %v1911 = vmul.f32 %v1910, 1.442695
    %v1912 = vpow.pop %v1911
    %v1913 = vadd.f32 %v1912, 1.0
    %v1914 = vrcp.pop %v1913
    %s1915 = scalar_lea.vmem %s15, 48
    %1916 = vst.msk [vmem:[%s1915] sm:$0xff] %vm1255, %v1914
    %s1917 = scalar_lea.vmem [#allocation6], 448
    %v1918 = vld [vmem:[%s1917] sm:$0xf]
    %v1919 = vld [vmem:[%s1917 + $0x4] sm:$0xf]
    %v1920 = vld [vmem:[%s1917 + $0x8] sm:$0xf]
    %v1921 = vld [vmem:[%s1917 + $0xc] sm:$0xf]
    %v1922 = vld [vmem:[%s1917 + $0x10] sm:$0xf]
    %v1923 = vld [vmem:[%s1917 + $0x14] sm:$0xf]
    %v1924 = vld [vmem:[%s1917 + $0x18] sm:$0xf]
    %v1925 = vld [vmem:[%s1917 + $0x1c] sm:$0xf]
    %v1926 = vld [vmem:[%s1917 + $0x20] sm:$0xf]
    %v1927 = vld [vmem:[%s1917 + $0x24] sm:$0xf]
    %v1928 = vld [vmem:[%s1917 + $0x28] sm:$0xf]
    %v1929 = vld [vmem:[%s1917 + $0x2c] sm:$0xf]
    %v1930 = vld [vmem:[%s1917 + $0x30] sm:$0xf]
    %v1931 = vld [vmem:[%s1917 + $0x34] sm:$0xf]
    %v1932 = vld [vmem:[%s1917 + $0x38] sm:$0xf]
    %v1933 = vld [vmem:[%s1917 + $0x3c] sm:$0xf]
    %s1934 = scalar_lea.vmem [#allocation7], 7
    %v1935 = vld [vmem:[%s1934] sm:$0x1]
    %v1937 = vperm.slane %v1935, 0
    %v1955 = vunpack.c.l.b16 %v1918
    %v1956 = vunpack.c.l.b16 %v1919
    %v1957 = vunpack.c.l.b16 %v1920
    %v1958 = vunpack.c.l.b16 %v1921
    %v1959 = vunpack.c.l.b16 %v1922
    %v1960 = vunpack.c.l.b16 %v1923
    %v1961 = vunpack.c.l.b16 %v1924
    %v1962 = vunpack.c.l.b16 %v1925
    %v1963 = vunpack.c.l.b16 %v1926
    %v1964 = vunpack.c.l.b16 %v1927
    %v1965 = vunpack.c.l.b16 %v1928
    %v1966 = vunpack.c.l.b16 %v1929
    %v1967 = vunpack.c.l.b16 %v1930
    %v1968 = vunpack.c.l.b16 %v1931
    %v1969 = vunpack.c.l.b16 %v1932
    %v1970 = vunpack.c.l.b16 %v1933
    %v1971 = vpack.c.b16 %v1956, %v1955
    %v1972 = vpack.c.b16 %v1958, %v1957
    %v1973 = vpack.c.b16 %v1960, %v1959
    %v1974 = vpack.c.b16 %v1962, %v1961
    %v1975 = vpack.c.b16 %v1964, %v1963
    %v1976 = vpack.c.b16 %v1966, %v1965
    %v1977 = vpack.c.b16 %v1968, %v1967
    %v1978 = vpack.c.b16 %v1970, %v1969
    %1987 = vmatpush.bf16.msra.mxu0 %v1978
    %1988 = vmatpush.bf16.msra.mxu0 %v1977
    %1989 = vmatpush.bf16.msra.mxu0 %v1976
    %1990 = vmatpush.bf16.msra.mxu0 %v1975
    %1991 = vmatpush.bf16.msra.mxu0 %v1974
    %1992 = vmatpush.bf16.msra.mxu0 %v1973
    %1993 = vmatpush.bf16.msra.mxu0 %v1972
    %1994 = vmatpush.bf16.msra.mxu0 %v1971
    %1995 = vmatmul.bf16.gmra.mxu0 %v1080
    %v1996 = vpop.f32.mrf.mxu0
    %v1997 = vadd.f32 %v1937, %v1996
    %v1998 = vpop.f32.mrf.mxu0
    %1999 = vdwg.mxu0
    %v2000 = vsub.f32 0.0, %v1997
    %v2001 = vmul.f32 %v2000, 1.442695
    %v2002 = vpow.pop %v2001
    %v2003 = vadd.f32 %v2002, 1.0
    %v2004 = vrcp.pop %v2003
    %v2005 = vpack.c.bf16 %v2004, %v2004
    %2006 = vmatpush.bf16.msra.mxu0 %v1227
    %2007 = vmatpush.bf16.msra.mxu0 %v1226
    %2008 = vmatpush.bf16.msra.mxu0 %v1225
    %2009 = vmatpush.bf16.msra.mxu0 %v1224
    %2010 = vmatpush.bf16.msra.mxu0 %v1223
    %2011 = vmatpush.bf16.msra.mxu0 %v1222
    %2012 = vmatpush.bf16.msra.mxu0 %v1221
    %2013 = vmatpush.bf16.msra.mxu0 %v1220
    %2014 = vmatmul.bf16.gmra.mxu0 %v2005
    %v2015 = vpop.f32.mrf.mxu0
    %v2016 = vadd.f32 %v1186, %v2015
    %v2017 = vpop.f32.mrf.mxu0
    %2018 = vdwg.mxu0
    %v2019 = vmax.f32 %v2016, 0.0
    %v2020 = vsub.f32 0.0, %v2019
    %v2021 = vmul.f32 %v2020, 1.442695
    %v2022 = vpow.pop %v2021
    %v2023 = vadd.f32 %v2022, 1.0
    %v2024 = vrcp.pop %v2023
    %s2025 = scalar_lea.vmem %s15, 56
    %2026 = vst.msk [vmem:[%s2025] sm:$0xff] %vm1255, %v2024
    %s2027 = scalar_lea.vmem [#allocation6], 512
    %v2028 = vld [vmem:[%s2027] sm:$0xf]
    %v2029 = vld [vmem:[%s2027 + $0x4] sm:$0xf]
    %v2030 = vld [vmem:[%s2027 + $0x8] sm:$0xf]
    %v2031 = vld [vmem:[%s2027 + $0xc] sm:$0xf]
    %v2032 = vld [vmem:[%s2027 + $0x10] sm:$0xf]
    %v2033 = vld [vmem:[%s2027 + $0x14] sm:$0xf]
    %v2034 = vld [vmem:[%s2027 + $0x18] sm:$0xf]
    %v2035 = vld [vmem:[%s2027 + $0x1c] sm:$0xf]
    %v2036 = vld [vmem:[%s2027 + $0x20] sm:$0xf]
    %v2037 = vld [vmem:[%s2027 + $0x24] sm:$0xf]
    %v2038 = vld [vmem:[%s2027 + $0x28] sm:$0xf]
    %v2039 = vld [vmem:[%s2027 + $0x2c] sm:$0xf]
    %v2040 = vld [vmem:[%s2027 + $0x30] sm:$0xf]
    %v2041 = vld [vmem:[%s2027 + $0x34] sm:$0xf]
    %v2042 = vld [vmem:[%s2027 + $0x38] sm:$0xf]
    %v2043 = vld [vmem:[%s2027 + $0x3c] sm:$0xf]
    %s2044 = scalar_lea.vmem [#allocation7], 8
    %v2045 = vld [vmem:[%s2044] sm:$0x1]
    %v2047 = vperm.slane %v2045, 0
    %v2065 = vunpack.c.l.b16 %v2028
    %v2066 = vunpack.c.l.b16 %v2029
    %v2067 = vunpack.c.l.b16 %v2030
    %v2068 = vunpack.c.l.b16 %v2031
    %v2069 = vunpack.c.l.b16 %v2032
    %v2070 = vunpack.c.l.b16 %v2033
    %v2071 = vunpack.c.l.b16 %v2034
    %v2072 = vunpack.c.l.b16 %v2035
    %v2073 = vunpack.c.l.b16 %v2036
    %v2074 = vunpack.c.l.b16 %v2037
    %v2075 = vunpack.c.l.b16 %v2038
    %v2076 = vunpack.c.l.b16 %v2039
    %v2077 = vunpack.c.l.b16 %v2040
    %v2078 = vunpack.c.l.b16 %v2041
    %v2079 = vunpack.c.l.b16 %v2042
    %v2080 = vunpack.c.l.b16 %v2043
    %v2081 = vpack.c.b16 %v2066, %v2065
    %v2082 = vpack.c.b16 %v2068, %v2067
    %v2083 = vpack.c.b16 %v2070, %v2069
    %v2084 = vpack.c.b16 %v2072, %v2071
    %v2085 = vpack.c.b16 %v2074, %v2073
    %v2086 = vpack.c.b16 %v2076, %v2075
    %v2087 = vpack.c.b16 %v2078, %v2077
    %v2088 = vpack.c.b16 %v2080, %v2079
    %2097 = vmatpush.bf16.msra.mxu0 %v2088
    %2098 = vmatpush.bf16.msra.mxu0 %v2087
    %2099 = vmatpush.bf16.msra.mxu0 %v2086
    %2100 = vmatpush.bf16.msra.mxu0 %v2085
    %2101 = vmatpush.bf16.msra.mxu0 %v2084
    %2102 = vmatpush.bf16.msra.mxu0 %v2083
    %2103 = vmatpush.bf16.msra.mxu0 %v2082
    %2104 = vmatpush.bf16.msra.mxu0 %v2081
    %2105 = vmatmul.bf16.gmra.mxu0 %v1080
    %v2106 = vpop.f32.mrf.mxu0
    %v2107 = vadd.f32 %v2047, %v2106
    %v2108 = vpop.f32.mrf.mxu0
    %2109 = vdwg.mxu0
    %v2110 = vsub.f32 0.0, %v2107
    %v2111 = vmul.f32 %v2110, 1.442695
    %v2112 = vpow.pop %v2111
    %v2113 = vadd.f32 %v2112, 1.0
    %v2114 = vrcp.pop %v2113
    %v2115 = vpack.c.bf16 %v2114, %v2114
    %2116 = vmatpush.bf16.msra.mxu0 %v1227
    %2117 = vmatpush.bf16.msra.mxu0 %v1226
    %2118 = vmatpush.bf16.msra.mxu0 %v1225
    %2119 = vmatpush.bf16.msra.mxu0 %v1224
    %2120 = vmatpush.bf16.msra.mxu0 %v1223
    %2121 = vmatpush.bf16.msra.mxu0 %v1222
    %2122 = vmatpush.bf16.msra.mxu0 %v1221
    %2123 = vmatpush.bf16.msra.mxu0 %v1220
    %2124 = vmatmul.bf16.gmra.mxu0 %v2115
    %v2125 = vpop.f32.mrf.mxu0
    %v2126 = vadd.f32 %v1186, %v2125
    %v2127 = vpop.f32.mrf.mxu0
    %2128 = vdwg.mxu0
    %v2129 = vmax.f32 %v2126, 0.0
    %v2130 = vsub.f32 0.0, %v2129
    %v2131 = vmul.f32 %v2130, 1.442695
    %v2132 = vpow.pop %v2131
    %v2133 = vadd.f32 %v2132, 1.0
    %v2134 = vrcp.pop %v2133
    %s2135 = scalar_lea.vmem %s15, 64
    %2136 = vst.msk [vmem:[%s2135] sm:$0xff] %vm1255, %v2134
    %s2137 = scalar_lea.vmem [#allocation6], 576
    %v2138 = vld [vmem:[%s2137] sm:$0xf]
    %v2139 = vld [vmem:[%s2137 + $0x4] sm:$0xf]
    %v2140 = vld [vmem:[%s2137 + $0x8] sm:$0xf]
    %v2141 = vld [vmem:[%s2137 + $0xc] sm:$0xf]
    %v2142 = vld [vmem:[%s2137 + $0x10] sm:$0xf]
    %v2143 = vld [vmem:[%s2137 + $0x14] sm:$0xf]
    %v2144 = vld [vmem:[%s2137 + $0x18] sm:$0xf]
    %v2145 = vld [vmem:[%s2137 + $0x1c] sm:$0xf]
    %v2146 = vld [vmem:[%s2137 + $0x20] sm:$0xf]
    %v2147 = vld [vmem:[%s2137 + $0x24] sm:$0xf]
    %v2148 = vld [vmem:[%s2137 + $0x28] sm:$0xf]
    %v2149 = vld [vmem:[%s2137 + $0x2c] sm:$0xf]
    %v2150 = vld [vmem:[%s2137 + $0x30] sm:$0xf]
    %v2151 = vld [vmem:[%s2137 + $0x34] sm:$0xf]
    %v2152 = vld [vmem:[%s2137 + $0x38] sm:$0xf]
    %v2153 = vld [vmem:[%s2137 + $0x3c] sm:$0xf]
    %s2154 = scalar_lea.vmem [#allocation7], 9
    %v2155 = vld [vmem:[%s2154] sm:$0x1]
    %v2157 = vperm.slane %v2155, 0
    %v2175 = vunpack.c.l.b16 %v2138
    %v2176 = vunpack.c.l.b16 %v2139
    %v2177 = vunpack.c.l.b16 %v2140
    %v2178 = vunpack.c.l.b16 %v2141
    %v2179 = vunpack.c.l.b16 %v2142
    %v2180 = vunpack.c.l.b16 %v2143
    %v2181 = vunpack.c.l.b16 %v2144
    %v2182 = vunpack.c.l.b16 %v2145
    %v2183 = vunpack.c.l.b16 %v2146
    %v2184 = vunpack.c.l.b16 %v2147
    %v2185 = vunpack.c.l.b16 %v2148
    %v2186 = vunpack.c.l.b16 %v2149
    %v2187 = vunpack.c.l.b16 %v2150
    %v2188 = vunpack.c.l.b16 %v2151
    %v2189 = vunpack.c.l.b16 %v2152
    %v2190 = vunpack.c.l.b16 %v2153
    %v2191 = vpack.c.b16 %v2176, %v2175
    %v2192 = vpack.c.b16 %v2178, %v2177
    %v2193 = vpack.c.b16 %v2180, %v2179
    %v2194 = vpack.c.b16 %v2182, %v2181
    %v2195 = vpack.c.b16 %v2184, %v2183
    %v2196 = vpack.c.b16 %v2186, %v2185
    %v2197 = vpack.c.b16 %v2188, %v2187
    %v2198 = vpack.c.b16 %v2190, %v2189
    %2207 = vmatpush.bf16.msra.mxu0 %v2198
    %2208 = vmatpush.bf16.msra.mxu0 %v2197
    %2209 = vmatpush.bf16.msra.mxu0 %v2196
    %2210 = vmatpush.bf16.msra.mxu0 %v2195
    %2211 = vmatpush.bf16.msra.mxu0 %v2194
    %2212 = vmatpush.bf16.msra.mxu0 %v2193
    %2213 = vmatpush.bf16.msra.mxu0 %v2192
    %2214 = vmatpush.bf16.msra.mxu0 %v2191
    %2215 = vmatmul.bf16.gmra.mxu0 %v1080
    %v2216 = vpop.f32.mrf.mxu0
    %v2217 = vadd.f32 %v2157, %v2216
    %v2218 = vpop.f32.mrf.mxu0
    %2219 = vdwg.mxu0
    %v2220 = vsub.f32 0.0, %v2217
    %v2221 = vmul.f32 %v2220, 1.442695
    %v2222 = vpow.pop %v2221
    %v2223 = vadd.f32 %v2222, 1.0
    %v2224 = vrcp.pop %v2223
    %v2225 = vpack.c.bf16 %v2224, %v2224
    %2226 = vmatpush.bf16.msra.mxu0 %v1227
    %2227 = vmatpush.bf16.msra.mxu0 %v1226
    %2228 = vmatpush.bf16.msra.mxu0 %v1225
    %2229 = vmatpush.bf16.msra.mxu0 %v1224
    %2230 = vmatpush.bf16.msra.mxu0 %v1223
    %2231 = vmatpush.bf16.msra.mxu0 %v1222
    %2232 = vmatpush.bf16.msra.mxu0 %v1221
    %2233 = vmatpush.bf16.msra.mxu0 %v1220
    %2234 = vmatmul.bf16.gmra.mxu0 %v2225
    %v2235 = vpop.f32.mrf.mxu0
    %v2236 = vadd.f32 %v1186, %v2235
    %v2237 = vpop.f32.mrf.mxu0
    %2238 = vdwg.mxu0
    %v2239 = vmax.f32 %v2236, 0.0
    %v2240 = vsub.f32 0.0, %v2239
    %v2241 = vmul.f32 %v2240, 1.442695
    %v2242 = vpow.pop %v2241
    %v2243 = vadd.f32 %v2242, 1.0
    %v2244 = vrcp.pop %v2243
    %s2245 = scalar_lea.vmem %s15, 72
    %2246 = vst.msk [vmem:[%s2245] sm:$0xff] %vm1255, %v2244
    %s2247 = scalar_lea.vmem [#allocation6], 640
    %v2248 = vld [vmem:[%s2247] sm:$0xf]
    %v2249 = vld [vmem:[%s2247 + $0x4] sm:$0xf]
    %v2250 = vld [vmem:[%s2247 + $0x8] sm:$0xf]
    %v2251 = vld [vmem:[%s2247 + $0xc] sm:$0xf]
    %v2252 = vld [vmem:[%s2247 + $0x10] sm:$0xf]
    %v2253 = vld [vmem:[%s2247 + $0x14] sm:$0xf]
    %v2254 = vld [vmem:[%s2247 + $0x18] sm:$0xf]
    %v2255 = vld [vmem:[%s2247 + $0x1c] sm:$0xf]
    %v2256 = vld [vmem:[%s2247 + $0x20] sm:$0xf]
    %v2257 = vld [vmem:[%s2247 + $0x24] sm:$0xf]
    %v2258 = vld [vmem:[%s2247 + $0x28] sm:$0xf]
    %v2259 = vld [vmem:[%s2247 + $0x2c] sm:$0xf]
    %v2260 = vld [vmem:[%s2247 + $0x30] sm:$0xf]
    %v2261 = vld [vmem:[%s2247 + $0x34] sm:$0xf]
    %v2262 = vld [vmem:[%s2247 + $0x38] sm:$0xf]
    %v2263 = vld [vmem:[%s2247 + $0x3c] sm:$0xf]
    %s2264 = scalar_lea.vmem [#allocation7], 10
    %v2265 = vld [vmem:[%s2264] sm:$0x1]
    %v2267 = vperm.slane %v2265, 0
    %v2285 = vunpack.c.l.b16 %v2248
    %v2286 = vunpack.c.l.b16 %v2249
    %v2287 = vunpack.c.l.b16 %v2250
    %v2288 = vunpack.c.l.b16 %v2251
    %v2289 = vunpack.c.l.b16 %v2252
    %v2290 = vunpack.c.l.b16 %v2253
    %v2291 = vunpack.c.l.b16 %v2254
    %v2292 = vunpack.c.l.b16 %v2255
    %v2293 = vunpack.c.l.b16 %v2256
    %v2294 = vunpack.c.l.b16 %v2257
    %v2295 = vunpack.c.l.b16 %v2258
    %v2296 = vunpack.c.l.b16 %v2259
    %v2297 = vunpack.c.l.b16 %v2260
    %v2298 = vunpack.c.l.b16 %v2261
    %v2299 = vunpack.c.l.b16 %v2262
    %v2300 = vunpack.c.l.b16 %v2263
    %v2301 = vpack.c.b16 %v2286, %v2285
    %v2302 = vpack.c.b16 %v2288, %v2287
    %v2303 = vpack.c.b16 %v2290, %v2289
    %v2304 = vpack.c.b16 %v2292, %v2291
    %v2305 = vpack.c.b16 %v2294, %v2293
    %v2306 = vpack.c.b16 %v2296, %v2295
    %v2307 = vpack.c.b16 %v2298, %v2297
    %v2308 = vpack.c.b16 %v2300, %v2299
    %2317 = vmatpush.bf16.msra.mxu0 %v2308
    %2318 = vmatpush.bf16.msra.mxu0 %v2307
    %2319 = vmatpush.bf16.msra.mxu0 %v2306
    %2320 = vmatpush.bf16.msra.mxu0 %v2305
    %2321 = vmatpush.bf16.msra.mxu0 %v2304
    %2322 = vmatpush.bf16.msra.mxu0 %v2303
    %2323 = vmatpush.bf16.msra.mxu0 %v2302
    %2324 = vmatpush.bf16.msra.mxu0 %v2301
    %2325 = vmatmul.bf16.gmra.mxu0 %v1080
    %v2326 = vpop.f32.mrf.mxu0
    %v2327 = vadd.f32 %v2267, %v2326
    %v2328 = vpop.f32.mrf.mxu0
    %2329 = vdwg.mxu0
    %v2330 = vsub.f32 0.0, %v2327
    %v2331 = vmul.f32 %v2330, 1.442695
    %v2332 = vpow.pop %v2331
    %v2333 = vadd.f32 %v2332, 1.0
    %v2334 = vrcp.pop %v2333
    %v2335 = vpack.c.bf16 %v2334, %v2334
    %2336 = vmatpush.bf16.msra.mxu0 %v1227
    %2337 = vmatpush.bf16.msra.mxu0 %v1226
    %2338 = vmatpush.bf16.msra.mxu0 %v1225
    %2339 = vmatpush.bf16.msra.mxu0 %v1224
    %2340 = vmatpush.bf16.msra.mxu0 %v1223
    %2341 = vmatpush.bf16.msra.mxu0 %v1222
    %2342 = vmatpush.bf16.msra.mxu0 %v1221
    %2343 = vmatpush.bf16.msra.mxu0 %v1220
    %2344 = vmatmul.bf16.gmra.mxu0 %v2335
    %v2345 = vpop.f32.mrf.mxu0
    %v2346 = vadd.f32 %v1186, %v2345
    %v2347 = vpop.f32.mrf.mxu0
    %2348 = vdwg.mxu0
    %v2349 = vmax.f32 %v2346, 0.0
    %v2350 = vsub.f32 0.0, %v2349
    %v2351 = vmul.f32 %v2350, 1.442695
    %v2352 = vpow.pop %v2351
    %v2353 = vadd.f32 %v2352, 1.0
    %v2354 = vrcp.pop %v2353
    %s2355 = scalar_lea.vmem %s15, 80
    %2356 = vst.msk [vmem:[%s2355] sm:$0xff] %vm1255, %v2354
    %s2357 = scalar_lea.vmem [#allocation6], 704
    %v2358 = vld [vmem:[%s2357] sm:$0xf]
    %v2359 = vld [vmem:[%s2357 + $0x4] sm:$0xf]
    %v2360 = vld [vmem:[%s2357 + $0x8] sm:$0xf]
    %v2361 = vld [vmem:[%s2357 + $0xc] sm:$0xf]
    %v2362 = vld [vmem:[%s2357 + $0x10] sm:$0xf]
    %v2363 = vld [vmem:[%s2357 + $0x14] sm:$0xf]
    %v2364 = vld [vmem:[%s2357 + $0x18] sm:$0xf]
    %v2365 = vld [vmem:[%s2357 + $0x1c] sm:$0xf]
    %v2366 = vld [vmem:[%s2357 + $0x20] sm:$0xf]
    %v2367 = vld [vmem:[%s2357 + $0x24] sm:$0xf]
    %v2368 = vld [vmem:[%s2357 + $0x28] sm:$0xf]
    %v2369 = vld [vmem:[%s2357 + $0x2c] sm:$0xf]
    %v2370 = vld [vmem:[%s2357 + $0x30] sm:$0xf]
    %v2371 = vld [vmem:[%s2357 + $0x34] sm:$0xf]
    %v2372 = vld [vmem:[%s2357 + $0x38] sm:$0xf]
    %v2373 = vld [vmem:[%s2357 + $0x3c] sm:$0xf]
    %s2374 = scalar_lea.vmem [#allocation7], 11
    %v2375 = vld [vmem:[%s2374] sm:$0x1]
    %v2377 = vperm.slane %v2375, 0
    %v2395 = vunpack.c.l.b16 %v2358
    %v2396 = vunpack.c.l.b16 %v2359
    %v2397 = vunpack.c.l.b16 %v2360
    %v2398 = vunpack.c.l.b16 %v2361
    %v2399 = vunpack.c.l.b16 %v2362
    %v2400 = vunpack.c.l.b16 %v2363
    %v2401 = vunpack.c.l.b16 %v2364
    %v2402 = vunpack.c.l.b16 %v2365
    %v2403 = vunpack.c.l.b16 %v2366
    %v2404 = vunpack.c.l.b16 %v2367
    %v2405 = vunpack.c.l.b16 %v2368
    %v2406 = vunpack.c.l.b16 %v2369
    %v2407 = vunpack.c.l.b16 %v2370
    %v2408 = vunpack.c.l.b16 %v2371
    %v2409 = vunpack.c.l.b16 %v2372
    %v2410 = vunpack.c.l.b16 %v2373
    %v2411 = vpack.c.b16 %v2396, %v2395
    %v2412 = vpack.c.b16 %v2398, %v2397
    %v2413 = vpack.c.b16 %v2400, %v2399
    %v2414 = vpack.c.b16 %v2402, %v2401
    %v2415 = vpack.c.b16 %v2404, %v2403
    %v2416 = vpack.c.b16 %v2406, %v2405
    %v2417 = vpack.c.b16 %v2408, %v2407
    %v2418 = vpack.c.b16 %v2410, %v2409
    %2427 = vmatpush.bf16.msra.mxu0 %v2418
    %2428 = vmatpush.bf16.msra.mxu0 %v2417
    %2429 = vmatpush.bf16.msra.mxu0 %v2416
    %2430 = vmatpush.bf16.msra.mxu0 %v2415
    %2431 = vmatpush.bf16.msra.mxu0 %v2414
    %2432 = vmatpush.bf16.msra.mxu0 %v2413
    %2433 = vmatpush.bf16.msra.mxu0 %v2412
    %2434 = vmatpush.bf16.msra.mxu0 %v2411
    %2435 = vmatmul.bf16.gmra.mxu0 %v1080
    %v2436 = vpop.f32.mrf.mxu0
    %v2437 = vadd.f32 %v2377, %v2436
    %v2438 = vpop.f32.mrf.mxu0
    %2439 = vdwg.mxu0
    %v2440 = vsub.f32 0.0, %v2437
    %v2441 = vmul.f32 %v2440, 1.442695
    %v2442 = vpow.pop %v2441
    %v2443 = vadd.f32 %v2442, 1.0
    %v2444 = vrcp.pop %v2443
    %v2445 = vpack.c.bf16 %v2444, %v2444
    %2446 = vmatpush.bf16.msra.mxu0 %v1227
    %2447 = vmatpush.bf16.msra.mxu0 %v1226
    %2448 = vmatpush.bf16.msra.mxu0 %v1225
    %2449 = vmatpush.bf16.msra.mxu0 %v1224
    %2450 = vmatpush.bf16.msra.mxu0 %v1223
    %2451 = vmatpush.bf16.msra.mxu0 %v1222
    %2452 = vmatpush.bf16.msra.mxu0 %v1221
    %2453 = vmatpush.bf16.msra.mxu0 %v1220
    %2454 = vmatmul.bf16.gmra.mxu0 %v2445
    %v2455 = vpop.f32.mrf.mxu0
    %v2456 = vadd.f32 %v1186, %v2455
    %v2457 = vpop.f32.mrf.mxu0
    %2458 = vdwg.mxu0
    %v2459 = vmax.f32 %v2456, 0.0
    %v2460 = vsub.f32 0.0, %v2459
    %v2461 = vmul.f32 %v2460, 1.442695
    %v2462 = vpow.pop %v2461
    %v2463 = vadd.f32 %v2462, 1.0
    %v2464 = vrcp.pop %v2463
    %s2465 = scalar_lea.vmem %s15, 88
    %2466 = vst.msk [vmem:[%s2465] sm:$0xff] %vm1255, %v2464
    %s2467 = scalar_lea.vmem [#allocation6], 768
    %v2468 = vld [vmem:[%s2467] sm:$0xf]
    %v2469 = vld [vmem:[%s2467 + $0x4] sm:$0xf]
    %v2470 = vld [vmem:[%s2467 + $0x8] sm:$0xf]
    %v2471 = vld [vmem:[%s2467 + $0xc] sm:$0xf]
    %v2472 = vld [vmem:[%s2467 + $0x10] sm:$0xf]
    %v2473 = vld [vmem:[%s2467 + $0x14] sm:$0xf]
    %v2474 = vld [vmem:[%s2467 + $0x18] sm:$0xf]
    %v2475 = vld [vmem:[%s2467 + $0x1c] sm:$0xf]
    %v2476 = vld [vmem:[%s2467 + $0x20] sm:$0xf]
    %v2477 = vld [vmem:[%s2467 + $0x24] sm:$0xf]
    %v2478 = vld [vmem:[%s2467 + $0x28] sm:$0xf]
    %v2479 = vld [vmem:[%s2467 + $0x2c] sm:$0xf]
    %v2480 = vld [vmem:[%s2467 + $0x30] sm:$0xf]
    %v2481 = vld [vmem:[%s2467 + $0x34] sm:$0xf]
    %v2482 = vld [vmem:[%s2467 + $0x38] sm:$0xf]
    %v2483 = vld [vmem:[%s2467 + $0x3c] sm:$0xf]
    %s2484 = scalar_lea.vmem [#allocation7], 12
    %v2485 = vld [vmem:[%s2484] sm:$0x1]
    %v2487 = vperm.slane %v2485, 0
    %v2505 = vunpack.c.l.b16 %v2468
    %v2506 = vunpack.c.l.b16 %v2469
    %v2507 = vunpack.c.l.b16 %v2470
    %v2508 = vunpack.c.l.b16 %v2471
    %v2509 = vunpack.c.l.b16 %v2472
    %v2510 = vunpack.c.l.b16 %v2473
    %v2511 = vunpack.c.l.b16 %v2474
    %v2512 = vunpack.c.l.b16 %v2475
    %v2513 = vunpack.c.l.b16 %v2476
    %v2514 = vunpack.c.l.b16 %v2477
    %v2515 = vunpack.c.l.b16 %v2478
    %v2516 = vunpack.c.l.b16 %v2479
    %v2517 = vunpack.c.l.b16 %v2480
    %v2518 = vunpack.c.l.b16 %v2481
    %v2519 = vunpack.c.l.b16 %v2482
    %v2520 = vunpack.c.l.b16 %v2483
    %v2521 = vpack.c.b16 %v2506, %v2505
    %v2522 = vpack.c.b16 %v2508, %v2507
    %v2523 = vpack.c.b16 %v2510, %v2509
    %v2524 = vpack.c.b16 %v2512, %v2511
    %v2525 = vpack.c.b16 %v2514, %v2513
    %v2526 = vpack.c.b16 %v2516, %v2515
    %v2527 = vpack.c.b16 %v2518, %v2517
    %v2528 = vpack.c.b16 %v2520, %v2519
    %2537 = vmatpush.bf16.msra.mxu0 %v2528
    %2538 = vmatpush.bf16.msra.mxu0 %v2527
    %2539 = vmatpush.bf16.msra.mxu0 %v2526
    %2540 = vmatpush.bf16.msra.mxu0 %v2525
    %2541 = vmatpush.bf16.msra.mxu0 %v2524
    %2542 = vmatpush.bf16.msra.mxu0 %v2523
    %2543 = vmatpush.bf16.msra.mxu0 %v2522
    %2544 = vmatpush.bf16.msra.mxu0 %v2521
    %2545 = vmatmul.bf16.gmra.mxu0 %v1080
    %v2546 = vpop.f32.mrf.mxu0
    %v2547 = vadd.f32 %v2487, %v2546
    %v2548 = vpop.f32.mrf.mxu0
    %2549 = vdwg.mxu0
    %v2550 = vsub.f32 0.0, %v2547
    %v2551 = vmul.f32 %v2550, 1.442695
    %v2552 = vpow.pop %v2551
    %v2553 = vadd.f32 %v2552, 1.0
    %v2554 = vrcp.pop %v2553
    %v2555 = vpack.c.bf16 %v2554, %v2554
    %2556 = vmatpush.bf16.msra.mxu0 %v1227
    %2557 = vmatpush.bf16.msra.mxu0 %v1226
    %2558 = vmatpush.bf16.msra.mxu0 %v1225
    %2559 = vmatpush.bf16.msra.mxu0 %v1224
    %2560 = vmatpush.bf16.msra.mxu0 %v1223
    %2561 = vmatpush.bf16.msra.mxu0 %v1222
    %2562 = vmatpush.bf16.msra.mxu0 %v1221
    %2563 = vmatpush.bf16.msra.mxu0 %v1220
    %2564 = vmatmul.bf16.gmra.mxu0 %v2555
    %v2565 = vpop.f32.mrf.mxu0
    %v2566 = vadd.f32 %v1186, %v2565
    %v2567 = vpop.f32.mrf.mxu0
    %2568 = vdwg.mxu0
    %v2569 = vmax.f32 %v2566, 0.0
    %v2570 = vsub.f32 0.0, %v2569
    %v2571 = vmul.f32 %v2570, 1.442695
    %v2572 = vpow.pop %v2571
    %v2573 = vadd.f32 %v2572, 1.0
    %v2574 = vrcp.pop %v2573
    %s2575 = scalar_lea.vmem %s15, 96
    %2576 = vst.msk [vmem:[%s2575] sm:$0xff] %vm1255, %v2574
    %s2577 = scalar_lea.vmem [#allocation6], 832
    %v2578 = vld [vmem:[%s2577] sm:$0xf]
    %v2579 = vld [vmem:[%s2577 + $0x4] sm:$0xf]
    %v2580 = vld [vmem:[%s2577 + $0x8] sm:$0xf]
    %v2581 = vld [vmem:[%s2577 + $0xc] sm:$0xf]
    %v2582 = vld [vmem:[%s2577 + $0x10] sm:$0xf]
    %v2583 = vld [vmem:[%s2577 + $0x14] sm:$0xf]
    %v2584 = vld [vmem:[%s2577 + $0x18] sm:$0xf]
    %v2585 = vld [vmem:[%s2577 + $0x1c] sm:$0xf]
    %v2586 = vld [vmem:[%s2577 + $0x20] sm:$0xf]
    %v2587 = vld [vmem:[%s2577 + $0x24] sm:$0xf]
    %v2588 = vld [vmem:[%s2577 + $0x28] sm:$0xf]
    %v2589 = vld [vmem:[%s2577 + $0x2c] sm:$0xf]
    %v2590 = vld [vmem:[%s2577 + $0x30] sm:$0xf]
    %v2591 = vld [vmem:[%s2577 + $0x34] sm:$0xf]
    %v2592 = vld [vmem:[%s2577 + $0x38] sm:$0xf]
    %v2593 = vld [vmem:[%s2577 + $0x3c] sm:$0xf]
    %s2594 = scalar_lea.vmem [#allocation7], 13
    %v2595 = vld [vmem:[%s2594] sm:$0x1]
    %v2597 = vperm.slane %v2595, 0
    %v2615 = vunpack.c.l.b16 %v2578
    %v2616 = vunpack.c.l.b16 %v2579
    %v2617 = vunpack.c.l.b16 %v2580
    %v2618 = vunpack.c.l.b16 %v2581
    %v2619 = vunpack.c.l.b16 %v2582
    %v2620 = vunpack.c.l.b16 %v2583
    %v2621 = vunpack.c.l.b16 %v2584
    %v2622 = vunpack.c.l.b16 %v2585
    %v2623 = vunpack.c.l.b16 %v2586
    %v2624 = vunpack.c.l.b16 %v2587
    %v2625 = vunpack.c.l.b16 %v2588
    %v2626 = vunpack.c.l.b16 %v2589
    %v2627 = vunpack.c.l.b16 %v2590
    %v2628 = vunpack.c.l.b16 %v2591
    %v2629 = vunpack.c.l.b16 %v2592
    %v2630 = vunpack.c.l.b16 %v2593
    %v2631 = vpack.c.b16 %v2616, %v2615
    %v2632 = vpack.c.b16 %v2618, %v2617
    %v2633 = vpack.c.b16 %v2620, %v2619
    %v2634 = vpack.c.b16 %v2622, %v2621
    %v2635 = vpack.c.b16 %v2624, %v2623
    %v2636 = vpack.c.b16 %v2626, %v2625
    %v2637 = vpack.c.b16 %v2628, %v2627
    %v2638 = vpack.c.b16 %v2630, %v2629
    %2647 = vmatpush.bf16.msra.mxu0 %v2638
    %2648 = vmatpush.bf16.msra.mxu0 %v2637
    %2649 = vmatpush.bf16.msra.mxu0 %v2636
    %2650 = vmatpush.bf16.msra.mxu0 %v2635
    %2651 = vmatpush.bf16.msra.mxu0 %v2634
    %2652 = vmatpush.bf16.msra.mxu0 %v2633
    %2653 = vmatpush.bf16.msra.mxu0 %v2632
    %2654 = vmatpush.bf16.msra.mxu0 %v2631
    %2655 = vmatmul.bf16.gmra.mxu0 %v1080
    %v2656 = vpop.f32.mrf.mxu0
    %v2657 = vadd.f32 %v2597, %v2656
    %v2658 = vpop.f32.mrf.mxu0
    %2659 = vdwg.mxu0
    %v2660 = vsub.f32 0.0, %v2657
    %v2661 = vmul.f32 %v2660, 1.442695
    %v2662 = vpow.pop %v2661
    %v2663 = vadd.f32 %v2662, 1.0
    %v2664 = vrcp.pop %v2663
    %v2665 = vpack.c.bf16 %v2664, %v2664
    %2666 = vmatpush.bf16.msra.mxu0 %v1227
    %2667 = vmatpush.bf16.msra.mxu0 %v1226
    %2668 = vmatpush.bf16.msra.mxu0 %v1225
    %2669 = vmatpush.bf16.msra.mxu0 %v1224
    %2670 = vmatpush.bf16.msra.mxu0 %v1223
    %2671 = vmatpush.bf16.msra.mxu0 %v1222
    %2672 = vmatpush.bf16.msra.mxu0 %v1221
    %2673 = vmatpush.bf16.msra.mxu0 %v1220
    %2674 = vmatmul.bf16.gmra.mxu0 %v2665
    %v2675 = vpop.f32.mrf.mxu0
    %v2676 = vadd.f32 %v1186, %v2675
    %v2677 = vpop.f32.mrf.mxu0
    %2678 = vdwg.mxu0
    %v2679 = vmax.f32 %v2676, 0.0
    %v2680 = vsub.f32 0.0, %v2679
    %v2681 = vmul.f32 %v2680, 1.442695
    %v2682 = vpow.pop %v2681
    %v2683 = vadd.f32 %v2682, 1.0
    %v2684 = vrcp.pop %v2683
    %s2685 = scalar_lea.vmem %s15, 104
    %2686 = vst.msk [vmem:[%s2685] sm:$0xff] %vm1255, %v2684
    %s2687 = scalar_lea.vmem [#allocation6], 896
    %v2688 = vld [vmem:[%s2687] sm:$0xf]
    %v2689 = vld [vmem:[%s2687 + $0x4] sm:$0xf]
    %v2690 = vld [vmem:[%s2687 + $0x8] sm:$0xf]
    %v2691 = vld [vmem:[%s2687 + $0xc] sm:$0xf]
    %v2692 = vld [vmem:[%s2687 + $0x10] sm:$0xf]
    %v2693 = vld [vmem:[%s2687 + $0x14] sm:$0xf]
    %v2694 = vld [vmem:[%s2687 + $0x18] sm:$0xf]
    %v2695 = vld [vmem:[%s2687 + $0x1c] sm:$0xf]
    %v2696 = vld [vmem:[%s2687 + $0x20] sm:$0xf]
    %v2697 = vld [vmem:[%s2687 + $0x24] sm:$0xf]
    %v2698 = vld [vmem:[%s2687 + $0x28] sm:$0xf]
    %v2699 = vld [vmem:[%s2687 + $0x2c] sm:$0xf]
    %v2700 = vld [vmem:[%s2687 + $0x30] sm:$0xf]
    %v2701 = vld [vmem:[%s2687 + $0x34] sm:$0xf]
    %v2702 = vld [vmem:[%s2687 + $0x38] sm:$0xf]
    %v2703 = vld [vmem:[%s2687 + $0x3c] sm:$0xf]
    %s2704 = scalar_lea.vmem [#allocation7], 14
    %v2705 = vld [vmem:[%s2704] sm:$0x1]
    %v2707 = vperm.slane %v2705, 0
    %v2725 = vunpack.c.l.b16 %v2688
    %v2726 = vunpack.c.l.b16 %v2689
    %v2727 = vunpack.c.l.b16 %v2690
    %v2728 = vunpack.c.l.b16 %v2691
    %v2729 = vunpack.c.l.b16 %v2692
    %v2730 = vunpack.c.l.b16 %v2693
    %v2731 = vunpack.c.l.b16 %v2694
    %v2732 = vunpack.c.l.b16 %v2695
    %v2733 = vunpack.c.l.b16 %v2696
    %v2734 = vunpack.c.l.b16 %v2697
    %v2735 = vunpack.c.l.b16 %v2698
    %v2736 = vunpack.c.l.b16 %v2699
    %v2737 = vunpack.c.l.b16 %v2700
    %v2738 = vunpack.c.l.b16 %v2701
    %v2739 = vunpack.c.l.b16 %v2702
    %v2740 = vunpack.c.l.b16 %v2703
    %v2741 = vpack.c.b16 %v2726, %v2725
    %v2742 = vpack.c.b16 %v2728, %v2727
    %v2743 = vpack.c.b16 %v2730, %v2729
    %v2744 = vpack.c.b16 %v2732, %v2731
    %v2745 = vpack.c.b16 %v2734, %v2733
    %v2746 = vpack.c.b16 %v2736, %v2735
    %v2747 = vpack.c.b16 %v2738, %v2737
    %v2748 = vpack.c.b16 %v2740, %v2739
    %2757 = vmatpush.bf16.msra.mxu0 %v2748
    %2758 = vmatpush.bf16.msra.mxu0 %v2747
    %2759 = vmatpush.bf16.msra.mxu0 %v2746
    %2760 = vmatpush.bf16.msra.mxu0 %v2745
    %2761 = vmatpush.bf16.msra.mxu0 %v2744
    %2762 = vmatpush.bf16.msra.mxu0 %v2743
    %2763 = vmatpush.bf16.msra.mxu0 %v2742
    %2764 = vmatpush.bf16.msra.mxu0 %v2741
    %2765 = vmatmul.bf16.gmra.mxu0 %v1080
    %v2766 = vpop.f32.mrf.mxu0
    %v2767 = vadd.f32 %v2707, %v2766
    %v2768 = vpop.f32.mrf.mxu0
    %2769 = vdwg.mxu0
    %v2770 = vsub.f32 0.0, %v2767
    %v2771 = vmul.f32 %v2770, 1.442695
    %v2772 = vpow.pop %v2771
    %v2773 = vadd.f32 %v2772, 1.0
    %v2774 = vrcp.pop %v2773
    %v2775 = vpack.c.bf16 %v2774, %v2774
    %2776 = vmatpush.bf16.msra.mxu0 %v1227
    %2777 = vmatpush.bf16.msra.mxu0 %v1226
    %2778 = vmatpush.bf16.msra.mxu0 %v1225
    %2779 = vmatpush.bf16.msra.mxu0 %v1224
    %2780 = vmatpush.bf16.msra.mxu0 %v1223
    %2781 = vmatpush.bf16.msra.mxu0 %v1222
    %2782 = vmatpush.bf16.msra.mxu0 %v1221
    %2783 = vmatpush.bf16.msra.mxu0 %v1220
    %2784 = vmatmul.bf16.gmra.mxu0 %v2775
    %v2785 = vpop.f32.mrf.mxu0
    %v2786 = vadd.f32 %v1186, %v2785
    %v2787 = vpop.f32.mrf.mxu0
    %2788 = vdwg.mxu0
    %v2789 = vmax.f32 %v2786, 0.0
    %v2790 = vsub.f32 0.0, %v2789
    %v2791 = vmul.f32 %v2790, 1.442695
    %v2792 = vpow.pop %v2791
    %v2793 = vadd.f32 %v2792, 1.0
    %v2794 = vrcp.pop %v2793
    %s2795 = scalar_lea.vmem %s15, 112
    %2796 = vst.msk [vmem:[%s2795] sm:$0xff] %vm1255, %v2794
    %s2797 = scalar_lea.vmem [#allocation6], 960
    %v2798 = vld [vmem:[%s2797] sm:$0xf]
    %v2799 = vld [vmem:[%s2797 + $0x4] sm:$0xf]
    %v2800 = vld [vmem:[%s2797 + $0x8] sm:$0xf]
    %v2801 = vld [vmem:[%s2797 + $0xc] sm:$0xf]
    %v2802 = vld [vmem:[%s2797 + $0x10] sm:$0xf]
    %v2803 = vld [vmem:[%s2797 + $0x14] sm:$0xf]
    %v2804 = vld [vmem:[%s2797 + $0x18] sm:$0xf]
    %v2805 = vld [vmem:[%s2797 + $0x1c] sm:$0xf]
    %v2806 = vld [vmem:[%s2797 + $0x20] sm:$0xf]
    %v2807 = vld [vmem:[%s2797 + $0x24] sm:$0xf]
    %v2808 = vld [vmem:[%s2797 + $0x28] sm:$0xf]
    %v2809 = vld [vmem:[%s2797 + $0x2c] sm:$0xf]
    %v2810 = vld [vmem:[%s2797 + $0x30] sm:$0xf]
    %v2811 = vld [vmem:[%s2797 + $0x34] sm:$0xf]
    %v2812 = vld [vmem:[%s2797 + $0x38] sm:$0xf]
    %v2813 = vld [vmem:[%s2797 + $0x3c] sm:$0xf]
    %s2814 = scalar_lea.vmem [#allocation7], 15
    %v2815 = vld [vmem:[%s2814] sm:$0x1]
    %v2817 = vperm.slane %v2815, 0
    %v2835 = vunpack.c.l.b16 %v2798
    %v2836 = vunpack.c.l.b16 %v2799
    %v2837 = vunpack.c.l.b16 %v2800
    %v2838 = vunpack.c.l.b16 %v2801
    %v2839 = vunpack.c.l.b16 %v2802
    %v2840 = vunpack.c.l.b16 %v2803
    %v2841 = vunpack.c.l.b16 %v2804
    %v2842 = vunpack.c.l.b16 %v2805
    %v2843 = vunpack.c.l.b16 %v2806
    %v2844 = vunpack.c.l.b16 %v2807
    %v2845 = vunpack.c.l.b16 %v2808
    %v2846 = vunpack.c.l.b16 %v2809
    %v2847 = vunpack.c.l.b16 %v2810
    %v2848 = vunpack.c.l.b16 %v2811
    %v2849 = vunpack.c.l.b16 %v2812
    %v2850 = vunpack.c.l.b16 %v2813
    %v2851 = vpack.c.b16 %v2836, %v2835
    %v2852 = vpack.c.b16 %v2838, %v2837
    %v2853 = vpack.c.b16 %v2840, %v2839
    %v2854 = vpack.c.b16 %v2842, %v2841
    %v2855 = vpack.c.b16 %v2844, %v2843
    %v2856 = vpack.c.b16 %v2846, %v2845
    %v2857 = vpack.c.b16 %v2848, %v2847
    %v2858 = vpack.c.b16 %v2850, %v2849
    %2867 = vmatpush.bf16.msra.mxu0 %v2858
    %2868 = vmatpush.bf16.msra.mxu0 %v2857
    %2869 = vmatpush.bf16.msra.mxu0 %v2856
    %2870 = vmatpush.bf16.msra.mxu0 %v2855
    %2871 = vmatpush.bf16.msra.mxu0 %v2854
    %2872 = vmatpush.bf16.msra.mxu0 %v2853
    %2873 = vmatpush.bf16.msra.mxu0 %v2852
    %2874 = vmatpush.bf16.msra.mxu0 %v2851
    %2875 = vmatmul.bf16.gmra.mxu0 %v1080
    %v2876 = vpop.f32.mrf.mxu0
    %v2877 = vadd.f32 %v2817, %v2876
    %v2878 = vpop.f32.mrf.mxu0
    %2879 = vdwg.mxu0
    %v2880 = vsub.f32 0.0, %v2877
    %v2881 = vmul.f32 %v2880, 1.442695
    %v2882 = vpow.pop %v2881
    %v2883 = vadd.f32 %v2882, 1.0
    %v2884 = vrcp.pop %v2883
    %v2885 = vpack.c.bf16 %v2884, %v2884
    %2886 = vmatpush.bf16.msra.mxu0 %v1227
    %2887 = vmatpush.bf16.msra.mxu0 %v1226
    %2888 = vmatpush.bf16.msra.mxu0 %v1225
    %2889 = vmatpush.bf16.msra.mxu0 %v1224
    %2890 = vmatpush.bf16.msra.mxu0 %v1223
    %2891 = vmatpush.bf16.msra.mxu0 %v1222
    %2892 = vmatpush.bf16.msra.mxu0 %v1221
    %2893 = vmatpush.bf16.msra.mxu0 %v1220
    %2894 = vmatmul.bf16.gmra.mxu0 %v2885
    %v2895 = vpop.f32.mrf.mxu0
    %v2896 = vadd.f32 %v1186, %v2895
    %v2897 = vpop.f32.mrf.mxu0
    %2898 = vdwg.mxu0
    %v2899 = vmax.f32 %v2896, 0.0
    %v2900 = vsub.f32 0.0, %v2899
    %v2901 = vmul.f32 %v2900, 1.442695
    %v2902 = vpow.pop %v2901
    %v2903 = vadd.f32 %v2902, 1.0
    %v2904 = vrcp.pop %v2903
    %s2905 = scalar_lea.vmem %s15, 120
    %2906 = vst.msk [vmem:[%s2905] sm:$0xff] %vm1255, %v2904
    // Predicated region
    $region78: #{cnn_autoencoder_forward.1} parent=1 // pred_check
      _
    $region79: #{cnn_autoencoder_forward.1} parent=1 // pred_check_branch
      %2908 = sbr.rel (0) target = $region81
    $region80: #{cnn_autoencoder_forward.1} parent=1 // pred_region
      _
    $region81: #{cnn_autoencoder_forward.1} parent=1 // pred_fallthru
      _
    // Predicated region
    $region82: #{cnn_autoencoder_forward.1} parent=1 // pred_check
      _
    $region83: #{cnn_autoencoder_forward.1} parent=1 // pred_check_branch
      %2910 = sbr.rel (0) target = $region85
    $region84: #{cnn_autoencoder_forward.1} parent=1 // pred_region
      _
    $region85: #{cnn_autoencoder_forward.1} parent=1 // pred_fallthru
      _
    // Predicated region
    $region86: #{cnn_autoencoder_forward.1} parent=1 // pred_check
      _
    $region87: #{cnn_autoencoder_forward.1} parent=1 // pred_check_branch
      %2912 = sbr.rel (0) target = $region89
    $region88: #{cnn_autoencoder_forward.1} parent=1 // pred_region
      _
    $region89: #{cnn_autoencoder_forward.1} parent=1 // pred_fallthru
      _
    // Predicated region
    $region90: #{cnn_autoencoder_forward.1} parent=1 // pred_check
      _
    $region91: #{cnn_autoencoder_forward.1} parent=1 // pred_check_branch
      %2914 = sbr.rel (0) target = $region93
    $region92: #{cnn_autoencoder_forward.1} parent=1 // pred_region
      _
    $region93: #{cnn_autoencoder_forward.1} parent=1 // pred_fallthru
      _
    %2915 = vsyncpa [#allocation3], 1
    %2916 = vsyncpa [#allocation5], 1
    %2917 = vsyncpa [#allocation8], 1

</llo_original>
